<compile_context>
chip_gen: v6e
topology: v6e:2x2x1
jax: 0.10.0
libtpu: 0.0.40
codegen_flags: <defaults>
</compile_context>

<pallas_src>
import functools

import jax
import jax.numpy as jnp
from jax import lax
from jax.experimental import pallas as pl
from jax.experimental.pallas import tpu as pltpu

EPS = 1e-5
LANE = 128
SUBLANE_BF16 = 16


def _round_up(x, m):
    return (x + m - 1) // m * m


# ---------------------------------------------------------------------------
# Pallas kernel
# ---------------------------------------------------------------------------
def _aspp_kernel(x_hbm, w1_ref, w3_ref, wpr_ref, bbr_ref, bimg_ref, o_ref,
                 xbuf, sem, *, rates, rmax, th, wpad, cleft, wout, cdt):
    # x_hbm  : (N, Hp*Wp, Cin_p) zero-padded NHWC image, rows flattened, in HBM.
    # w1_ref : (Cin_p, Cout_p)             1x1 conv weight (BN scale folded), VMEM resident
    # w3_ref : (nr, 9, Cin_p, Cout_p)      dilated 3x3 weights (BN scale folded)
    # wpr_ref: (nbranch, Cout_p, Cpad)     projection weight split per branch
    # bbr_ref: (nbranch, 1, Cout_p) f32    per-branch BN bias
    # bimg_ref: (1, 1, Cpad) f32           per-image bias = bproj + pooled-branch term
    # o_ref  : (1, th, W, Cpad)            output tile (halo columns already trimmed)
    # xbuf   : VMEM (2, nbuf_rows, Cin_p)  double-buffered haloed row tile
    # sem    : DMA semaphores (2,)
    n = pl.program_id(0)
    t = pl.program_id(1)
    nt = pl.num_programs(1)

    p = th * wpad                                  # extended pixels per tile
    nbuf_rows = (th + 2 * rmax + 2) * wpad         # haloed rows (flattened)
    slot = t & 1

    def start_fetch(img, tile, sl):
        pltpu.make_async_copy(
            x_hbm.at[img, pl.ds(tile * (th * wpad), nbuf_rows)],
            xbuf.at[sl], sem.at[sl]).start()

    # Prime the pipeline on the first row tile of each image.
    @pl.when(t == 0)
    def _():
        start_fetch(n, 0, 0)

    # Prefetch the next row tile (same image) while this one is computed.
    @pl.when(t + 1 < nt)
    def _():
        start_fetch(n, t + 1, 1 - slot)

    # Wait for the current tile's haloed rows.
    pltpu.make_async_copy(
        x_hbm.at[0, pl.ds(0, nbuf_rows)], xbuf.at[slot], sem.at[slot]).wait()

    xv = xbuf.at[slot]

    def conv_bn_relu(taps, bias):
        s = None
        for off, w in taps:
            part = jnp.dot(xv[pl.ds(off, p), :], w,
                           preferred_element_type=jnp.float32)
            s = part if s is None else s + part
        return jnp.maximum(s + bias, 0.0)          # fused BN bias + ReLU (f32)

    center = (rmax + 1) * wpad                     # 1x1 branch tap offset

    # Per-image bias (projection BN bias + pooled-branch contribution); broadcasts.
    acc = bimg_ref[0].astype(jnp.float32)          # (1, Cpad)

    # 1x1 branch, projection fused right after its ReLU (one live slab at a time).
    y = conv_bn_relu([(center, w1_ref[...])], bbr_ref[0])
    acc = acc + jnp.dot(y.astype(cdt), wpr_ref[0],
                        preferred_element_type=jnp.float32)

    # Dilated 3x3 branches as 9 shifted accumulating matmuls each.
    for ri, r in enumerate(rates):
        taps = [((rmax + 1 + (kh - 1) * r) * wpad + (kw - 1) * r,
                 w3_ref[ri, kh * 3 + kw])
                for kh in range(3) for kw in range(3)]
        y = conv_bn_relu(taps, bbr_ref[ri + 1])
        acc = acc + jnp.dot(y.astype(cdt), wpr_ref[ri + 1],
                            preferred_element_type=jnp.float32)

    # TODO(synk): nn.Dropout(0.5) is identity in eval mode; train-mode dropout not implemented.
    out = jnp.maximum(acc, 0.0)                    # (p, Cpad) f32
    out = out.reshape(th, wpad, out.shape[-1])[:, cleft:cleft + wout, :]
    o_ref[0] = out.astype(o_ref.dtype)             # halo columns never reach HBM


# ---------------------------------------------------------------------------
# Wrapper
# ---------------------------------------------------------------------------
def _vmem_cap_bytes():
    try:
        return int(pltpu.get_tpu_info().vmem_capacity_bytes)
    except Exception:
        return 64 << 20          # conservative fallback (v7x physical VMEM per TC)


def _choose_th(N, H, W, Wp, Cin_p, Cout_p, Cpad, rmax, weight_bytes, cap,
               c_bytes, o_bytes):
    """Largest row tile fitting a conservative VMEM budget while keeping enough
    grid steps to load-balance 2 TensorCores (v7x megacore)."""
    min_steps = min(8, N * H)
    best = 1
    for th in range(1, H + 1):
        if H % th:
            continue
        nbuf_rows = (th + 2 * rmax + 2) * Wp
        p = th * Wp
        tile_bytes = (2 * nbuf_rows * Cin_p * c_bytes      # double-buffered halo tile
                      + 2 * th * W * Cpad * o_bytes        # double-buffered output block
                      + p * (Cpad + Cout_p) * 4)           # f32 acc + live branch slab
        if weight_bytes + tile_bytes > int(0.6 * cap):
            continue
        if N * (H // th) < min_steps:
            continue
        best = max(best, th)
    return best


def aspp_forward(x_nchw, kp, rates, *, th=None,
                 compute_dtype=jnp.bfloat16, out_dtype=jnp.bfloat16):
    N, Cin, H, W = x_nchw.shape
    Cin_p, Cout_p = kp["w1"].shape
    Cpad = kp["wproj"].shape[-1]
    Cout = kp["bp"].shape[0]
    nb = 1 + len(rates)               # conv branches fed through the kernel
    rmax = max(rates)

    # Column halo: left pad aligned to 8 sublanes, total width to 16 (bf16 packing),
    # so row-shift tap offsets and the output column trim stay sublane-aligned.
    cl = _round_up(rmax, 8)
    Wp = _round_up(W + cl + rmax, SUBLANE_BF16)
    Hp = H + 2 * (rmax + 1)           # row halo + 1 guard row/side (keeps tap offsets >= 0)

    weight_bytes = sum(int(kp[k].size * kp[k].dtype.itemsize)
                       for k in ("w1", "w3", "wproj", "b_branch"))
    cap = _vmem_cap_bytes()
    c_bytes = jnp.dtype(compute_dtype).itemsize
    o_bytes = jnp.dtype(out_dtype).itemsize
    if th is None:
        th = _choose_th(N, H, W, Wp, Cin_p, Cout_p, Cpad, rmax, weight_bytes,
                        cap, c_bytes, o_bytes)
    assert H % th == 0, "row tile must divide H"  # TODO(synk): pad/mask for general H

    nbuf_rows = (th + 2 * rmax + 2) * Wp
    p = th * Wp

    # Zero-padded NHWC image (channels padded to a lane multiple); stays in HBM.
    # TODO(synk): keep the surrounding graph NHWC/bf16 to avoid this transpose+pad HBM pass.
    x_nhwc = jnp.transpose(x_nchw, (0, 2, 3, 1)).astype(compute_dtype)
    x_pad = jnp.pad(x_nhwc, ((0, 0), (rmax + 1, rmax + 1),
                             (cl, Wp - W - cl), (0, Cin_p - Cin)))
    x_flat = x_pad.reshape(N, Hp * Wp, Cin_p)

    # Global-average-pool branch (constant per image) folded into a projection bias.
    pooled = jnp.mean(x_nchw.astype(jnp.float32), axis=(2, 3))        # (N, Cin)
    yp = jnp.maximum(pooled @ kp["wp"] + kp["bp"], 0.0)               # (N, Cout)
    bimg = (kp["bproj"][None, :] + yp @ kp["wproj_pool"]).astype(jnp.float32)
    bimg = bimg.reshape(N, 1, Cpad)

    grid = (N, H // th)

    kernel = functools.partial(_aspp_kernel, rates=tuple(rates), rmax=rmax,
                               th=th, wpad=Wp, cleft=cl, wout=W, cdt=compute_dtype)

    # VMEM budget: resident weights + double-buffered halo tile + output block + slack.
    vmem_need = (weight_bytes
                 + 2 * nbuf_rows * Cin_p * c_bytes
                 + 2 * th * W * Cpad * o_bytes
                 + p * (Cpad + Cout_p) * 4
                 + (4 << 20))
    vmem_limit = int(min(max(vmem_need, 32 << 20), int(0.9 * cap)))

    flops = 2 * N * H * Wp * (Cin_p * Cout_p * (1 + 9 * len(rates))
                              + nb * Cout_p * Cpad)
    bytes_accessed = int(x_flat.size * x_flat.dtype.itemsize
                         + N * H * W * Cpad * o_bytes
                         + weight_bytes + bimg.size * 4)

    vmem_resident = pl.BlockSpec(memory_space=pltpu.MemorySpace.VMEM)

    out = pl.pallas_call(
        kernel,
        out_shape=jax.ShapeDtypeStruct((N, H, W, Cpad), out_dtype),
        grid=grid,
        in_specs=[
            pl.BlockSpec(memory_space=pl.ANY),    # padded image stays in HBM; kernel DMAs tiles
            vmem_resident,                        # w1       (whole array, single copy)
            vmem_resident,                        # w3
            vmem_resident,                        # wproj
            vmem_resident,                        # b_branch
            pl.BlockSpec((1, 1, Cpad), lambda n, t: (n, 0, 0)),    # per-image bias
        ],
        out_specs=pl.BlockSpec((1, th, W, Cpad), lambda n, t: (n, t, 0, 0)),
        scratch_shapes=[pltpu.VMEM((2, nbuf_rows, Cin_p), compute_dtype),
                        pltpu.SemaphoreType.DMA((2,))],
        compiler_params=pltpu.CompilerParams(
            # Row-tile axis must stay in-order for the cross-step DMA prefetch.
            dimension_semantics=("parallel", "arbitrary"),
            vmem_limit_bytes=vmem_limit),
        cost_estimate=pl.CostEstimate(flops=int(flops), transcendentals=0,
                                      bytes_accessed=bytes_accessed),
    )(x_flat, kp["w1"], kp["w3"], kp["wproj"], kp["b_branch"], bimg)

    # Drop channel padding only (halo columns were trimmed in-kernel); back to NCHW f32.
    out = out[..., :Cout]
    return jnp.transpose(out.astype(jnp.float32), (0, 3, 1, 2))


# ---------------------------------------------------------------------------
# Deterministic parameter init (PyTorch layouts) + conversion for the kernel
# ---------------------------------------------------------------------------
def init_torch_params(key, Cin, Cout, rates):
    nb = 2 + len(rates)
    keys = iter(jax.random.split(key, 64))
    nxt = lambda: next(keys)

    def bn(c):
        return (jax.random.uniform(nxt(), (c,), minval=0.5, maxval=1.5),  # gamma
                jax.random.normal(nxt(), (c,)) * 0.1,                     # beta
                jax.random.normal(nxt(), (c,)) * 0.1,                     # running_mean
                jax.random.uniform(nxt(), (c,), minval=0.5, maxval=1.5))  # running_var

    p = {}
    p["conv1"] = jax.random.normal(nxt(), (Cout, Cin, 1, 1)) * 0.1
    p["bn1"] = bn(Cout)
    for i, _ in enumerate(rates):
        p[f"conv3_{i}"] = jax.random.normal(nxt(), (Cout, Cin, 3, 3)) * 0.1
        p[f"bn3_{i}"] = bn(Cout)
    p["convp"] = jax.random.normal(nxt(), (Cout, Cin, 1, 1)) * 0.1
    p["bnp"] = bn(Cout)
    p["convproj"] = jax.random.normal(nxt(), (Cout, nb * Cout, 1, 1)) * 0.1
    p["bnproj"] = bn(Cout)
    return p


def make_kernel_params(p, rates, compute_dtype=jnp.bfloat16):
    Cout, Cin = p["conv1"].shape[0], p["conv1"].shape[1]
    nb = 1 + len(rates)                        # conv branches fed through the kernel
    Cin_p = _round_up(Cin, LANE)               # lane-dense contraction (K) dim
    Cout_p = _round_up(Cout, LANE)             # lane-dense branch output (N) dim
    Cpad = _round_up(Cout, LANE)               # lane-dense projection output

    def fuse(bn):
        gamma, beta, mean, var = bn
        s = gamma / jnp.sqrt(var + EPS)
        return s, beta - mean * s

    s1, b1 = fuse(p["bn1"])
    w1 = p["conv1"][:, :, 0, 0].T * s1[None, :]                        # (Cin, Cout)
    w1 = jnp.pad(w1, ((0, Cin_p - Cin), (0, Cout_p - Cout))).astype(compute_dtype)

    w3s, b3s = [], []
    for i in range(len(rates)):
        s, b = fuse(p[f"bn3_{i}"])
        w = jnp.transpose(p[f"conv3_{i}"], (2, 3, 1, 0)) * s           # (3,3,Cin,Cout)
        w = w.reshape(9, Cin, Cout)
        w = jnp.pad(w, ((0, 0), (0, Cin_p - Cin), (0, Cout_p - Cout)))
        w3s.append(w.astype(compute_dtype))
        b3s.append(b)
    w3 = jnp.stack(w3s)                                                # (nr,9,Cin_p,Cout_p)

    sp, bp = fuse(p["bnp"])
    wp = p["convp"][:, :, 0, 0].T * sp[None, :]                        # (Cin,Cout) f32

    sj, bj = fuse(p["bnproj"])
    wproj = p["convproj"][:, :, 0, 0].T * sj[None, :]                  # ((nb+1)C, C)
    wproj = jnp.pad(wproj, ((0, 0), (0, Cpad - Cout)))
    wproj_b = wproj[:nb * Cout].reshape(nb, Cout, Cpad)
    wproj_b = jnp.pad(wproj_b, ((0, 0), (0, Cout_p - Cout), (0, 0))).astype(compute_dtype)
    wproj_pool = wproj[nb * Cout:]                                     # (Cout,Cpad) f32
    bproj = jnp.pad(bj, (0, Cpad - Cout))

    b_branch = jnp.stack([b1] + b3s).reshape(nb, 1, Cout)              # f32
    b_branch = jnp.pad(b_branch, ((0, 0), (0, 0), (0, Cout_p - Cout)))

    return dict(w1=w1, w3=w3, wp=wp, bp=bp, b_branch=b_branch,
                wproj=wproj_b, wproj_pool=wproj_pool, bproj=bproj)


# ---------------------------------------------------------------------------
# Pure-JAX reference (mirrors the PyTorch forward, eval mode, f32)
# ---------------------------------------------------------------------------
def aspp_reference(x, p, rates):
    def bn_relu(y, bn):
        gamma, beta, mean, var = bn
        s = gamma / jnp.sqrt(var + EPS)
        y = (y - mean[None, :, None, None]) * s[None, :, None, None] \
            + beta[None, :, None, None]
        return jnp.maximum(y, 0.0)

    dn = ("NCHW", "OIHW", "NCHW")
    N, _, H, W = x.shape
    res = []
    res.append(bn_relu(lax.conv_general_dilated(x, p["conv1"], (1, 1), "VALID",
                                                dimension_numbers=dn), p["bn1"]))
    for i, r in enumerate(rates):
        y = lax.conv_general_dilated(x, p[f"conv3_{i}"], (1, 1),
                                     [(r, r), (r, r)], rhs_dilation=(r, r),
                                     dimension_numbers=dn)
        res.append(bn_relu(y, p[f"bn3_{i}"]))
    pooled = jnp.mean(x, axis=(2, 3), keepdims=True)
    y = bn_relu(lax.conv_general_dilated(pooled, p["convp"], (1, 1), "VALID",
                                         dimension_numbers=dn), p["bnp"])
    res.append(jnp.broadcast_to(y, (N, y.shape[1], H, W)))  # bilinear 1x1 -> HxW
    cat = jnp.concatenate(res, axis=1)
    y = lax.conv_general_dilated(cat, p["convproj"], (1, 1), "VALID",
                                 dimension_numbers=dn)
    return bn_relu(y, p["bnproj"])  # dropout identity in eval mode


if __name__ == "__main__":
    key = jax.random.PRNGKey(0)
    N, Cin, H, W = 2, 4, 16, 16
    Cout = 8
    rates = (2, 4)

    kx, kparam = jax.random.split(key)
    x = jax.random.normal(kx, (N, Cin, H, W), dtype=jnp.float32)
    torch_p = init_torch_params(kparam, Cin, Cout, rates)
    kern_p = make_kernel_params(torch_p, rates)

    out = aspp_forward(x, kern_p, rates)       # th auto-chosen -> multi-tile + DMA overlap path
    out = jax.block_until_ready(out)

    ref = aspp_reference(x, torch_p, rates)
    assert out.shape == ref.shape == (N, Cout, H, W)
    err = float(jnp.max(jnp.abs(out - ref)))
    # bf16 activations/weights vs f32 reference -> loose but structural tolerance
    assert err < 5e-2, f"max abs err {err}"
    print("KERNEL_OK")
</pallas_src>

<mosaic_0001>
module attributes {stable_mosaic.version = 11 : i64} {
  func.func @_aspp_kernel(%arg0: i32, %arg1: i32, %arg2: memref<2x832x128xbf16, #tpu.memory_space<any>>, %arg3: memref<128x128xbf16, #tpu.memory_space<vmem>>, %arg4: memref<2x9x128x128xbf16, #tpu.memory_space<vmem>>, %arg5: memref<3x128x128xbf16, #tpu.memory_space<vmem>>, %arg6: memref<3x1x128xf32, #tpu.memory_space<vmem>>, %arg7: memref<1x1x128xf32, #tpu.memory_space<vmem>>, %arg8: memref<1x4x16x128xbf16, #tpu.memory_space<vmem>>, %arg9: memref<2x448x128xbf16, #tpu.memory_space<vmem>>, %arg10: memref<2x!tpu.dma_semaphore, #tpu.memory_space<semaphore_mem>>) attributes {dimension_semantics = [#tpu.dimension_semantics<parallel>, #tpu.dimension_semantics<arbitrary>], iteration_bounds = array<i64: 2, 4>, scalar_prefetch = 0 : i64, scratch_operands = 2 : i64, tpu.core_type = #tpu.core_type<tc>, window_params = [{}, {pipeline_mode = #tpu.pipeline_mode<synchronous>, transform_indices = @transform_1, window_bounds = array<i64: 128, 128>}, {pipeline_mode = #tpu.pipeline_mode<synchronous>, transform_indices = @transform_2, window_bounds = array<i64: 2, 9, 128, 128>}, {pipeline_mode = #tpu.pipeline_mode<synchronous>, transform_indices = @transform_3, window_bounds = array<i64: 3, 128, 128>}, {pipeline_mode = #tpu.pipeline_mode<synchronous>, transform_indices = @transform_4, window_bounds = array<i64: 3, 1, 128>}, {transform_indices = @transform_5, window_bounds = array<i64: 1, 1, 128>}, {transform_indices = @transform_6, window_bounds = array<i64: 1, 4, 16, 128>}]} {
    %c1_i32 = arith.constant 1 : i32
    %0 = arith.andi %arg1, %c1_i32 : i32
    %c0_i32 = arith.constant 0 : i32
    %1 = arith.cmpi eq, %arg1, %c0_i32 : i32
    %2 = arith.extui %1 : i1 to i32
    %c0_i32_0 = arith.constant 0 : i32
    %3 = arith.cmpi ne, %2, %c0_i32_0 : i32
    scf.if %3 {
      %c0_i32_182 = arith.constant 0 : i32
      %c0_i32_183 = arith.constant 0 : i32
      %c0_i32_184 = arith.constant 0 : i32
      %c0_i32_185 = arith.constant 0 : i32
      %187 = tpu.memref_slice %arg2[%arg0, %c0_i32_184, %c0_i32_185] : memref<2x832x128xbf16, #tpu.memory_space<any>> -> memref<1x448x128xbf16, #tpu.memory_space<any>>
      %188 = tpu.memref_squeeze %187 : memref<1x448x128xbf16, #tpu.memory_space<any>> -> memref<448x128xbf16, #tpu.memory_space<any>>
      %c0_i32_186 = arith.constant 0 : i32
      %c0_i32_187 = arith.constant 0 : i32
      %189 = tpu.memref_slice %arg9[%c0_i32_182, %c0_i32_186, %c0_i32_187] : memref<2x448x128xbf16, #tpu.memory_space<vmem>> -> memref<1x448x128xbf16, #tpu.memory_space<vmem>>
      %190 = tpu.memref_squeeze %189 : memref<1x448x128xbf16, #tpu.memory_space<vmem>> -> memref<448x128xbf16, #tpu.memory_space<vmem>>
      %191 = tpu.memref_slice %arg10[%c0_i32_183] : memref<2x!tpu.dma_semaphore, #tpu.memory_space<semaphore_mem>> -> memref<1x!tpu.dma_semaphore, #tpu.memory_space<semaphore_mem>>
      %192 = tpu.memref_squeeze %191 : memref<1x!tpu.dma_semaphore, #tpu.memory_space<semaphore_mem>> -> memref<!tpu.dma_semaphore, #tpu.memory_space<semaphore_mem>>
      tpu.enqueue_dma source(%188 : memref<448x128xbf16, #tpu.memory_space<any>>) target(%190 : memref<448x128xbf16, #tpu.memory_space<vmem>>) target_semaphore(%192 : memref<!tpu.dma_semaphore, #tpu.memory_space<semaphore_mem>>)
    } else {
    }
    %c1_i32_1 = arith.constant 1 : i32
    %4 = arith.addi %arg1, %c1_i32_1 : i32
    %c4_i32 = arith.constant 4 : i32
    %5 = arith.cmpi slt, %4, %c4_i32 : i32
    %6 = arith.extui %5 : i1 to i32
    %c0_i32_2 = arith.constant 0 : i32
    %7 = arith.cmpi ne, %6, %c0_i32_2 : i32
    scf.if %7 {
      %c1_i32_182 = arith.constant 1 : i32
      %187 = arith.addi %arg1, %c1_i32_182 : i32
      %c1_i32_183 = arith.constant 1 : i32
      %188 = arith.subi %c1_i32_183, %0 : i32
      %c128_i32 = arith.constant 128 : i32
      %189 = arith.muli %187, %c128_i32 : i32
      %c0_i32_184 = arith.constant 0 : i32
      %190 = tpu.memref_slice %arg2[%arg0, %189, %c0_i32_184] : memref<2x832x128xbf16, #tpu.memory_space<any>> -> memref<1x448x128xbf16, #tpu.memory_space<any>>
      %191 = tpu.memref_squeeze %190 : memref<1x448x128xbf16, #tpu.memory_space<any>> -> memref<448x128xbf16, #tpu.memory_space<any>>
      %c0_i32_185 = arith.constant 0 : i32
      %c0_i32_186 = arith.constant 0 : i32
      %192 = tpu.memref_slice %arg9[%188, %c0_i32_185, %c0_i32_186] : memref<2x448x128xbf16, #tpu.memory_space<vmem>> -> memref<1x448x128xbf16, #tpu.memory_space<vmem>>
      %193 = tpu.memref_squeeze %192 : memref<1x448x128xbf16, #tpu.memory_space<vmem>> -> memref<448x128xbf16, #tpu.memory_space<vmem>>
      %194 = tpu.memref_slice %arg10[%188] : memref<2x!tpu.dma_semaphore, #tpu.memory_space<semaphore_mem>> -> memref<1x!tpu.dma_semaphore, #tpu.memory_space<semaphore_mem>>
      %195 = tpu.memref_squeeze %194 : memref<1x!tpu.dma_semaphore, #tpu.memory_space<semaphore_mem>> -> memref<!tpu.dma_semaphore, #tpu.memory_space<semaphore_mem>>
      tpu.enqueue_dma source(%191 : memref<448x128xbf16, #tpu.memory_space<any>>) target(%193 : memref<448x128xbf16, #tpu.memory_space<vmem>>) target_semaphore(%195 : memref<!tpu.dma_semaphore, #tpu.memory_space<semaphore_mem>>)
    } else {
    }
    %c0_i32_3 = arith.constant 0 : i32
    %c0_i32_4 = arith.constant 0 : i32
    %c0_i32_5 = arith.constant 0 : i32
    %8 = tpu.memref_slice %arg2[%c0_i32_3, %c0_i32_4, %c0_i32_5] : memref<2x832x128xbf16, #tpu.memory_space<any>> -> memref<1x448x128xbf16, #tpu.memory_space<any>>
    %9 = tpu.memref_squeeze %8 : memref<1x448x128xbf16, #tpu.memory_space<any>> -> memref<448x128xbf16, #tpu.memory_space<any>>
    %c0_i32_6 = arith.constant 0 : i32
    %c0_i32_7 = arith.constant 0 : i32
    %10 = tpu.memref_slice %arg9[%0, %c0_i32_6, %c0_i32_7] : memref<2x448x128xbf16, #tpu.memory_space<vmem>> -> memref<1x448x128xbf16, #tpu.memory_space<vmem>>
    %11 = tpu.memref_squeeze %10 : memref<1x448x128xbf16, #tpu.memory_space<vmem>> -> memref<448x128xbf16, #tpu.memory_space<vmem>>
    %12 = tpu.memref_slice %arg10[%0] : memref<2x!tpu.dma_semaphore, #tpu.memory_space<semaphore_mem>> -> memref<1x!tpu.dma_semaphore, #tpu.memory_space<semaphore_mem>>
    %13 = tpu.memref_squeeze %12 : memref<1x!tpu.dma_semaphore, #tpu.memory_space<semaphore_mem>> -> memref<!tpu.dma_semaphore, #tpu.memory_space<semaphore_mem>>
    tpu.wait_dma2 semaphore(%13 : memref<!tpu.dma_semaphore, #tpu.memory_space<semaphore_mem>>) src(%9 : memref<448x128xbf16, #tpu.memory_space<any>>) dst(%11 : memref<448x128xbf16, #tpu.memory_space<vmem>>)
    %c0 = arith.constant 0 : index
    %c0_8 = arith.constant 0 : index
    %c0_9 = arith.constant 0 : index
    %14 = vector.load %arg7[%c0, %c0_8, %c0_9] : memref<1x1x128xf32, #tpu.memory_space<vmem>>, vector<1x1x128xf32>
    %15 = vector.shape_cast %14 : vector<1x1x128xf32> to vector<1x128xf32>
    %c0_10 = arith.constant 0 : index
    %c0_11 = arith.constant 0 : index
    %16 = vector.load %arg3[%c0_10, %c0_11] : memref<128x128xbf16, #tpu.memory_space<vmem>>, vector<128x128xbf16>
    %c0_12 = arith.constant 0 : index
    %c0_13 = arith.constant 0 : index
    %c0_14 = arith.constant 0 : index
    %17 = vector.load %arg6[%c0_12, %c0_13, %c0_14] : memref<3x1x128xf32, #tpu.memory_space<vmem>>, vector<1x1x128xf32>
    %18 = vector.shape_cast %17 : vector<1x1x128xf32> to vector<1x128xf32>
    %c0_i32_15 = arith.constant 0 : i32
    %c0_i32_16 = arith.constant 0 : i32
    %19 = tpu.memref_slice %arg9[%0, %c0_i32_15, %c0_i32_16] : memref<2x448x128xbf16, #tpu.memory_space<vmem>> -> memref<1x448x128xbf16, #tpu.memory_space<vmem>>
    %20 = tpu.memref_squeeze %19 : memref<1x448x128xbf16, #tpu.memory_space<vmem>> -> memref<448x128xbf16, #tpu.memory_space<vmem>>
    %c160 = arith.constant 160 : index
    %c0_17 = arith.constant 0 : index
    %21 = vector.load %20[%c160, %c0_17] : memref<448x128xbf16, #tpu.memory_space<vmem>>, vector<128x128xbf16>
    %cst = arith.constant dense<0.000000e+00> : vector<128x128xf32>
    %22 = tpu.matmul %21, %16, %cst {dimension_numbers = #tpu.dot_dimension_numbers<[1], [0], [0], [1], [0, 0, 1, 1], [], []>} : vector<128x128xbf16>, vector<128x128xbf16>, vector<128x128xf32> -> vector<128x128xf32>
    %23 = vector.broadcast %18 : vector<1x128xf32> to vector<128x128xf32>
    %24 = arith.addf %22, %23 : vector<128x128xf32>
    %cst_18 = arith.constant 0.000000e+00 : f32
    %25 = vector.broadcast %cst_18 : f32 to vector<128x128xf32>
    %26 = arith.maximumf %24, %25 : vector<128x128xf32>
    %27 = arith.truncf %26 : vector<128x128xf32> to vector<128x128xbf16>
    %c0_19 = arith.constant 0 : index
    %c0_20 = arith.constant 0 : index
    %c0_21 = arith.constant 0 : index
    %28 = vector.load %arg5[%c0_19, %c0_20, %c0_21] : memref<3x128x128xbf16, #tpu.memory_space<vmem>>, vector<1x128x128xbf16>
    %29 = vector.shape_cast %28 : vector<1x128x128xbf16> to vector<128x128xbf16>
    %cst_22 = arith.constant dense<0.000000e+00> : vector<128x128xf32>
    %30 = tpu.matmul %27, %29, %cst_22 {dimension_numbers = #tpu.dot_dimension_numbers<[1], [0], [0], [1], [0, 0, 1, 1], [], []>} : vector<128x128xbf16>, vector<128x128xbf16>, vector<128x128xf32> -> vector<128x128xf32>
    %31 = vector.broadcast %15 : vector<1x128xf32> to vector<128x128xf32>
    %32 = arith.addf %31, %30 : vector<128x128xf32>
    %c0_23 = arith.constant 0 : index
    %c0_24 = arith.constant 0 : index
    %c0_25 = arith.constant 0 : index
    %c0_26 = arith.constant 0 : index
    %33 = vector.load %arg4[%c0_23, %c0_24, %c0_25, %c0_26] : memref<2x9x128x128xbf16, #tpu.memory_space<vmem>>, vector<1x1x128x128xbf16>
    %34 = vector.shape_cast %33 : vector<1x1x128x128xbf16> to vector<128x128xbf16>
    %c0_27 = arith.constant 0 : index
    %c1 = arith.constant 1 : index
    %c0_28 = arith.constant 0 : index
    %c0_29 = arith.constant 0 : index
    %35 = vector.load %arg4[%c0_27, %c1, %c0_28, %c0_29] : memref<2x9x128x128xbf16, #tpu.memory_space<vmem>>, vector<1x1x128x128xbf16>
    %36 = vector.shape_cast %35 : vector<1x1x128x128xbf16> to vector<128x128xbf16>
    %c0_30 = arith.constant 0 : index
    %c2 = arith.constant 2 : index
    %c0_31 = arith.constant 0 : index
    %c0_32 = arith.constant 0 : index
    %37 = vector.load %arg4[%c0_30, %c2, %c0_31, %c0_32] : memref<2x9x128x128xbf16, #tpu.memory_space<vmem>>, vector<1x1x128x128xbf16>
    %38 = vector.shape_cast %37 : vector<1x1x128x128xbf16> to vector<128x128xbf16>
    %c0_33 = arith.constant 0 : index
    %c3 = arith.constant 3 : index
    %c0_34 = arith.constant 0 : index
    %c0_35 = arith.constant 0 : index
    %39 = vector.load %arg4[%c0_33, %c3, %c0_34, %c0_35] : memref<2x9x128x128xbf16, #tpu.memory_space<vmem>>, vector<1x1x128x128xbf16>
    %40 = vector.shape_cast %39 : vector<1x1x128x128xbf16> to vector<128x128xbf16>
    %c0_36 = arith.constant 0 : index
    %c4 = arith.constant 4 : index
    %c0_37 = arith.constant 0 : index
    %c0_38 = arith.constant 0 : index
    %41 = vector.load %arg4[%c0_36, %c4, %c0_37, %c0_38] : memref<2x9x128x128xbf16, #tpu.memory_space<vmem>>, vector<1x1x128x128xbf16>
    %42 = vector.shape_cast %41 : vector<1x1x128x128xbf16> to vector<128x128xbf16>
    %c0_39 = arith.constant 0 : index
    %c5 = arith.constant 5 : index
    %c0_40 = arith.constant 0 : index
    %c0_41 = arith.constant 0 : index
    %43 = vector.load %arg4[%c0_39, %c5, %c0_40, %c0_41] : memref<2x9x128x128xbf16, #tpu.memory_space<vmem>>, vector<1x1x128x128xbf16>
    %44 = vector.shape_cast %43 : vector<1x1x128x128xbf16> to vector<128x128xbf16>
    %c0_42 = arith.constant 0 : index
    %c6 = arith.constant 6 : index
    %c0_43 = arith.constant 0 : index
    %c0_44 = arith.constant 0 : index
    %45 = vector.load %arg4[%c0_42, %c6, %c0_43, %c0_44] : memref<2x9x128x128xbf16, #tpu.memory_space<vmem>>, vector<1x1x128x128xbf16>
    %46 = vector.shape_cast %45 : vector<1x1x128x128xbf16> to vector<128x128xbf16>
    %c0_45 = arith.constant 0 : index
    %c7 = arith.constant 7 : index
    %c0_46 = arith.constant 0 : index
    %c0_47 = arith.constant 0 : index
    %47 = vector.load %arg4[%c0_45, %c7, %c0_46, %c0_47] : memref<2x9x128x128xbf16, #tpu.memory_space<vmem>>, vector<1x1x128x128xbf16>
    %48 = vector.shape_cast %47 : vector<1x1x128x128xbf16> to vector<128x128xbf16>
    %c0_48 = arith.constant 0 : index
    %c8 = arith.constant 8 : index
    %c0_49 = arith.constant 0 : index
    %c0_50 = arith.constant 0 : index
    %49 = vector.load %arg4[%c0_48, %c8, %c0_49, %c0_50] : memref<2x9x128x128xbf16, #tpu.memory_space<vmem>>, vector<1x1x128x128xbf16>
    %50 = vector.shape_cast %49 : vector<1x1x128x128xbf16> to vector<128x128xbf16>
    %c1_51 = arith.constant 1 : index
    %c0_52 = arith.constant 0 : index
    %c0_53 = arith.constant 0 : index
    %51 = vector.load %arg6[%c1_51, %c0_52, %c0_53] : memref<3x1x128xf32, #tpu.memory_space<vmem>>, vector<1x1x128xf32>
    %52 = vector.shape_cast %51 : vector<1x1x128xf32> to vector<1x128xf32>
    %c0_i32_54 = arith.constant 0 : i32
    %c0_i32_55 = arith.constant 0 : i32
    %53 = tpu.memref_slice %arg9[%0, %c0_i32_54, %c0_i32_55] : memref<2x448x128xbf16, #tpu.memory_space<vmem>> -> memref<1x448x128xbf16, #tpu.memory_space<vmem>>
    %54 = tpu.memref_squeeze %53 : memref<1x448x128xbf16, #tpu.memory_space<vmem>> -> memref<448x128xbf16, #tpu.memory_space<vmem>>
    %c94 = arith.constant 94 : index
    %c0_56 = arith.constant 0 : index
    %55 = vector.load %54[%c94, %c0_56] : memref<448x128xbf16, #tpu.memory_space<vmem>>, vector<128x128xbf16>
    %cst_57 = arith.constant dense<0.000000e+00> : vector<128x128xf32>
    %56 = tpu.matmul %55, %34, %cst_57 {dimension_numbers = #tpu.dot_dimension_numbers<[1], [0], [0], [1], [0, 0, 1, 1], [], []>} : vector<128x128xbf16>, vector<128x128xbf16>, vector<128x128xf32> -> vector<128x128xf32>
    %c0_i32_58 = arith.constant 0 : i32
    %c0_i32_59 = arith.constant 0 : i32
    %57 = tpu.memref_slice %arg9[%0, %c0_i32_58, %c0_i32_59] : memref<2x448x128xbf16, #tpu.memory_space<vmem>> -> memref<1x448x128xbf16, #tpu.memory_space<vmem>>
    %58 = tpu.memref_squeeze %57 : memref<1x448x128xbf16, #tpu.memory_space<vmem>> -> memref<448x128xbf16, #tpu.memory_space<vmem>>
    %c96 = arith.constant 96 : index
    %c0_60 = arith.constant 0 : index
    %59 = vector.load %58[%c96, %c0_60] : memref<448x128xbf16, #tpu.memory_space<vmem>>, vector<128x128xbf16>
    %cst_61 = arith.constant dense<0.000000e+00> : vector<128x128xf32>
    %60 = tpu.matmul %59, %36, %cst_61 {dimension_numbers = #tpu.dot_dimension_numbers<[1], [0], [0], [1], [0, 0, 1, 1], [], []>} : vector<128x128xbf16>, vector<128x128xbf16>, vector<128x128xf32> -> vector<128x128xf32>
    %61 = arith.addf %56, %60 : vector<128x128xf32>
    %c0_i32_62 = arith.constant 0 : i32
    %c0_i32_63 = arith.constant 0 : i32
    %62 = tpu.memref_slice %arg9[%0, %c0_i32_62, %c0_i32_63] : memref<2x448x128xbf16, #tpu.memory_space<vmem>> -> memref<1x448x128xbf16, #tpu.memory_space<vmem>>
    %63 = tpu.memref_squeeze %62 : memref<1x448x128xbf16, #tpu.memory_space<vmem>> -> memref<448x128xbf16, #tpu.memory_space<vmem>>
    %c98 = arith.constant 98 : index
    %c0_64 = arith.constant 0 : index
    %64 = vector.load %63[%c98, %c0_64] : memref<448x128xbf16, #tpu.memory_space<vmem>>, vector<128x128xbf16>
    %cst_65 = arith.constant dense<0.000000e+00> : vector<128x128xf32>
    %65 = tpu.matmul %64, %38, %cst_65 {dimension_numbers = #tpu.dot_dimension_numbers<[1], [0], [0], [1], [0, 0, 1, 1], [], []>} : vector<128x128xbf16>, vector<128x128xbf16>, vector<128x128xf32> -> vector<128x128xf32>
    %66 = arith.addf %61, %65 : vector<128x128xf32>
    %c0_i32_66 = arith.constant 0 : i32
    %c0_i32_67 = arith.constant 0 : i32
    %67 = tpu.memref_slice %arg9[%0, %c0_i32_66, %c0_i32_67] : memref<2x448x128xbf16, #tpu.memory_space<vmem>> -> memref<1x448x128xbf16, #tpu.memory_space<vmem>>
    %68 = tpu.memref_squeeze %67 : memref<1x448x128xbf16, #tpu.memory_space<vmem>> -> memref<448x128xbf16, #tpu.memory_space<vmem>>
    %c158 = arith.constant 158 : index
    %c0_68 = arith.constant 0 : index
    %69 = vector.load %68[%c158, %c0_68] : memref<448x128xbf16, #tpu.memory_space<vmem>>, vector<128x128xbf16>
    %cst_69 = arith.constant dense<0.000000e+00> : vector<128x128xf32>
    %70 = tpu.matmul %69, %40, %cst_69 {dimension_numbers = #tpu.dot_dimension_numbers<[1], [0], [0], [1], [0, 0, 1, 1], [], []>} : vector<128x128xbf16>, vector<128x128xbf16>, vector<128x128xf32> -> vector<128x128xf32>
    %71 = arith.addf %66, %70 : vector<128x128xf32>
    %c0_i32_70 = arith.constant 0 : i32
    %c0_i32_71 = arith.constant 0 : i32
    %72 = tpu.memref_slice %arg9[%0, %c0_i32_70, %c0_i32_71] : memref<2x448x128xbf16, #tpu.memory_space<vmem>> -> memref<1x448x128xbf16, #tpu.memory_space<vmem>>
    %73 = tpu.memref_squeeze %72 : memref<1x448x128xbf16, #tpu.memory_space<vmem>> -> memref<448x128xbf16, #tpu.memory_space<vmem>>
    %c160_72 = arith.constant 160 : index
    %c0_73 = arith.constant 0 : index
    %74 = vector.load %73[%c160_72, %c0_73] : memref<448x128xbf16, #tpu.memory_space<vmem>>, vector<128x128xbf16>
    %cst_74 = arith.constant dense<0.000000e+00> : vector<128x128xf32>
    %75 = tpu.matmul %74, %42, %cst_74 {dimension_numbers = #tpu.dot_dimension_numbers<[1], [0], [0], [1], [0, 0, 1, 1], [], []>} : vector<128x128xbf16>, vector<128x128xbf16>, vector<128x128xf32> -> vector<128x128xf32>
    %76 = arith.addf %71, %75 : vector<128x128xf32>
    %c0_i32_75 = arith.constant 0 : i32
    %c0_i32_76 = arith.constant 0 : i32
    %77 = tpu.memref_slice %arg9[%0, %c0_i32_75, %c0_i32_76] : memref<2x448x128xbf16, #tpu.memory_space<vmem>> -> memref<1x448x128xbf16, #tpu.memory_space<vmem>>
    %78 = tpu.memref_squeeze %77 : memref<1x448x128xbf16, #tpu.memory_space<vmem>> -> memref<448x128xbf16, #tpu.memory_space<vmem>>
    %c162 = arith.constant 162 : index
    %c0_77 = arith.constant 0 : index
    %79 = vector.load %78[%c162, %c0_77] : memref<448x128xbf16, #tpu.memory_space<vmem>>, vector<128x128xbf16>
    %cst_78 = arith.constant dense<0.000000e+00> : vector<128x128xf32>
    %80 = tpu.matmul %79, %44, %cst_78 {dimension_numbers = #tpu.dot_dimension_numbers<[1], [0], [0], [1], [0, 0, 1, 1], [], []>} : vector<128x128xbf16>, vector<128x128xbf16>, vector<128x128xf32> -> vector<128x128xf32>
    %81 = arith.addf %76, %80 : vector<128x128xf32>
    %c0_i32_79 = arith.constant 0 : i32
    %c0_i32_80 = arith.constant 0 : i32
    %82 = tpu.memref_slice %arg9[%0, %c0_i32_79, %c0_i32_80] : memref<2x448x128xbf16, #tpu.memory_space<vmem>> -> memref<1x448x128xbf16, #tpu.memory_space<vmem>>
    %83 = tpu.memref_squeeze %82 : memref<1x448x128xbf16, #tpu.memory_space<vmem>> -> memref<448x128xbf16, #tpu.memory_space<vmem>>
    %c222 = arith.constant 222 : index
    %c0_81 = arith.constant 0 : index
    %84 = vector.load %83[%c222, %c0_81] : memref<448x128xbf16, #tpu.memory_space<vmem>>, vector<128x128xbf16>
    %cst_82 = arith.constant dense<0.000000e+00> : vector<128x128xf32>
    %85 = tpu.matmul %84, %46, %cst_82 {dimension_numbers = #tpu.dot_dimension_numbers<[1], [0], [0], [1], [0, 0, 1, 1], [], []>} : vector<128x128xbf16>, vector<128x128xbf16>, vector<128x128xf32> -> vector<128x128xf32>
    %86 = arith.addf %81, %85 : vector<128x128xf32>
    %c0_i32_83 = arith.constant 0 : i32
    %c0_i32_84 = arith.constant 0 : i32
    %87 = tpu.memref_slice %arg9[%0, %c0_i32_83, %c0_i32_84] : memref<2x448x128xbf16, #tpu.memory_space<vmem>> -> memref<1x448x128xbf16, #tpu.memory_space<vmem>>
    %88 = tpu.memref_squeeze %87 : memref<1x448x128xbf16, #tpu.memory_space<vmem>> -> memref<448x128xbf16, #tpu.memory_space<vmem>>
    %c224 = arith.constant 224 : index
    %c0_85 = arith.constant 0 : index
    %89 = vector.load %88[%c224, %c0_85] : memref<448x128xbf16, #tpu.memory_space<vmem>>, vector<128x128xbf16>
    %cst_86 = arith.constant dense<0.000000e+00> : vector<128x128xf32>
    %90 = tpu.matmul %89, %48, %cst_86 {dimension_numbers = #tpu.dot_dimension_numbers<[1], [0], [0], [1], [0, 0, 1, 1], [], []>} : vector<128x128xbf16>, vector<128x128xbf16>, vector<128x128xf32> -> vector<128x128xf32>
    %91 = arith.addf %86, %90 : vector<128x128xf32>
    %c0_i32_87 = arith.constant 0 : i32
    %c0_i32_88 = arith.constant 0 : i32
    %92 = tpu.memref_slice %arg9[%0, %c0_i32_87, %c0_i32_88] : memref<2x448x128xbf16, #tpu.memory_space<vmem>> -> memref<1x448x128xbf16, #tpu.memory_space<vmem>>
    %93 = tpu.memref_squeeze %92 : memref<1x448x128xbf16, #tpu.memory_space<vmem>> -> memref<448x128xbf16, #tpu.memory_space<vmem>>
    %c226 = arith.constant 226 : index
    %c0_89 = arith.constant 0 : index
    %94 = vector.load %93[%c226, %c0_89] : memref<448x128xbf16, #tpu.memory_space<vmem>>, vector<128x128xbf16>
    %cst_90 = arith.constant dense<0.000000e+00> : vector<128x128xf32>
    %95 = tpu.matmul %94, %50, %cst_90 {dimension_numbers = #tpu.dot_dimension_numbers<[1], [0], [0], [1], [0, 0, 1, 1], [], []>} : vector<128x128xbf16>, vector<128x128xbf16>, vector<128x128xf32> -> vector<128x128xf32>
    %96 = arith.addf %91, %95 : vector<128x128xf32>
    %97 = vector.broadcast %52 : vector<1x128xf32> to vector<128x128xf32>
    %98 = arith.addf %96, %97 : vector<128x128xf32>
    %cst_91 = arith.constant 0.000000e+00 : f32
    %99 = vector.broadcast %cst_91 : f32 to vector<128x128xf32>
    %100 = arith.maximumf %98, %99 : vector<128x128xf32>
    %101 = arith.truncf %100 : vector<128x128xf32> to vector<128x128xbf16>
    %c1_92 = arith.constant 1 : index
    %c0_93 = arith.constant 0 : index
    %c0_94 = arith.constant 0 : index
    %102 = vector.load %arg5[%c1_92, %c0_93, %c0_94] : memref<3x128x128xbf16, #tpu.memory_space<vmem>>, vector<1x128x128xbf16>
    %103 = vector.shape_cast %102 : vector<1x128x128xbf16> to vector<128x128xbf16>
    %cst_95 = arith.constant dense<0.000000e+00> : vector<128x128xf32>
    %104 = tpu.matmul %101, %103, %cst_95 {dimension_numbers = #tpu.dot_dimension_numbers<[1], [0], [0], [1], [0, 0, 1, 1], [], []>} : vector<128x128xbf16>, vector<128x128xbf16>, vector<128x128xf32> -> vector<128x128xf32>
    %105 = arith.addf %32, %104 : vector<128x128xf32>
    %c1_96 = arith.constant 1 : index
    %c0_97 = arith.constant 0 : index
    %c0_98 = arith.constant 0 : index
    %c0_99 = arith.constant 0 : index
    %106 = vector.load %arg4[%c1_96, %c0_97, %c0_98, %c0_99] : memref<2x9x128x128xbf16, #tpu.memory_space<vmem>>, vector<1x1x128x128xbf16>
    %107 = vector.shape_cast %106 : vector<1x1x128x128xbf16> to vector<128x128xbf16>
    %c1_100 = arith.constant 1 : index
    %c1_101 = arith.constant 1 : index
    %c0_102 = arith.constant 0 : index
    %c0_103 = arith.constant 0 : index
    %108 = vector.load %arg4[%c1_100, %c1_101, %c0_102, %c0_103] : memref<2x9x128x128xbf16, #tpu.memory_space<vmem>>, vector<1x1x128x128xbf16>
    %109 = vector.shape_cast %108 : vector<1x1x128x128xbf16> to vector<128x128xbf16>
    %c1_104 = arith.constant 1 : index
    %c2_105 = arith.constant 2 : index
    %c0_106 = arith.constant 0 : index
    %c0_107 = arith.constant 0 : index
    %110 = vector.load %arg4[%c1_104, %c2_105, %c0_106, %c0_107] : memref<2x9x128x128xbf16, #tpu.memory_space<vmem>>, vector<1x1x128x128xbf16>
    %111 = vector.shape_cast %110 : vector<1x1x128x128xbf16> to vector<128x128xbf16>
    %c1_108 = arith.constant 1 : index
    %c3_109 = arith.constant 3 : index
    %c0_110 = arith.constant 0 : index
    %c0_111 = arith.constant 0 : index
    %112 = vector.load %arg4[%c1_108, %c3_109, %c0_110, %c0_111] : memref<2x9x128x128xbf16, #tpu.memory_space<vmem>>, vector<1x1x128x128xbf16>
    %113 = vector.shape_cast %112 : vector<1x1x128x128xbf16> to vector<128x128xbf16>
    %c1_112 = arith.constant 1 : index
    %c4_113 = arith.constant 4 : index
    %c0_114 = arith.constant 0 : index
    %c0_115 = arith.constant 0 : index
    %114 = vector.load %arg4[%c1_112, %c4_113, %c0_114, %c0_115] : memref<2x9x128x128xbf16, #tpu.memory_space<vmem>>, vector<1x1x128x128xbf16>
    %115 = vector.shape_cast %114 : vector<1x1x128x128xbf16> to vector<128x128xbf16>
    %c1_116 = arith.constant 1 : index
    %c5_117 = arith.constant 5 : index
    %c0_118 = arith.constant 0 : index
    %c0_119 = arith.constant 0 : index
    %116 = vector.load %arg4[%c1_116, %c5_117, %c0_118, %c0_119] : memref<2x9x128x128xbf16, #tpu.memory_space<vmem>>, vector<1x1x128x128xbf16>
    %117 = vector.shape_cast %116 : vector<1x1x128x128xbf16> to vector<128x128xbf16>
    %c1_120 = arith.constant 1 : index
    %c6_121 = arith.constant 6 : index
    %c0_122 = arith.constant 0 : index
    %c0_123 = arith.constant 0 : index
    %118 = vector.load %arg4[%c1_120, %c6_121, %c0_122, %c0_123] : memref<2x9x128x128xbf16, #tpu.memory_space<vmem>>, vector<1x1x128x128xbf16>
    %119 = vector.shape_cast %118 : vector<1x1x128x128xbf16> to vector<128x128xbf16>
    %c1_124 = arith.constant 1 : index
    %c7_125 = arith.constant 7 : index
    %c0_126 = arith.constant 0 : index
    %c0_127 = arith.constant 0 : index
    %120 = vector.load %arg4[%c1_124, %c7_125, %c0_126, %c0_127] : memref<2x9x128x128xbf16, #tpu.memory_space<vmem>>, vector<1x1x128x128xbf16>
    %121 = vector.shape_cast %120 : vector<1x1x128x128xbf16> to vector<128x128xbf16>
    %c1_128 = arith.constant 1 : index
    %c8_129 = arith.constant 8 : index
    %c0_130 = arith.constant 0 : index
    %c0_131 = arith.constant 0 : index
    %122 = vector.load %arg4[%c1_128, %c8_129, %c0_130, %c0_131] : memref<2x9x128x128xbf16, #tpu.memory_space<vmem>>, vector<1x1x128x128xbf16>
    %123 = vector.shape_cast %122 : vector<1x1x128x128xbf16> to vector<128x128xbf16>
    %c2_132 = arith.constant 2 : index
    %c0_133 = arith.constant 0 : index
    %c0_134 = arith.constant 0 : index
    %124 = vector.load %arg6[%c2_132, %c0_133, %c0_134] : memref<3x1x128xf32, #tpu.memory_space<vmem>>, vector<1x1x128xf32>
    %125 = vector.shape_cast %124 : vector<1x1x128xf32> to vector<1x128xf32>
    %c0_i32_135 = arith.constant 0 : i32
    %c0_i32_136 = arith.constant 0 : i32
    %126 = tpu.memref_slice %arg9[%0, %c0_i32_135, %c0_i32_136] : memref<2x448x128xbf16, #tpu.memory_space<vmem>> -> memref<1x448x128xbf16, #tpu.memory_space<vmem>>
    %127 = tpu.memref_squeeze %126 : memref<1x448x128xbf16, #tpu.memory_space<vmem>> -> memref<448x128xbf16, #tpu.memory_space<vmem>>
    %c28 = arith.constant 28 : index
    %c0_137 = arith.constant 0 : index
    %128 = vector.load %127[%c28, %c0_137] : memref<448x128xbf16, #tpu.memory_space<vmem>>, vector<128x128xbf16>
    %cst_138 = arith.constant dense<0.000000e+00> : vector<128x128xf32>
    %129 = tpu.matmul %128, %107, %cst_138 {dimension_numbers = #tpu.dot_dimension_numbers<[1], [0], [0], [1], [0, 0, 1, 1], [], []>} : vector<128x128xbf16>, vector<128x128xbf16>, vector<128x128xf32> -> vector<128x128xf32>
    %c0_i32_139 = arith.constant 0 : i32
    %c0_i32_140 = arith.constant 0 : i32
    %130 = tpu.memref_slice %arg9[%0, %c0_i32_139, %c0_i32_140] : memref<2x448x128xbf16, #tpu.memory_space<vmem>> -> memref<1x448x128xbf16, #tpu.memory_space<vmem>>
    %131 = tpu.memref_squeeze %130 : memref<1x448x128xbf16, #tpu.memory_space<vmem>> -> memref<448x128xbf16, #tpu.memory_space<vmem>>
    %c32 = arith.constant 32 : index
    %c0_141 = arith.constant 0 : index
    %132 = vector.load %131[%c32, %c0_141] : memref<448x128xbf16, #tpu.memory_space<vmem>>, vector<128x128xbf16>
    %cst_142 = arith.constant dense<0.000000e+00> : vector<128x128xf32>
    %133 = tpu.matmul %132, %109, %cst_142 {dimension_numbers = #tpu.dot_dimension_numbers<[1], [0], [0], [1], [0, 0, 1, 1], [], []>} : vector<128x128xbf16>, vector<128x128xbf16>, vector<128x128xf32> -> vector<128x128xf32>
    %134 = arith.addf %129, %133 : vector<128x128xf32>
    %c0_i32_143 = arith.constant 0 : i32
    %c0_i32_144 = arith.constant 0 : i32
    %135 = tpu.memref_slice %arg9[%0, %c0_i32_143, %c0_i32_144] : memref<2x448x128xbf16, #tpu.memory_space<vmem>> -> memref<1x448x128xbf16, #tpu.memory_space<vmem>>
    %136 = tpu.memref_squeeze %135 : memref<1x448x128xbf16, #tpu.memory_space<vmem>> -> memref<448x128xbf16, #tpu.memory_space<vmem>>
    %c36 = arith.constant 36 : index
    %c0_145 = arith.constant 0 : index
    %137 = vector.load %136[%c36, %c0_145] : memref<448x128xbf16, #tpu.memory_space<vmem>>, vector<128x128xbf16>
    %cst_146 = arith.constant dense<0.000000e+00> : vector<128x128xf32>
    %138 = tpu.matmul %137, %111, %cst_146 {dimension_numbers = #tpu.dot_dimension_numbers<[1], [0], [0], [1], [0, 0, 1, 1], [], []>} : vector<128x128xbf16>, vector<128x128xbf16>, vector<128x128xf32> -> vector<128x128xf32>
    %139 = arith.addf %134, %138 : vector<128x128xf32>
    %c0_i32_147 = arith.constant 0 : i32
    %c0_i32_148 = arith.constant 0 : i32
    %140 = tpu.memref_slice %arg9[%0, %c0_i32_147, %c0_i32_148] : memref<2x448x128xbf16, #tpu.memory_space<vmem>> -> memref<1x448x128xbf16, #tpu.memory_space<vmem>>
    %141 = tpu.memref_squeeze %140 : memref<1x448x128xbf16, #tpu.memory_space<vmem>> -> memref<448x128xbf16, #tpu.memory_space<vmem>>
    %c156 = arith.constant 156 : index
    %c0_149 = arith.constant 0 : index
    %142 = vector.load %141[%c156, %c0_149] : memref<448x128xbf16, #tpu.memory_space<vmem>>, vector<128x128xbf16>
    %cst_150 = arith.constant dense<0.000000e+00> : vector<128x128xf32>
    %143 = tpu.matmul %142, %113, %cst_150 {dimension_numbers = #tpu.dot_dimension_numbers<[1], [0], [0], [1], [0, 0, 1, 1], [], []>} : vector<128x128xbf16>, vector<128x128xbf16>, vector<128x128xf32> -> vector<128x128xf32>
    %144 = arith.addf %139, %143 : vector<128x128xf32>
    %c0_i32_151 = arith.constant 0 : i32
    %c0_i32_152 = arith.constant 0 : i32
    %145 = tpu.memref_slice %arg9[%0, %c0_i32_151, %c0_i32_152] : memref<2x448x128xbf16, #tpu.memory_space<vmem>> -> memref<1x448x128xbf16, #tpu.memory_space<vmem>>
    %146 = tpu.memref_squeeze %145 : memref<1x448x128xbf16, #tpu.memory_space<vmem>> -> memref<448x128xbf16, #tpu.memory_space<vmem>>
    %c160_153 = arith.constant 160 : index
    %c0_154 = arith.constant 0 : index
    %147 = vector.load %146[%c160_153, %c0_154] : memref<448x128xbf16, #tpu.memory_space<vmem>>, vector<128x128xbf16>
    %cst_155 = arith.constant dense<0.000000e+00> : vector<128x128xf32>
    %148 = tpu.matmul %147, %115, %cst_155 {dimension_numbers = #tpu.dot_dimension_numbers<[1], [0], [0], [1], [0, 0, 1, 1], [], []>} : vector<128x128xbf16>, vector<128x128xbf16>, vector<128x128xf32> -> vector<128x128xf32>
    %149 = arith.addf %144, %148 : vector<128x128xf32>
    %c0_i32_156 = arith.constant 0 : i32
    %c0_i32_157 = arith.constant 0 : i32
    %150 = tpu.memref_slice %arg9[%0, %c0_i32_156, %c0_i32_157] : memref<2x448x128xbf16, #tpu.memory_space<vmem>> -> memref<1x448x128xbf16, #tpu.memory_space<vmem>>
    %151 = tpu.memref_squeeze %150 : memref<1x448x128xbf16, #tpu.memory_space<vmem>> -> memref<448x128xbf16, #tpu.memory_space<vmem>>
    %c164 = arith.constant 164 : index
    %c0_158 = arith.constant 0 : index
    %152 = vector.load %151[%c164, %c0_158] : memref<448x128xbf16, #tpu.memory_space<vmem>>, vector<128x128xbf16>
    %cst_159 = arith.constant dense<0.000000e+00> : vector<128x128xf32>
    %153 = tpu.matmul %152, %117, %cst_159 {dimension_numbers = #tpu.dot_dimension_numbers<[1], [0], [0], [1], [0, 0, 1, 1], [], []>} : vector<128x128xbf16>, vector<128x128xbf16>, vector<128x128xf32> -> vector<128x128xf32>
    %154 = arith.addf %149, %153 : vector<128x128xf32>
    %c0_i32_160 = arith.constant 0 : i32
    %c0_i32_161 = arith.constant 0 : i32
    %155 = tpu.memref_slice %arg9[%0, %c0_i32_160, %c0_i32_161] : memref<2x448x128xbf16, #tpu.memory_space<vmem>> -> memref<1x448x128xbf16, #tpu.memory_space<vmem>>
    %156 = tpu.memref_squeeze %155 : memref<1x448x128xbf16, #tpu.memory_space<vmem>> -> memref<448x128xbf16, #tpu.memory_space<vmem>>
    %c284 = arith.constant 284 : index
    %c0_162 = arith.constant 0 : index
    %157 = vector.load %156[%c284, %c0_162] : memref<448x128xbf16, #tpu.memory_space<vmem>>, vector<128x128xbf16>
    %cst_163 = arith.constant dense<0.000000e+00> : vector<128x128xf32>
    %158 = tpu.matmul %157, %119, %cst_163 {dimension_numbers = #tpu.dot_dimension_numbers<[1], [0], [0], [1], [0, 0, 1, 1], [], []>} : vector<128x128xbf16>, vector<128x128xbf16>, vector<128x128xf32> -> vector<128x128xf32>
    %159 = arith.addf %154, %158 : vector<128x128xf32>
    %c0_i32_164 = arith.constant 0 : i32
    %c0_i32_165 = arith.constant 0 : i32
    %160 = tpu.memref_slice %arg9[%0, %c0_i32_164, %c0_i32_165] : memref<2x448x128xbf16, #tpu.memory_space<vmem>> -> memref<1x448x128xbf16, #tpu.memory_space<vmem>>
    %161 = tpu.memref_squeeze %160 : memref<1x448x128xbf16, #tpu.memory_space<vmem>> -> memref<448x128xbf16, #tpu.memory_space<vmem>>
    %c288 = arith.constant 288 : index
    %c0_166 = arith.constant 0 : index
    %162 = vector.load %161[%c288, %c0_166] : memref<448x128xbf16, #tpu.memory_space<vmem>>, vector<128x128xbf16>
    %cst_167 = arith.constant dense<0.000000e+00> : vector<128x128xf32>
    %163 = tpu.matmul %162, %121, %cst_167 {dimension_numbers = #tpu.dot_dimension_numbers<[1], [0], [0], [1], [0, 0, 1, 1], [], []>} : vector<128x128xbf16>, vector<128x128xbf16>, vector<128x128xf32> -> vector<128x128xf32>
    %164 = arith.addf %159, %163 : vector<128x128xf32>
    %c0_i32_168 = arith.constant 0 : i32
    %c0_i32_169 = arith.constant 0 : i32
    %165 = tpu.memref_slice %arg9[%0, %c0_i32_168, %c0_i32_169] : memref<2x448x128xbf16, #tpu.memory_space<vmem>> -> memref<1x448x128xbf16, #tpu.memory_space<vmem>>
    %166 = tpu.memref_squeeze %165 : memref<1x448x128xbf16, #tpu.memory_space<vmem>> -> memref<448x128xbf16, #tpu.memory_space<vmem>>
    %c292 = arith.constant 292 : index
    %c0_170 = arith.constant 0 : index
    %167 = vector.load %166[%c292, %c0_170] : memref<448x128xbf16, #tpu.memory_space<vmem>>, vector<128x128xbf16>
    %cst_171 = arith.constant dense<0.000000e+00> : vector<128x128xf32>
    %168 = tpu.matmul %167, %123, %cst_171 {dimension_numbers = #tpu.dot_dimension_numbers<[1], [0], [0], [1], [0, 0, 1, 1], [], []>} : vector<128x128xbf16>, vector<128x128xbf16>, vector<128x128xf32> -> vector<128x128xf32>
    %169 = arith.addf %164, %168 : vector<128x128xf32>
    %170 = vector.broadcast %125 : vector<1x128xf32> to vector<128x128xf32>
    %171 = arith.addf %169, %170 : vector<128x128xf32>
    %cst_172 = arith.constant 0.000000e+00 : f32
    %172 = vector.broadcast %cst_172 : f32 to vector<128x128xf32>
    %173 = arith.maximumf %171, %172 : vector<128x128xf32>
    %174 = arith.truncf %173 : vector<128x128xf32> to vector<128x128xbf16>
    %c2_173 = arith.constant 2 : index
    %c0_174 = arith.constant 0 : index
    %c0_175 = arith.constant 0 : index
    %175 = vector.load %arg5[%c2_173, %c0_174, %c0_175] : memref<3x128x128xbf16, #tpu.memory_space<vmem>>, vector<1x128x128xbf16>
    %176 = vector.shape_cast %175 : vector<1x128x128xbf16> to vector<128x128xbf16>
    %cst_176 = arith.constant dense<0.000000e+00> : vector<128x128xf32>
    %177 = tpu.matmul %174, %176, %cst_176 {dimension_numbers = #tpu.dot_dimension_numbers<[1], [0], [0], [1], [0, 0, 1, 1], [], []>} : vector<128x128xbf16>, vector<128x128xbf16>, vector<128x128xf32> -> vector<128x128xf32>
    %178 = arith.addf %105, %177 : vector<128x128xf32>
    %cst_177 = arith.constant 0.000000e+00 : f32
    %179 = vector.broadcast %cst_177 : f32 to vector<128x128xf32>
    %180 = arith.maximumf %178, %179 : vector<128x128xf32>
    %181 = vector.shape_cast %180 : vector<128x128xf32> to vector<4x32x128xf32>
    %182 = vector.extract_strided_slice %181 {offsets = [0, 8, 0], sizes = [4, 16, 128], strides = [1, 1, 1]} : vector<4x32x128xf32> to vector<4x16x128xf32>
    %183 = arith.truncf %182 : vector<4x16x128xf32> to vector<4x16x128xbf16>
    %c0_178 = arith.constant 0 : index
    %c0_179 = arith.constant 0 : index
    %c0_180 = arith.constant 0 : index
    %c0_181 = arith.constant 0 : index
    %184 = vector.load %arg8[%c0_178, %c0_179, %c0_180, %c0_181] : memref<1x4x16x128xbf16, #tpu.memory_space<vmem>>, vector<1x4x16x128xbf16>
    %185 = vector.shape_cast %184 : vector<1x4x16x128xbf16> to vector<4x16x128xbf16>
    %186 = vector.shape_cast %183 : vector<4x16x128xbf16> to vector<1x4x16x128xbf16>
    tpu.vector_store %arg8[%c0_178, %c0_179, %c0_180, %c0_181], %186 {strides = array<i32>} : memref<1x4x16x128xbf16, #tpu.memory_space<vmem>>, vector<1x4x16x128xbf16>,
    return
  }
  func.func @transform_1(%arg0: i32, %arg1: i32) -> (i32, i32) {
    %c0_i32 = arith.constant 0 : i32
    %c0_i32_0 = arith.constant 0 : i32
    %c0_i32_1 = arith.constant 0 : i32
    return %c0_i32, %c0_i32_0 : i32, i32
  }
  func.func @transform_2(%arg0: i32, %arg1: i32) -> (i32, i32, i32, i32) {
    %c0_i32 = arith.constant 0 : i32
    %c0_i32_0 = arith.constant 0 : i32
    %c0_i32_1 = arith.constant 0 : i32
    %c0_i32_2 = arith.constant 0 : i32
    %c0_i32_3 = arith.constant 0 : i32
    return %c0_i32, %c0_i32_0, %c0_i32_1, %c0_i32_2 : i32, i32, i32, i32
  }
  func.func @transform_3(%arg0: i32, %arg1: i32) -> (i32, i32, i32) {
    %c0_i32 = arith.constant 0 : i32
    %c0_i32_0 = arith.constant 0 : i32
    %c0_i32_1 = arith.constant 0 : i32
    %c0_i32_2 = arith.constant 0 : i32
    return %c0_i32, %c0_i32_0, %c0_i32_1 : i32, i32, i32
  }
  func.func @transform_4(%arg0: i32, %arg1: i32) -> (i32, i32, i32) {
    %c0_i32 = arith.constant 0 : i32
    %c0_i32_0 = arith.constant 0 : i32
    %c0_i32_1 = arith.constant 0 : i32
    %c0_i32_2 = arith.constant 0 : i32
    return %c0_i32, %c0_i32_0, %c0_i32_1 : i32, i32, i32
  }
  func.func @transform_5(%arg0: i32, %arg1: i32) -> (i32, i32, i32) {
    %c0_i32 = arith.constant 0 : i32
    %c0_i32_0 = arith.constant 0 : i32
    %c0_i32_1 = arith.constant 0 : i32
    return %arg0, %c0_i32, %c0_i32_0 : i32, i32, i32
  }
  func.func @transform_6(%arg0: i32, %arg1: i32) -> (i32, i32, i32, i32) {
    %c0_i32 = arith.constant 0 : i32
    %c0_i32_0 = arith.constant 0 : i32
    %c0_i32_1 = arith.constant 0 : i32
    return %arg0, %arg1, %c0_i32, %c0_i32_0 : i32, i32, i32, i32
  }
}

</mosaic_0001>

<llo_original>
// kernel: tpu_custom_call.1
$region0: #{tpu_custom_call.1}
  #allocation0 [shape = 'u32[]', space=smem, size = 0x4, offset = 0x4, fixed_abs, tag = 'smem constant byte address 0x4 - core index']
  #allocation1 [shape = 'u32[144,128]{1,0:T(1,128)}', space=vmem, size = 0x12000, scoped, tag = 'internal scratch']
  #allocation2 [shape = 'bf16[2,448,128]{2,1,0:T(8,128)(2,1)}', space=vmem, size = 0x38000, scoped, tag = 'scratch operand']
  #allocation3 [shape = 's32[2]{0}', space=sflag, size = 0x8, scoped, tag = 'scratch operand']
  #allocation11 [shape = 's32[]', space=sflag, size = 0x4, offset = 0, fixed_abs, tag = 'sflag constant byte address 0x0 - dummy sync flag']
  #allocation12 [shape = 's32[]', space=sflag, size = 0x4, offset = 0, fixed_abs, tag = 'sflag constant byte address 0x0 - dummy sync flag']
  #allocation13 [shape = 'u32[]', space=smem, size = 0x4, offset = 0x44, fixed_abs, tag = 'smem constant byte address 0x44 - assertion arg 0']
  #allocation14 [shape = 'u32[]', space=smem, size = 0x4, offset = 0x48, fixed_abs, tag = 'smem constant byte address 0x48 - assertion arg 1']
  #allocation15 [shape = 's32[]', space=sflag, size = 0x4, offset = 0, fixed_abs, tag = 'sflag constant byte address 0x0 - dummy sync flag']
  #allocation16 [shape = 's32[]', space=sflag, size = 0x4, offset = 0, fixed_abs, tag = 'sflag constant byte address 0x0 - dummy sync flag']
  %s0 = inlined_call_operand.hbm [shape: bf16[2,832,128], index: 0, kind: input, shape index: {}]
  %s1 = inlined_call_operand.hbm [shape: bf16[128,128], index: 1, kind: input, shape index: {}]
  %s2 = inlined_call_operand.hbm [shape: bf16[2,9,128,128], index: 2, kind: input, shape index: {}]
  %s3 = inlined_call_operand.hbm [shape: bf16[3,128,128], index: 3, kind: input, shape index: {}]
  %s4 = inlined_call_operand.vmem [shape: f32[3,1,128], index: 4, kind: input, shape index: {}]
  %s5 = inlined_call_operand.vmem [shape: f32[2,1,128], index: 5, kind: input, shape index: {}]
  %s6 = inlined_call_operand.hbm [shape: bf16[2,16,16,128], index: 6, kind: output, shape index: {}]
  %s7 = sld [smem:[#allocation0]]
  $region81: #{tpu_custom_call.1} parent=0
    _
  %s9 = ssub.s32 1, %s7
  %s10 = scalar_select 0, %s9, %s7
  $region1: #{tpu_custom_call.1} parent=0
    #allocation4 [shape = 'u8[32768]{0}', space=vmem, size = 0x8000, scoped, tag = 'input window, operand 1, single buffered']
    #allocation5 [shape = 's32[2]{0}', space=sflag, size = 0x8, scoped, tag = 'scoped memory for tpu_custom_call.1']
    #allocation6 [shape = 's32[2]{0}', space=sflag, size = 0x8, scoped, tag = 'scoped memory for tpu_custom_call.1']
    #allocation7 [shape = 'u8[589824]{0}', space=vmem, size = 0x90000, scoped, tag = 'input window, operand 2, single buffered']
    #allocation8 [shape = 's32[1]{0}', space=sflag, size = 0x4, scoped, tag = 'scoped memory for tpu_custom_call.1']
    #allocation9 [shape = 'u8[98304]{0}', space=vmem, size = 0x18000, scoped, tag = 'input window, operand 3, single buffered']
    #allocation10 [shape = 'u8[32768]{0}', space=vmem, size = 0x8000, scoped, tag = 'output window, operand 0']
    %11 = vsyncpa [#allocation5], 0
    %12 = vsyncpa [#allocation8], 0
    %13 = vsyncpa [#allocation6], 0
    %s14 = scalar_lea.sflag [#allocation6], 1
    %15 = vsyncpa %s14, 0
    loop: start=0, step=1, limit=10
    $region2: #{tpu_custom_call.1} parent=1 // loop_pre_header
      _
    $region3: #{tpu_custom_call.1} parent=1 // loop_header
      %s17 = sphi 0, %s21
      %p18 = scmp.ge.s32.totalorder %s17, 10
      %s24 = sphi 0, %s36
      %s25 = sphi 0, %s32
      %s26 = sphi 0, %s24
      %s27 = sphi 0, %s25
      %s28 = sphi 0, %s26
      %s29 = sphi 0, %s27
      %s37 = sphi 0, %s37
      %s39 = sphi 0, %s37
      %s40 = sphi 0, %s39
      %s54 = sphi 0, %s40
      %s58 = sphi 0, %s58
      %s60 = sphi 0, %s58
      %s61 = sphi 0, %s60
      %s75 = sphi 0, %s61
      %s79 = sphi 0, %s79
      %s81 = sphi 0, %s79
      %s82 = sphi 0, %s81
      %s96 = sphi 0, %s82
      %s100 = sphi 0, %s100
      %s102 = sphi 0, %s100
      %s103 = sphi 0, %s102
      %s117 = sphi 0, %s103
      %s123 = sphi 0, %s125
      %s126 = sphi 0, %s123
      %s127 = sphi 0, %s126
      %s143 = sphi 0, %s127
      %s151 = sphi 0, %s153
      %s154 = sphi 0, %s151
      %s155 = sphi 0, %s154
      %s171 = sphi 0, %s155
    $region4: #{tpu_custom_call.1} parent=1 // loop_header_branch
      %20 = sbr.rel (%p18) target = $region8
    $region5: #{tpu_custom_call.1} parent=1 // loop_body
      %s22 = ssub.s32 %s17, 1
      %s23 = ssub.s32 %s17, 2
      %s30 = sadd.s32 1, %s25
      %p31 = scmp.ge.s32.totalorder %s30, 4
      %s32 = scalar_select %p31, 0, %s30
      %s33 = sadd.s32 1, %s24
      %s34 = scalar_select %p31, %s33, %s24
      %p35 = scmp.ge.s32.totalorder %s34, 2
      %s36 = scalar_select %p35, 0, %s34
      %s38 = sadd.s32 %s37, 1
      %p41 = scmp.eq.s32.totalorder %s17, 7
      %p42 = scmp.ne.s32.totalorder %s37, %s39
      %p43 = scmp.eq.s32.totalorder %s17, 0
      %p44 = por %p42, %p43
      %p45 = scmp.ne.s32.totalorder %s37, %s39
      %p46 = scmp.eq.s32.totalorder %s22, 7
      %p47 = por %p45, %p46
      %p48 = scmp.ne.s32.totalorder %s39, %s40
      %p49 = scmp.eq.s32.totalorder %s22, 0
      %p50 = por %p48, %p49
      %p51 = scmp.ne.s32.totalorder %s39, %s40
      %p52 = scmp.eq.s32.totalorder %s23, 7
      %p53 = por %p51, %p52
      %p55 = scmp.ne.s32.totalorder %s40, %s54
      %p56 = scmp.eq.s32.totalorder %s23, 0
      %p57 = por %p55, %p56
      %s59 = sadd.s32 %s58, 1
      %p62 = scmp.eq.s32.totalorder %s17, 7
      %p63 = scmp.ne.s32.totalorder %s58, %s60
      %p64 = scmp.eq.s32.totalorder %s17, 0
      %p65 = por %p63, %p64
      %p66 = scmp.ne.s32.totalorder %s58, %s60
      %p67 = scmp.eq.s32.totalorder %s22, 7
      %p68 = por %p66, %p67
      %p69 = scmp.ne.s32.totalorder %s60, %s61
      %p70 = scmp.eq.s32.totalorder %s22, 0
      %p71 = por %p69, %p70
      %p72 = scmp.ne.s32.totalorder %s60, %s61
      %p73 = scmp.eq.s32.totalorder %s23, 7
      %p74 = por %p72, %p73
      %p76 = scmp.ne.s32.totalorder %s61, %s75
      %p77 = scmp.eq.s32.totalorder %s23, 0
      %p78 = por %p76, %p77
      %s80 = sadd.s32 %s79, 1
      %p83 = scmp.eq.s32.totalorder %s17, 7
      %p84 = scmp.ne.s32.totalorder %s79, %s81
      %p85 = scmp.eq.s32.totalorder %s17, 0
      %p86 = por %p84, %p85
      %p87 = scmp.ne.s32.totalorder %s79, %s81
      %p88 = scmp.eq.s32.totalorder %s22, 7
      %p89 = por %p87, %p88
      %p90 = scmp.ne.s32.totalorder %s81, %s82
      %p91 = scmp.eq.s32.totalorder %s22, 0
      %p92 = por %p90, %p91
      %p93 = scmp.ne.s32.totalorder %s81, %s82
      %p94 = scmp.eq.s32.totalorder %s23, 7
      %p95 = por %p93, %p94
      %p97 = scmp.ne.s32.totalorder %s82, %s96
      %p98 = scmp.eq.s32.totalorder %s23, 0
      %p99 = por %p97, %p98
      %s101 = sadd.s32 %s100, 1
      %p104 = scmp.eq.s32.totalorder %s17, 7
      %p105 = scmp.ne.s32.totalorder %s100, %s102
      %p106 = scmp.eq.s32.totalorder %s17, 0
      %p107 = por %p105, %p106
      %p108 = scmp.ne.s32.totalorder %s100, %s102
      %p109 = scmp.eq.s32.totalorder %s22, 7
      %p110 = por %p108, %p109
      %p111 = scmp.ne.s32.totalorder %s102, %s103
      %p112 = scmp.eq.s32.totalorder %s22, 0
      %p113 = por %p111, %p112
      %p114 = scmp.ne.s32.totalorder %s102, %s103
      %p115 = scmp.eq.s32.totalorder %s23, 7
      %p116 = por %p114, %p115
      %p118 = scmp.ne.s32.totalorder %s103, %s117
      %p119 = scmp.eq.s32.totalorder %s23, 0
      %p120 = por %p118, %p119
      %s121 = ssub.s32 %s24, %s36
      %p122 = scmp.eq.s32.totalorder %s121, 0
      %s124 = sadd.s32 %s123, 1
      %s125 = scalar_select %p122, %s123, %s124
      %p128 = pneg %p122
      %p129 = scmp.eq.s32.totalorder %s17, 7
      %p130 = por %p128, %p129
      %p131 = scmp.ne.s32.totalorder %s123, %s126
      %p132 = scmp.eq.s32.totalorder %s17, 0
      %p133 = por %p131, %p132
      %p134 = scmp.ne.s32.totalorder %s123, %s126
      %p135 = scmp.eq.s32.totalorder %s22, 7
      %p136 = por %p134, %p135
      %p137 = scmp.ne.s32.totalorder %s126, %s127
      %p138 = scmp.eq.s32.totalorder %s22, 0
      %p139 = por %p137, %p138
      %p140 = scmp.ne.s32.totalorder %s126, %s127
      %p141 = scmp.eq.s32.totalorder %s23, 7
      %p142 = por %p140, %p141
      %p144 = scmp.ne.s32.totalorder %s127, %s143
      %p145 = scmp.eq.s32.totalorder %s23, 0
      %p146 = por %p144, %p145
      %s147 = ssub.s32 %s24, %s36
      %s148 = ssub.s32 %s25, %s32
      %s149 = sor.u32 %s147, %s148
      %p150 = scmp.eq.s32.totalorder %s149, 0
      %s152 = sadd.s32 %s151, 1
      %s153 = scalar_select %p150, %s151, %s152
      %p156 = pneg %p150
      %p157 = scmp.eq.s32.totalorder %s17, 7
      %p158 = por %p156, %p157
      %p159 = scmp.ne.s32.totalorder %s151, %s154
      %p160 = scmp.eq.s32.totalorder %s17, 0
      %p161 = por %p159, %p160
      %p162 = scmp.ne.s32.totalorder %s151, %s154
      %p163 = scmp.eq.s32.totalorder %s22, 7
      %p164 = por %p162, %p163
      %p165 = scmp.ne.s32.totalorder %s154, %s155
      %p166 = scmp.eq.s32.totalorder %s22, 0
      %p167 = por %p165, %p166
      %p168 = scmp.ne.s32.totalorder %s154, %s155
      %p169 = scmp.eq.s32.totalorder %s23, 7
      %p170 = por %p168, %p169
      %p172 = scmp.ne.s32.totalorder %s155, %s171
      %p173 = scmp.eq.s32.totalorder %s23, 0
      %p174 = por %p172, %p173
      %p175 = scmp.le.s32.totalorder 1, %s17
      %p176 = scmp.lt.s32.totalorder %s17, 9
      %p177 = pnand %p175, %p176
      %p178 = pneg %p177
      // Predicated region
      $region9: #{tpu_custom_call.1} parent=5 // pred_check
        _
      $region10: #{tpu_custom_call.1} parent=5 // pred_check_branch
        %180 = sbr.rel (%p177) target = $region12
      $region11: #{tpu_custom_call.1} parent=5 // pred_region
        %s181 = ssub.s32 %s17, 1
        // Predicated region
        $region13: #{tpu_custom_call.1} parent=11 // pred_check
          %p182 = pneg %p50
        $region14: #{tpu_custom_call.1} parent=11 // pred_check_branch
          %184 = sbr.rel (%p182) target = $region16
        $region15: #{tpu_custom_call.1} parent=11 // pred_region
          %s186 = ssub.s32 1024, 1024
          %187 = vsyncadd [#allocation5], %s186
          %s188 = sshll.u32 [#allocation4], 4
          %s189 = int_to_ptr.vmem [resolvable:$true] %s188
          %194 = dma.hbm_to_vmem [thread:$0]  %s1, 1024, %s189, [#allocation5], 64, 64, 4
        $region16: #{tpu_custom_call.1} parent=11 // pred_fallthru
          _
        // Predicated region
        $region17: #{tpu_custom_call.1} parent=11 // pred_check
          %p195 = pneg %p71
        $region18: #{tpu_custom_call.1} parent=11 // pred_check_branch
          %197 = sbr.rel (%p195) target = $region20
        $region19: #{tpu_custom_call.1} parent=11 // pred_region
          %s199 = ssub.s32 18432, 18432
          %200 = vsyncadd [#allocation8], %s199
          %s201 = sshll.u32 [#allocation7], 4
          %s202 = int_to_ptr.vmem [resolvable:$true] %s201
          %207 = dma.hbm_to_vmem [thread:$0]  %s2, 18432, %s202, [#allocation8], 64, 64, 4
        $region20: #{tpu_custom_call.1} parent=11 // pred_fallthru
          _
        // Predicated region
        $region21: #{tpu_custom_call.1} parent=11 // pred_check
          %p208 = pneg %p92
        $region22: #{tpu_custom_call.1} parent=11 // pred_check_branch
          %210 = sbr.rel (%p208) target = $region24
        $region23: #{tpu_custom_call.1} parent=11 // pred_region
          %s212 = ssub.s32 3072, 3072
          %213 = vsyncadd [#allocation8], %s212
          %s214 = sshll.u32 [#allocation9], 4
          %s215 = int_to_ptr.vmem [resolvable:$true] %s214
          %220 = dma.hbm_to_vmem [thread:$0]  %s3, 3072, %s215, [#allocation8], 64, 64, 4
        $region24: #{tpu_custom_call.1} parent=11 // pred_fallthru
          _
        // Predicated region
        $region25: #{tpu_custom_call.1} parent=11 // pred_check
          %p221 = pneg %p113
        $region26: #{tpu_custom_call.1} parent=11 // pred_check_branch
          %223 = sbr.rel (%p221) target = $region28
        $region27: #{tpu_custom_call.1} parent=11 // pred_region
          _
        $region28: #{tpu_custom_call.1} parent=11 // pred_fallthru
          _
      $region12: #{tpu_custom_call.1} parent=5 // pred_fallthru
        _
      %p224 = scmp.lt.s32.totalorder %s17, 8
      // Predicated region
      $region29: #{tpu_custom_call.1} parent=5 // pred_check
        %p225 = pneg %p224
      $region30: #{tpu_custom_call.1} parent=5 // pred_check_branch
        %227 = sbr.rel (%p225) target = $region32
      $region31: #{tpu_custom_call.1} parent=5 // pred_region
        // Predicated region
        $region33: #{tpu_custom_call.1} parent=31 // pred_check
          %p228 = pneg %p133
        $region34: #{tpu_custom_call.1} parent=31 // pred_check_branch
          %230 = sbr.rel (%p228) target = $region36
        $region35: #{tpu_custom_call.1} parent=31 // pred_region
          %p231 = scmp.lt.s32.totalorder %s24, 1
          %s232 = scalar_select %p231, %s24, 1
          %s233 = scalar_lea.vmem %s5, %s232
        $region36: #{tpu_custom_call.1} parent=31 // pred_fallthru
          _
      $region32: #{tpu_custom_call.1} parent=5 // pred_fallthru
        _
      %p234 = scmp.le.s32.totalorder 1, %s17
      %p235 = scmp.lt.s32.totalorder %s17, 9
      %p236 = pnand %p234, %p235
      %p237 = pneg %p236
      // Predicated region
      $region37: #{tpu_custom_call.1} parent=5 // pred_check
        _
      $region38: #{tpu_custom_call.1} parent=5 // pred_check_branch
        %239 = sbr.rel (%p236) target = $region40
      $region39: #{tpu_custom_call.1} parent=5 // pred_region
        %s240 = ssub.s32 %s17, 1
        // Predicated region
        $region41: #{tpu_custom_call.1} parent=39 // pred_check
          %p241 = pneg %p50
        $region42: #{tpu_custom_call.1} parent=39 // pred_check_branch
          %243 = sbr.rel (%p241) target = $region44
        $region43: #{tpu_custom_call.1} parent=39 // pred_region
          %244 = dma.done [#allocation5], 1024
        $region44: #{tpu_custom_call.1} parent=39 // pred_fallthru
          _
        // Predicated region
        $region45: #{tpu_custom_call.1} parent=39 // pred_check
          %p245 = pneg %p71
        $region46: #{tpu_custom_call.1} parent=39 // pred_check_branch
          %247 = sbr.rel (%p245) target = $region48
        $region47: #{tpu_custom_call.1} parent=39 // pred_region
          %248 = dma.done [#allocation8], 18432
        $region48: #{tpu_custom_call.1} parent=39 // pred_fallthru
          _
        // Predicated region
        $region49: #{tpu_custom_call.1} parent=39 // pred_check
          %p249 = pneg %p92
        $region50: #{tpu_custom_call.1} parent=39 // pred_check_branch
          %251 = sbr.rel (%p249) target = $region52
        $region51: #{tpu_custom_call.1} parent=39 // pred_region
          %252 = dma.done [#allocation8], 3072
        $region52: #{tpu_custom_call.1} parent=39 // pred_fallthru
          _
        %p253 = pneg %p50
        %p254 = pneg %p47
        %p255 = pneg %p71
        %p256 = pneg %p68
        %p257 = pneg %p92
        %p258 = pneg %p89
        %p259 = pneg %p113
        %p260 = pneg %p110
        %p261 = scmp.lt.s32.totalorder %s26, 1
        %s262 = scalar_select %p261, %s26, 1
        %s263 = scalar_lea.vmem %s5, %s262
        %p264 = pneg %p139
        %p265 = pneg %p136
        %p266 = pneg %p167
        %p267 = pneg %p164
        %s268 = sand.u32 %s154, 1
        %s269 = scalar_lea.sflag [#allocation6], %s268
        %s270 = sand.u32 %s154, 1
        %s271 = smul.addr %s270, 32
        %s272 = scalar_lea.vmem [#allocation10], %s271
        %p273 = scmp.lt.s32.totalorder %s26, 1
        %s274 = scalar_select %p273, %s26, 1
        %s275 = scalar_lea.vmem %s5, %s274
        %s276 = smul.u32 4, %s27
        %s278 = sand.u32 %s27, 1
        %p279 = scmp.eq.s32.totalorder %s27, 0
        // Predicated region
        $region53: #{tpu_custom_call.1} parent=39 // pred_check
          %p280 = pneg %p279
        $region54: #{tpu_custom_call.1} parent=39 // pred_check_branch
          %282 = sbr.rel (%p280) target = $region56
        $region55: #{tpu_custom_call.1} parent=39 // pred_region
          %s283 = smul.u32 %s26, 104
          %s284 = smul.addr %s283, 64
          %s285 = scalar_lea.hbm %s0, %s284
          // Predicated region
          $region57: #{tpu_custom_call.1} parent=55 // pred_check
            _
          $region58: #{tpu_custom_call.1} parent=55 // pred_check_branch
            %287 = sbr.rel target = $region60
          $region59: #{tpu_custom_call.1} parent=55 // pred_region
            %288 = sst [smem:[#allocation13]] [#allocation12]
            %289 = sst [smem:[#allocation14]] [#allocation11]
          $region60: #{tpu_custom_call.1} parent=55 // pred_fallthru
            _
          %291 = shalt.err (0)
          %s293 = sshll.u32 [#allocation2], 4
          %s294 = int_to_ptr.vmem [resolvable:$true] %s293
          %296 = dma.hbm_to_vmem [thread:$0]  %s285, 3584, %s294, [#allocation3]
        $region56: #{tpu_custom_call.1} parent=39 // pred_fallthru
          _
        %s297 = sadd.s32 %s27, 1
        %p298 = scmp.lt.s32.totalorder %s297, 4
        // Predicated region
        $region61: #{tpu_custom_call.1} parent=39 // pred_check
          %p299 = pneg %p298
        $region62: #{tpu_custom_call.1} parent=39 // pred_check_branch
          %301 = sbr.rel (%p299) target = $region64
        $region63: #{tpu_custom_call.1} parent=39 // pred_region
          %s302 = ssub.s32 1, %s278
          %s303 = smul.u32 %s297, 128
          %s304 = sshra.s32 %s303, 3
          %s305 = sand.u32 %s303, 7
          %s306 = smul.u32 %s26, 104
          %s307 = sadd.s32 %s304, %s306
          %s308 = smul.addr %s307, 64
          %s309 = scalar_lea.hbm %s0, %s308
          %s310 = smul.u32 %s302, 56
          %s311 = smul.addr %s310, 4
          %s312 = scalar_lea.vmem [#allocation2], %s311
          %s313 = scalar_lea.sflag [#allocation3], %s302
          // Predicated region
          $region65: #{tpu_custom_call.1} parent=63 // pred_check
            _
          $region66: #{tpu_custom_call.1} parent=63 // pred_check_branch
            %315 = sbr.rel target = $region68
          $region67: #{tpu_custom_call.1} parent=63 // pred_region
            %316 = sst [smem:[#allocation13]] [#allocation16]
            %317 = sst [smem:[#allocation14]] [#allocation15]
          $region68: #{tpu_custom_call.1} parent=63 // pred_fallthru
            _
          %319 = shalt.err (0)
          %s321 = sshll.u32 %s312, 4
          %s322 = int_to_ptr.vmem [resolvable:$true] %s321
          %324 = dma.hbm_to_vmem [thread:$0]  %s309, 3584, %s322, %s313
        $region64: #{tpu_custom_call.1} parent=39 // pred_fallthru
          _
        %s325 = smul.u32 %s278, 56
        %s326 = smul.addr %s325, 4
        %s327 = scalar_lea.vmem [#allocation2], %s326
        %s328 = scalar_lea.sflag [#allocation3], %s278
        %s329 = smul.u32 4, 56
        %s330 = smul.u32 %s329, 1
        %s331 = sshll.u32 %s330, 4
        %332 = dma.done %s328, %s331
        %v333 = vld [vmem:[%s275] sm:$0x1]
        %v334 = vld [vmem:[#allocation4] sm:$0xf]
        %v335 = vld [vmem:[#allocation4 + $0x4] sm:$0xf]
        %v336 = vld [vmem:[#allocation4 + $0x8] sm:$0xf]
        %v337 = vld [vmem:[#allocation4 + $0xc] sm:$0xf]
        %v338 = vld [vmem:[#allocation4 + $0x10] sm:$0xf]
        %v339 = vld [vmem:[#allocation4 + $0x14] sm:$0xf]
        %v340 = vld [vmem:[#allocation4 + $0x18] sm:$0xf]
        %v341 = vld [vmem:[#allocation4 + $0x1c] sm:$0xf]
        %v342 = vld [vmem:[#allocation4 + $0x20] sm:$0xf]
        %v343 = vld [vmem:[#allocation4 + $0x24] sm:$0xf]
        %v344 = vld [vmem:[#allocation4 + $0x28] sm:$0xf]
        %v345 = vld [vmem:[#allocation4 + $0x2c] sm:$0xf]
        %v346 = vld [vmem:[#allocation4 + $0x30] sm:$0xf]
        %v347 = vld [vmem:[#allocation4 + $0x34] sm:$0xf]
        %v348 = vld [vmem:[#allocation4 + $0x38] sm:$0xf]
        %v349 = vld [vmem:[#allocation4 + $0x3c] sm:$0xf]
        %v350 = vld [vmem:[%s4] sm:$0x1]
        %v351 = vld [vmem:[%s327 + $0x50] sm:$0xf]
        %v352 = vld [vmem:[%s327 + $0x54] sm:$0xf]
        %v353 = vld [vmem:[%s327 + $0x58] sm:$0xf]
        %v354 = vld [vmem:[%s327 + $0x5c] sm:$0xf]
        %v355 = vld [vmem:[%s327 + $0x60] sm:$0xf]
        %v356 = vld [vmem:[%s327 + $0x64] sm:$0xf]
        %v357 = vld [vmem:[%s327 + $0x68] sm:$0xf]
        %v358 = vld [vmem:[%s327 + $0x6c] sm:$0xf]
        %v359 = vld [vmem:[%s327 + $0x70] sm:$0xf]
        %v360 = vld [vmem:[%s327 + $0x74] sm:$0xf]
        %v361 = vld [vmem:[%s327 + $0x78] sm:$0xf]
        %v362 = vld [vmem:[%s327 + $0x7c] sm:$0xf]
        %v363 = vld [vmem:[%s327 + $0x80] sm:$0xf]
        %v364 = vld [vmem:[%s327 + $0x84] sm:$0xf]
        %v365 = vld [vmem:[%s327 + $0x88] sm:$0xf]
        %v366 = vld [vmem:[%s327 + $0x8c] sm:$0xf]
        %v368 = vlaneseq
        %v369 = vshrl.u32 %v368, 7
        %v370 = vsub.s32 0, %v369
        %v371 = vrot.slane %v350, %v370
        %v389 = vunpack.c.l.b16 %v351
        %v390 = vunpack.c.l.b16 %v352
        %v391 = vunpack.c.l.b16 %v353
        %v392 = vunpack.c.l.b16 %v354
        %v393 = vunpack.c.l.b16 %v355
        %v394 = vunpack.c.l.b16 %v356
        %v395 = vunpack.c.l.b16 %v357
        %v396 = vunpack.c.l.b16 %v358
        %v397 = vunpack.c.l.b16 %v359
        %v398 = vunpack.c.l.b16 %v360
        %v399 = vunpack.c.l.b16 %v361
        %v400 = vunpack.c.l.b16 %v362
        %v401 = vunpack.c.l.b16 %v363
        %v402 = vunpack.c.l.b16 %v364
        %v403 = vunpack.c.l.b16 %v365
        %v404 = vunpack.c.l.b16 %v366
        %v405 = vpack.c.b16 %v390, %v389
        %v406 = vpack.c.b16 %v392, %v391
        %v407 = vpack.c.b16 %v394, %v393
        %v408 = vpack.c.b16 %v396, %v395
        %v409 = vpack.c.b16 %v398, %v397
        %v410 = vpack.c.b16 %v400, %v399
        %v411 = vpack.c.b16 %v402, %v401
        %v412 = vpack.c.b16 %v404, %v403
        %v437 = vunpack.c.l.b16 %v334
        %v438 = vunpack.c.l.b16 %v335
        %v439 = vunpack.c.l.b16 %v336
        %v440 = vunpack.c.l.b16 %v337
        %v441 = vunpack.c.l.b16 %v338
        %v442 = vunpack.c.l.b16 %v339
        %v443 = vunpack.c.l.b16 %v340
        %v444 = vunpack.c.l.b16 %v341
        %v445 = vunpack.c.l.b16 %v342
        %v446 = vunpack.c.l.b16 %v343
        %v447 = vunpack.c.l.b16 %v344
        %v448 = vunpack.c.l.b16 %v345
        %v449 = vunpack.c.l.b16 %v346
        %v450 = vunpack.c.l.b16 %v347
        %v451 = vunpack.c.l.b16 %v348
        %v452 = vunpack.c.l.b16 %v349
        %v453 = vpack.c.b16 %v438, %v437
        %v454 = vpack.c.b16 %v440, %v439
        %v455 = vpack.c.b16 %v442, %v441
        %v456 = vpack.c.b16 %v444, %v443
        %v457 = vpack.c.b16 %v446, %v445
        %v458 = vpack.c.b16 %v448, %v447
        %v459 = vpack.c.b16 %v450, %v449
        %v460 = vpack.c.b16 %v452, %v451
        %469 = vmatprep.subr.bf16.mxu0 0
        %470 = vmatpush1.bf16.msra.mxu0 %v460
        %471 = vmatprep.subr.bf16.mxu0 0
        %472 = vmatpush1.bf16.msra.mxu0 %v459
        %473 = vmatprep.subr.bf16.mxu0 0
        %474 = vmatpush1.bf16.msra.mxu0 %v458
        %475 = vmatprep.subr.bf16.mxu0 0
        %476 = vmatpush1.bf16.msra.mxu0 %v457
        %477 = vmatprep.subr.bf16.mxu0 0
        %478 = vmatpush1.bf16.msra.mxu0 %v456
        %479 = vmatprep.subr.bf16.mxu0 0
        %480 = vmatpush1.bf16.msra.mxu0 %v455
        %481 = vmatprep.subr.bf16.mxu0 0
        %482 = vmatpush1.bf16.msra.mxu0 %v454
        %483 = vmatprep.subr.bf16.mxu0 0
        %484 = vmatpush1.bf16.msra.mxu0 %v453
        %485 = vmatprep.subr.bf16.mxu0 0
        %486 = vmatpush2.bf16.msra.mxu0 0
        %487 = vmatprep.subr.bf16.mxu0 0
        %488 = vmatpush2.bf16.msra.mxu0 0
        %489 = vmatprep.subr.bf16.mxu0 0
        %490 = vmatpush2.bf16.msra.mxu0 0
        %491 = vmatprep.subr.bf16.mxu0 0
        %492 = vmatpush2.bf16.msra.mxu0 0
        %493 = vmatprep.subr.bf16.mxu0 0
        %494 = vmatpush2.bf16.msra.mxu0 0
        %495 = vmatprep.subr.bf16.mxu0 0
        %496 = vmatpush2.bf16.msra.mxu0 0
        %497 = vmatprep.subr.bf16.mxu0 0
        %498 = vmatpush2.bf16.msra.mxu0 0
        %499 = vmatprep.subr.bf16.mxu0 0
        %500 = vmatpush2.bf16.msra.mxu0 0
        %501 = vmatprep.mubr.bf16.mxu0 0
        %502 = vmatmul.mubr.bf16.gmra.mxu0 %v405
        %v503 = vpop.f32.mrf.mxu0
        %v504 = vadd.f32 %v371, %v503
        %v505 = vpop.f32.mrf.mxu0
        %v506 = vpop.f32.mrf.mxu0
        %v507 = vadd.f32 %v371, %v506
        %v508 = vpop.f32.mrf.mxu0
        %509 = vmatprep.mubr.bf16.mxu0 0
        %510 = vmatmul.mubr.bf16.gmra.mxu0 %v406
        %v511 = vpop.f32.mrf.mxu0
        %v512 = vadd.f32 %v371, %v511
        %v513 = vpop.f32.mrf.mxu0
        %v514 = vpop.f32.mrf.mxu0
        %v515 = vadd.f32 %v371, %v514
        %v516 = vpop.f32.mrf.mxu0
        %517 = vmatprep.mubr.bf16.mxu0 0
        %518 = vmatmul.mubr.bf16.gmra.mxu0 %v407
        %v519 = vpop.f32.mrf.mxu0
        %v520 = vadd.f32 %v371, %v519
        %v521 = vpop.f32.mrf.mxu0
        %v522 = vpop.f32.mrf.mxu0
        %v523 = vadd.f32 %v371, %v522
        %v524 = vpop.f32.mrf.mxu0
        %525 = vmatprep.mubr.bf16.mxu0 0
        %526 = vmatmul.mubr.bf16.gmra.mxu0 %v408
        %v527 = vpop.f32.mrf.mxu0
        %v528 = vadd.f32 %v371, %v527
        %v529 = vpop.f32.mrf.mxu0
        %v530 = vpop.f32.mrf.mxu0
        %v531 = vadd.f32 %v371, %v530
        %v532 = vpop.f32.mrf.mxu0
        %533 = vmatprep.mubr.bf16.mxu0 0
        %534 = vmatmul.mubr.bf16.gmra.mxu0 %v409
        %v535 = vpop.f32.mrf.mxu0
        %v536 = vadd.f32 %v371, %v535
        %v537 = vpop.f32.mrf.mxu0
        %v538 = vpop.f32.mrf.mxu0
        %v539 = vadd.f32 %v371, %v538
        %v540 = vpop.f32.mrf.mxu0
        %541 = vmatprep.mubr.bf16.mxu0 0
        %542 = vmatmul.mubr.bf16.gmra.mxu0 %v410
        %v543 = vpop.f32.mrf.mxu0
        %v544 = vadd.f32 %v371, %v543
        %v545 = vpop.f32.mrf.mxu0
        %v546 = vpop.f32.mrf.mxu0
        %v547 = vadd.f32 %v371, %v546
        %v548 = vpop.f32.mrf.mxu0
        %549 = vmatprep.mubr.bf16.mxu0 0
        %550 = vmatmul.mubr.bf16.gmra.mxu0 %v411
        %v551 = vpop.f32.mrf.mxu0
        %v552 = vadd.f32 %v371, %v551
        %v553 = vpop.f32.mrf.mxu0
        %v554 = vpop.f32.mrf.mxu0
        %v555 = vadd.f32 %v371, %v554
        %v556 = vpop.f32.mrf.mxu0
        %557 = vmatprep.mubr.bf16.mxu0 0
        %558 = vmatmul.mubr.bf16.gmra.mxu0 %v412
        %v559 = vpop.f32.mrf.mxu0
        %v560 = vadd.f32 %v371, %v559
        %v561 = vpop.f32.mrf.mxu0
        %v562 = vpop.f32.mrf.mxu0
        %v563 = vadd.f32 %v371, %v562
        %v564 = vpop.f32.mrf.mxu0
        %565 = vdwg.mxu0
        %v566 = vmax.f32 %v504, 0.0
        %v567 = vmax.f32 %v507, 0.0
        %v568 = vmax.f32 %v512, 0.0
        %v569 = vmax.f32 %v515, 0.0
        %v570 = vmax.f32 %v520, 0.0
        %v571 = vmax.f32 %v523, 0.0
        %v572 = vmax.f32 %v528, 0.0
        %v573 = vmax.f32 %v531, 0.0
        %v574 = vmax.f32 %v536, 0.0
        %v575 = vmax.f32 %v539, 0.0
        %v576 = vmax.f32 %v544, 0.0
        %v577 = vmax.f32 %v547, 0.0
        %v578 = vmax.f32 %v552, 0.0
        %v579 = vmax.f32 %v555, 0.0
        %v580 = vmax.f32 %v560, 0.0
        %v581 = vmax.f32 %v563, 0.0
        %v582 = vpack.c.bf16 %v567, %v566
        %v583 = vpack.c.bf16 %v569, %v568
        %v584 = vpack.c.bf16 %v571, %v570
        %v585 = vpack.c.bf16 %v573, %v572
        %v586 = vpack.c.bf16 %v575, %v574
        %v587 = vpack.c.bf16 %v577, %v576
        %v588 = vpack.c.bf16 %v579, %v578
        %v589 = vpack.c.bf16 %v581, %v580
        %v590 = vld [vmem:[#allocation9] sm:$0xf]
        %v591 = vld [vmem:[#allocation9 + $0x4] sm:$0xf]
        %v592 = vld [vmem:[#allocation9 + $0x8] sm:$0xf]
        %v593 = vld [vmem:[#allocation9 + $0xc] sm:$0xf]
        %v594 = vld [vmem:[#allocation9 + $0x10] sm:$0xf]
        %v595 = vld [vmem:[#allocation9 + $0x14] sm:$0xf]
        %v596 = vld [vmem:[#allocation9 + $0x18] sm:$0xf]
        %v597 = vld [vmem:[#allocation9 + $0x1c] sm:$0xf]
        %v598 = vld [vmem:[#allocation9 + $0x20] sm:$0xf]
        %v599 = vld [vmem:[#allocation9 + $0x24] sm:$0xf]
        %v600 = vld [vmem:[#allocation9 + $0x28] sm:$0xf]
        %v601 = vld [vmem:[#allocation9 + $0x2c] sm:$0xf]
        %v602 = vld [vmem:[#allocation9 + $0x30] sm:$0xf]
        %v603 = vld [vmem:[#allocation9 + $0x34] sm:$0xf]
        %v604 = vld [vmem:[#allocation9 + $0x38] sm:$0xf]
        %v605 = vld [vmem:[#allocation9 + $0x3c] sm:$0xf]
        %v622 = vunpack.c.l.b16 %v590
        %v623 = vunpack.c.l.b16 %v591
        %v624 = vunpack.c.l.b16 %v592
        %v625 = vunpack.c.l.b16 %v593
        %v626 = vunpack.c.l.b16 %v594
        %v627 = vunpack.c.l.b16 %v595
        %v628 = vunpack.c.l.b16 %v596
        %v629 = vunpack.c.l.b16 %v597
        %v630 = vunpack.c.l.b16 %v598
        %v631 = vunpack.c.l.b16 %v599
        %v632 = vunpack.c.l.b16 %v600
        %v633 = vunpack.c.l.b16 %v601
        %v634 = vunpack.c.l.b16 %v602
        %v635 = vunpack.c.l.b16 %v603
        %v636 = vunpack.c.l.b16 %v604
        %v637 = vunpack.c.l.b16 %v605
        %v638 = vpack.c.b16 %v623, %v622
        %v639 = vpack.c.b16 %v625, %v624
        %v640 = vpack.c.b16 %v627, %v626
        %v641 = vpack.c.b16 %v629, %v628
        %v642 = vpack.c.b16 %v631, %v630
        %v643 = vpack.c.b16 %v633, %v632
        %v644 = vpack.c.b16 %v635, %v634
        %v645 = vpack.c.b16 %v637, %v636
        %654 = vmatprep.subr.bf16.mxu0 0
        %655 = vmatpush1.bf16.msra.mxu0 %v645
        %656 = vmatprep.subr.bf16.mxu0 0
        %657 = vmatpush1.bf16.msra.mxu0 %v644
        %658 = vmatprep.subr.bf16.mxu0 0
        %659 = vmatpush1.bf16.msra.mxu0 %v643
        %660 = vmatprep.subr.bf16.mxu0 0
        %661 = vmatpush1.bf16.msra.mxu0 %v642
        %662 = vmatprep.subr.bf16.mxu0 0
        %663 = vmatpush1.bf16.msra.mxu0 %v641
        %664 = vmatprep.subr.bf16.mxu0 0
        %665 = vmatpush1.bf16.msra.mxu0 %v640
        %666 = vmatprep.subr.bf16.mxu0 0
        %667 = vmatpush1.bf16.msra.mxu0 %v639
        %668 = vmatprep.subr.bf16.mxu0 0
        %669 = vmatpush1.bf16.msra.mxu0 %v638
        %670 = vmatprep.subr.bf16.mxu0 0
        %671 = vmatpush2.bf16.msra.mxu0 0
        %672 = vmatprep.subr.bf16.mxu0 0
        %673 = vmatpush2.bf16.msra.mxu0 0
        %674 = vmatprep.subr.bf16.mxu0 0
        %675 = vmatpush2.bf16.msra.mxu0 0
        %676 = vmatprep.subr.bf16.mxu0 0
        %677 = vmatpush2.bf16.msra.mxu0 0
        %678 = vmatprep.subr.bf16.mxu0 0
        %679 = vmatpush2.bf16.msra.mxu0 0
        %680 = vmatprep.subr.bf16.mxu0 0
        %681 = vmatpush2.bf16.msra.mxu0 0
        %682 = vmatprep.subr.bf16.mxu0 0
        %683 = vmatpush2.bf16.msra.mxu0 0
        %684 = vmatprep.subr.bf16.mxu0 0
        %685 = vmatpush2.bf16.msra.mxu0 0
        %686 = vmatprep.mubr.bf16.mxu0 0
        %687 = vmatmul.mubr.bf16.gmra.mxu0 %v582
        %v688 = vpop.f32.mrf.mxu0
        %v689 = vpop.f32.mrf.mxu0
        %v690 = vpop.f32.mrf.mxu0
        %v691 = vadd.f32 0.0, %v690
        %v692 = vpop.f32.mrf.mxu0
        %693 = vmatprep.mubr.bf16.mxu0 0
        %694 = vmatmul.mubr.bf16.gmra.mxu0 %v583
        %v695 = vpop.f32.mrf.mxu0
        %v696 = vadd.f32 0.0, %v695
        %v697 = vpop.f32.mrf.mxu0
        %v698 = vpop.f32.mrf.mxu0
        %v699 = vpop.f32.mrf.mxu0
        %700 = vmatprep.mubr.bf16.mxu0 0
        %701 = vmatmul.mubr.bf16.gmra.mxu0 %v584
        %v702 = vpop.f32.mrf.mxu0
        %v703 = vpop.f32.mrf.mxu0
        %v704 = vpop.f32.mrf.mxu0
        %v705 = vadd.f32 0.0, %v704
        %v706 = vpop.f32.mrf.mxu0
        %707 = vmatprep.mubr.bf16.mxu0 0
        %708 = vmatmul.mubr.bf16.gmra.mxu0 %v585
        %v709 = vpop.f32.mrf.mxu0
        %v710 = vadd.f32 0.0, %v709
        %v711 = vpop.f32.mrf.mxu0
        %v712 = vpop.f32.mrf.mxu0
        %v713 = vpop.f32.mrf.mxu0
        %714 = vmatprep.mubr.bf16.mxu0 0
        %715 = vmatmul.mubr.bf16.gmra.mxu0 %v586
        %v716 = vpop.f32.mrf.mxu0
        %v717 = vpop.f32.mrf.mxu0
        %v718 = vpop.f32.mrf.mxu0
        %v719 = vadd.f32 0.0, %v718
        %v720 = vpop.f32.mrf.mxu0
        %721 = vmatprep.mubr.bf16.mxu0 0
        %722 = vmatmul.mubr.bf16.gmra.mxu0 %v587
        %v723 = vpop.f32.mrf.mxu0
        %v724 = vadd.f32 0.0, %v723
        %v725 = vpop.f32.mrf.mxu0
        %v726 = vpop.f32.mrf.mxu0
        %v727 = vpop.f32.mrf.mxu0
        %728 = vmatprep.mubr.bf16.mxu0 0
        %729 = vmatmul.mubr.bf16.gmra.mxu0 %v588
        %v730 = vpop.f32.mrf.mxu0
        %v731 = vpop.f32.mrf.mxu0
        %v732 = vpop.f32.mrf.mxu0
        %v733 = vadd.f32 0.0, %v732
        %v734 = vpop.f32.mrf.mxu0
        %735 = vmatprep.mubr.bf16.mxu0 0
        %736 = vmatmul.mubr.bf16.gmra.mxu0 %v589
        %v737 = vpop.f32.mrf.mxu0
        %v738 = vadd.f32 0.0, %v737
        %v739 = vpop.f32.mrf.mxu0
        %v740 = vpop.f32.mrf.mxu0
        %v741 = vpop.f32.mrf.mxu0
        %742 = vdwg.mxu0
        %v744 = vlaneseq
        %v745 = vshrl.u32 %v744, 7
        %v746 = vsub.s32 0, %v745
        %v747 = vrot.slane %v333, %v746
        %v749 = vadd.f32 %v747, %v691
        %v750 = vadd.f32 %v747, %v696
        %v751 = vadd.f32 %v747, %v705
        %v752 = vadd.f32 %v747, %v710
        %v753 = vadd.f32 %v747, %v719
        %v754 = vadd.f32 %v747, %v724
        %v755 = vadd.f32 %v747, %v733
        %v756 = vadd.f32 %v747, %v738
        %v757 = vld [vmem:[#allocation7] sm:$0xf]
        %v758 = vld [vmem:[#allocation7 + $0x4] sm:$0xf]
        %v759 = vld [vmem:[#allocation7 + $0x8] sm:$0xf]
        %v760 = vld [vmem:[#allocation7 + $0xc] sm:$0xf]
        %v761 = vld [vmem:[#allocation7 + $0x10] sm:$0xf]
        %v762 = vld [vmem:[#allocation7 + $0x14] sm:$0xf]
        %v763 = vld [vmem:[#allocation7 + $0x18] sm:$0xf]
        %v764 = vld [vmem:[#allocation7 + $0x1c] sm:$0xf]
        %v765 = vld [vmem:[#allocation7 + $0x20] sm:$0xf]
        %v766 = vld [vmem:[#allocation7 + $0x24] sm:$0xf]
        %v767 = vld [vmem:[#allocation7 + $0x28] sm:$0xf]
        %v768 = vld [vmem:[#allocation7 + $0x2c] sm:$0xf]
        %v769 = vld [vmem:[#allocation7 + $0x30] sm:$0xf]
        %v770 = vld [vmem:[#allocation7 + $0x34] sm:$0xf]
        %v771 = vld [vmem:[#allocation7 + $0x38] sm:$0xf]
        %v772 = vld [vmem:[#allocation7 + $0x3c] sm:$0xf]
        %s773 = scalar_lea.vmem [#allocation7], 64
        %v774 = vld [vmem:[%s773] sm:$0xf]
        %v775 = vld [vmem:[%s773 + $0x4] sm:$0xf]
        %v776 = vld [vmem:[%s773 + $0x8] sm:$0xf]
        %v777 = vld [vmem:[%s773 + $0xc] sm:$0xf]
        %v778 = vld [vmem:[%s773 + $0x10] sm:$0xf]
        %v779 = vld [vmem:[%s773 + $0x14] sm:$0xf]
        %v780 = vld [vmem:[%s773 + $0x18] sm:$0xf]
        %v781 = vld [vmem:[%s773 + $0x1c] sm:$0xf]
        %v782 = vld [vmem:[%s773 + $0x20] sm:$0xf]
        %v783 = vld [vmem:[%s773 + $0x24] sm:$0xf]
        %v784 = vld [vmem:[%s773 + $0x28] sm:$0xf]
        %v785 = vld [vmem:[%s773 + $0x2c] sm:$0xf]
        %v786 = vld [vmem:[%s773 + $0x30] sm:$0xf]
        %v787 = vld [vmem:[%s773 + $0x34] sm:$0xf]
        %v788 = vld [vmem:[%s773 + $0x38] sm:$0xf]
        %v789 = vld [vmem:[%s773 + $0x3c] sm:$0xf]
        %s790 = scalar_lea.vmem [#allocation7], 128
        %v791 = vld [vmem:[%s790] sm:$0xf]
        %v792 = vld [vmem:[%s790 + $0x4] sm:$0xf]
        %v793 = vld [vmem:[%s790 + $0x8] sm:$0xf]
        %v794 = vld [vmem:[%s790 + $0xc] sm:$0xf]
        %v795 = vld [vmem:[%s790 + $0x10] sm:$0xf]
        %v796 = vld [vmem:[%s790 + $0x14] sm:$0xf]
        %v797 = vld [vmem:[%s790 + $0x18] sm:$0xf]
        %v798 = vld [vmem:[%s790 + $0x1c] sm:$0xf]
        %v799 = vld [vmem:[%s790 + $0x20] sm:$0xf]
        %v800 = vld [vmem:[%s790 + $0x24] sm:$0xf]
        %v801 = vld [vmem:[%s790 + $0x28] sm:$0xf]
        %v802 = vld [vmem:[%s790 + $0x2c] sm:$0xf]
        %v803 = vld [vmem:[%s790 + $0x30] sm:$0xf]
        %v804 = vld [vmem:[%s790 + $0x34] sm:$0xf]
        %v805 = vld [vmem:[%s790 + $0x38] sm:$0xf]
        %v806 = vld [vmem:[%s790 + $0x3c] sm:$0xf]
        %s807 = scalar_lea.vmem [#allocation7], 192
        %v808 = vld [vmem:[%s807] sm:$0xf]
        %v809 = vld [vmem:[%s807 + $0x4] sm:$0xf]
        %v810 = vld [vmem:[%s807 + $0x8] sm:$0xf]
        %v811 = vld [vmem:[%s807 + $0xc] sm:$0xf]
        %v812 = vld [vmem:[%s807 + $0x10] sm:$0xf]
        %v813 = vld [vmem:[%s807 + $0x14] sm:$0xf]
        %v814 = vld [vmem:[%s807 + $0x18] sm:$0xf]
        %v815 = vld [vmem:[%s807 + $0x1c] sm:$0xf]
        %v816 = vld [vmem:[%s807 + $0x20] sm:$0xf]
        %v817 = vld [vmem:[%s807 + $0x24] sm:$0xf]
        %v818 = vld [vmem:[%s807 + $0x28] sm:$0xf]
        %v819 = vld [vmem:[%s807 + $0x2c] sm:$0xf]
        %v820 = vld [vmem:[%s807 + $0x30] sm:$0xf]
        %v821 = vld [vmem:[%s807 + $0x34] sm:$0xf]
        %v822 = vld [vmem:[%s807 + $0x38] sm:$0xf]
        %v823 = vld [vmem:[%s807 + $0x3c] sm:$0xf]
        %s824 = scalar_lea.vmem [#allocation7], 256
        %v825 = vld [vmem:[%s824] sm:$0xf]
        %v826 = vld [vmem:[%s824 + $0x4] sm:$0xf]
        %v827 = vld [vmem:[%s824 + $0x8] sm:$0xf]
        %v828 = vld [vmem:[%s824 + $0xc] sm:$0xf]
        %v829 = vld [vmem:[%s824 + $0x10] sm:$0xf]
        %v830 = vld [vmem:[%s824 + $0x14] sm:$0xf]
        %v831 = vld [vmem:[%s824 + $0x18] sm:$0xf]
        %v832 = vld [vmem:[%s824 + $0x1c] sm:$0xf]
        %v833 = vld [vmem:[%s824 + $0x20] sm:$0xf]
        %v834 = vld [vmem:[%s824 + $0x24] sm:$0xf]
        %v835 = vld [vmem:[%s824 + $0x28] sm:$0xf]
        %v836 = vld [vmem:[%s824 + $0x2c] sm:$0xf]
        %v837 = vld [vmem:[%s824 + $0x30] sm:$0xf]
        %v838 = vld [vmem:[%s824 + $0x34] sm:$0xf]
        %v839 = vld [vmem:[%s824 + $0x38] sm:$0xf]
        %v840 = vld [vmem:[%s824 + $0x3c] sm:$0xf]
        %s841 = scalar_lea.vmem [#allocation7], 320
        %v842 = vld [vmem:[%s841] sm:$0xf]
        %v843 = vld [vmem:[%s841 + $0x4] sm:$0xf]
        %v844 = vld [vmem:[%s841 + $0x8] sm:$0xf]
        %v845 = vld [vmem:[%s841 + $0xc] sm:$0xf]
        %v846 = vld [vmem:[%s841 + $0x10] sm:$0xf]
        %v847 = vld [vmem:[%s841 + $0x14] sm:$0xf]
        %v848 = vld [vmem:[%s841 + $0x18] sm:$0xf]
        %v849 = vld [vmem:[%s841 + $0x1c] sm:$0xf]
        %v850 = vld [vmem:[%s841 + $0x20] sm:$0xf]
        %v851 = vld [vmem:[%s841 + $0x24] sm:$0xf]
        %v852 = vld [vmem:[%s841 + $0x28] sm:$0xf]
        %v853 = vld [vmem:[%s841 + $0x2c] sm:$0xf]
        %v854 = vld [vmem:[%s841 + $0x30] sm:$0xf]
        %v855 = vld [vmem:[%s841 + $0x34] sm:$0xf]
        %v856 = vld [vmem:[%s841 + $0x38] sm:$0xf]
        %v857 = vld [vmem:[%s841 + $0x3c] sm:$0xf]
        %s858 = scalar_lea.vmem [#allocation7], 384
        %v859 = vld [vmem:[%s858] sm:$0xf]
        %v860 = vld [vmem:[%s858 + $0x4] sm:$0xf]
        %v861 = vld [vmem:[%s858 + $0x8] sm:$0xf]
        %v862 = vld [vmem:[%s858 + $0xc] sm:$0xf]
        %v863 = vld [vmem:[%s858 + $0x10] sm:$0xf]
        %v864 = vld [vmem:[%s858 + $0x14] sm:$0xf]
        %v865 = vld [vmem:[%s858 + $0x18] sm:$0xf]
        %v866 = vld [vmem:[%s858 + $0x1c] sm:$0xf]
        %v867 = vld [vmem:[%s858 + $0x20] sm:$0xf]
        %v868 = vld [vmem:[%s858 + $0x24] sm:$0xf]
        %v869 = vld [vmem:[%s858 + $0x28] sm:$0xf]
        %v870 = vld [vmem:[%s858 + $0x2c] sm:$0xf]
        %v871 = vld [vmem:[%s858 + $0x30] sm:$0xf]
        %v872 = vld [vmem:[%s858 + $0x34] sm:$0xf]
        %v873 = vld [vmem:[%s858 + $0x38] sm:$0xf]
        %v874 = vld [vmem:[%s858 + $0x3c] sm:$0xf]
        %s875 = scalar_lea.vmem [#allocation7], 448
        %v876 = vld [vmem:[%s875] sm:$0xf]
        %v877 = vld [vmem:[%s875 + $0x4] sm:$0xf]
        %v878 = vld [vmem:[%s875 + $0x8] sm:$0xf]
        %v879 = vld [vmem:[%s875 + $0xc] sm:$0xf]
        %v880 = vld [vmem:[%s875 + $0x10] sm:$0xf]
        %v881 = vld [vmem:[%s875 + $0x14] sm:$0xf]
        %v882 = vld [vmem:[%s875 + $0x18] sm:$0xf]
        %v883 = vld [vmem:[%s875 + $0x1c] sm:$0xf]
        %v884 = vld [vmem:[%s875 + $0x20] sm:$0xf]
        %v885 = vld [vmem:[%s875 + $0x24] sm:$0xf]
        %v886 = vld [vmem:[%s875 + $0x28] sm:$0xf]
        %v887 = vld [vmem:[%s875 + $0x2c] sm:$0xf]
        %v888 = vld [vmem:[%s875 + $0x30] sm:$0xf]
        %v889 = vld [vmem:[%s875 + $0x34] sm:$0xf]
        %v890 = vld [vmem:[%s875 + $0x38] sm:$0xf]
        %v891 = vld [vmem:[%s875 + $0x3c] sm:$0xf]
        %s892 = scalar_lea.vmem [#allocation7], 512
        %v893 = vld [vmem:[%s892] sm:$0xf]
        %v894 = vld [vmem:[%s892 + $0x4] sm:$0xf]
        %v895 = vld [vmem:[%s892 + $0x8] sm:$0xf]
        %v896 = vld [vmem:[%s892 + $0xc] sm:$0xf]
        %v897 = vld [vmem:[%s892 + $0x10] sm:$0xf]
        %v898 = vld [vmem:[%s892 + $0x14] sm:$0xf]
        %v899 = vld [vmem:[%s892 + $0x18] sm:$0xf]
        %v900 = vld [vmem:[%s892 + $0x1c] sm:$0xf]
        %v901 = vld [vmem:[%s892 + $0x20] sm:$0xf]
        %v902 = vld [vmem:[%s892 + $0x24] sm:$0xf]
        %v903 = vld [vmem:[%s892 + $0x28] sm:$0xf]
        %v904 = vld [vmem:[%s892 + $0x2c] sm:$0xf]
        %v905 = vld [vmem:[%s892 + $0x30] sm:$0xf]
        %v906 = vld [vmem:[%s892 + $0x34] sm:$0xf]
        %v907 = vld [vmem:[%s892 + $0x38] sm:$0xf]
        %v908 = vld [vmem:[%s892 + $0x3c] sm:$0xf]
        %s909 = scalar_lea.vmem %s4, 1
        %v910 = vld [vmem:[%s909] sm:$0x1]
        %v911 = vld [vmem:[%s327 + $0x2c] sm:$0x8]
        %v912 = vld [vmem:[%s327 + $0x30] sm:$0xf]
        %v913 = vld [vmem:[%s327 + $0x34] sm:$0xf]
        %v914 = vld [vmem:[%s327 + $0x38] sm:$0xf]
        %v915 = vld [vmem:[%s327 + $0x3c] sm:$0xf]
        %v916 = vld [vmem:[%s327 + $0x40] sm:$0xf]
        %v917 = vld [vmem:[%s327 + $0x44] sm:$0xf]
        %v918 = vld [vmem:[%s327 + $0x48] sm:$0xf]
        %v919 = vld [vmem:[%s327 + $0x4c] sm:$0xf]
        %v920 = vld [vmem:[%s327 + $0x50] sm:$0xf]
        %v921 = vld [vmem:[%s327 + $0x54] sm:$0xf]
        %v922 = vld [vmem:[%s327 + $0x58] sm:$0xf]
        %v923 = vld [vmem:[%s327 + $0x5c] sm:$0xf]
        %v924 = vld [vmem:[%s327 + $0x60] sm:$0xf]
        %v925 = vld [vmem:[%s327 + $0x64] sm:$0xf]
        %v926 = vld [vmem:[%s327 + $0x68] sm:$0xf]
        %v927 = vld [vmem:[%s327 + $0x6c] sm:$0x7]
        %v928 = vld [vmem:[%s327 + $0x6c] sm:$0xf]
        %v945 = vunpack.c.l.b16 %v912
        %v946 = vunpack.c.l.b16 %v913
        %v947 = vunpack.c.l.b16 %v914
        %v948 = vunpack.c.l.b16 %v915
        %v949 = vunpack.c.l.b16 %v916
        %v950 = vunpack.c.l.b16 %v917
        %v951 = vunpack.c.l.b16 %v918
        %v952 = vunpack.c.l.b16 %v919
        %v953 = vunpack.c.l.b16 %v920
        %v954 = vunpack.c.l.b16 %v921
        %v955 = vunpack.c.l.b16 %v922
        %v956 = vunpack.c.l.b16 %v923
        %v957 = vunpack.c.l.b16 %v924
        %v958 = vunpack.c.l.b16 %v925
        %v959 = vunpack.c.l.b16 %v926
        %v960 = vunpack.c.l.b16 %v928
        %v961 = vpack.c.b16 %v946, %v945
        %v962 = vpack.c.b16 %v948, %v947
        %v963 = vpack.c.b16 %v950, %v949
        %v964 = vpack.c.b16 %v952, %v951
        %v965 = vpack.c.b16 %v954, %v953
        %v966 = vpack.c.b16 %v956, %v955
        %v967 = vpack.c.b16 %v958, %v957
        %v968 = vpack.c.b16 %v960, %v959
        %v993 = vunpack.c.l.b16 %v774
        %v994 = vunpack.c.l.b16 %v775
        %v995 = vunpack.c.l.b16 %v776
        %v996 = vunpack.c.l.b16 %v777
        %v997 = vunpack.c.l.b16 %v778
        %v998 = vunpack.c.l.b16 %v779
        %v999 = vunpack.c.l.b16 %v780
        %v1000 = vunpack.c.l.b16 %v781
        %v1001 = vunpack.c.l.b16 %v782
        %v1002 = vunpack.c.l.b16 %v783
        %v1003 = vunpack.c.l.b16 %v784
        %v1004 = vunpack.c.l.b16 %v785
        %v1005 = vunpack.c.l.b16 %v786
        %v1006 = vunpack.c.l.b16 %v787
        %v1007 = vunpack.c.l.b16 %v788
        %v1008 = vunpack.c.l.b16 %v789
        %v1009 = vpack.c.b16 %v994, %v993
        %v1010 = vpack.c.b16 %v996, %v995
        %v1011 = vpack.c.b16 %v998, %v997
        %v1012 = vpack.c.b16 %v1000, %v999
        %v1013 = vpack.c.b16 %v1002, %v1001
        %v1014 = vpack.c.b16 %v1004, %v1003
        %v1015 = vpack.c.b16 %v1006, %v1005
        %v1016 = vpack.c.b16 %v1008, %v1007
        %1025 = vmatprep.subr.bf16.mxu0 0
        %1026 = vmatpush1.bf16.msra.mxu0 %v1016
        %1027 = vmatprep.subr.bf16.mxu0 0
        %1028 = vmatpush1.bf16.msra.mxu0 %v1015
        %1029 = vmatprep.subr.bf16.mxu0 0
        %1030 = vmatpush1.bf16.msra.mxu0 %v1014
        %1031 = vmatprep.subr.bf16.mxu0 0
        %1032 = vmatpush1.bf16.msra.mxu0 %v1013
        %1033 = vmatprep.subr.bf16.mxu0 0
        %1034 = vmatpush1.bf16.msra.mxu0 %v1012
        %1035 = vmatprep.subr.bf16.mxu0 0
        %1036 = vmatpush1.bf16.msra.mxu0 %v1011
        %1037 = vmatprep.subr.bf16.mxu0 0
        %1038 = vmatpush1.bf16.msra.mxu0 %v1010
        %1039 = vmatprep.subr.bf16.mxu0 0
        %1040 = vmatpush1.bf16.msra.mxu0 %v1009
        %1041 = vmatprep.subr.bf16.mxu0 0
        %1042 = vmatpush2.bf16.msra.mxu0 0
        %1043 = vmatprep.subr.bf16.mxu0 0
        %1044 = vmatpush2.bf16.msra.mxu0 0
        %1045 = vmatprep.subr.bf16.mxu0 0
        %1046 = vmatpush2.bf16.msra.mxu0 0
        %1047 = vmatprep.subr.bf16.mxu0 0
        %1048 = vmatpush2.bf16.msra.mxu0 0
        %1049 = vmatprep.subr.bf16.mxu0 0
        %1050 = vmatpush2.bf16.msra.mxu0 0
        %1051 = vmatprep.subr.bf16.mxu0 0
        %1052 = vmatpush2.bf16.msra.mxu0 0
        %1053 = vmatprep.subr.bf16.mxu0 0
        %1054 = vmatpush2.bf16.msra.mxu0 0
        %1055 = vmatprep.subr.bf16.mxu0 0
        %1056 = vmatpush2.bf16.msra.mxu0 0
        %1057 = vmatprep.mubr.bf16.mxu0 0
        %1058 = vmatmul.mubr.bf16.gmra.mxu0 %v961
        %v1059 = vpop.f32.mrf.mxu0
        %v1060 = vadd.f32 0.0, %v1059
        %v1061 = vpop.f32.mrf.mxu0
        %v1062 = vpop.f32.mrf.mxu0
        %v1063 = vadd.f32 0.0, %v1062
        %v1064 = vpop.f32.mrf.mxu0
        %1065 = vmatprep.mubr.bf16.mxu0 0
        %1066 = vmatmul.mubr.bf16.gmra.mxu0 %v962
        %v1067 = vpop.f32.mrf.mxu0
        %v1068 = vadd.f32 0.0, %v1067
        %v1069 = vpop.f32.mrf.mxu0
        %v1070 = vpop.f32.mrf.mxu0
        %v1071 = vadd.f32 0.0, %v1070
        %v1072 = vpop.f32.mrf.mxu0
        %1073 = vmatprep.mubr.bf16.mxu0 0
        %1074 = vmatmul.mubr.bf16.gmra.mxu0 %v963
        %v1075 = vpop.f32.mrf.mxu0
        %v1076 = vadd.f32 0.0, %v1075
        %v1077 = vpop.f32.mrf.mxu0
        %v1078 = vpop.f32.mrf.mxu0
        %v1079 = vadd.f32 0.0, %v1078
        %v1080 = vpop.f32.mrf.mxu0
        %1081 = vmatprep.mubr.bf16.mxu0 0
        %1082 = vmatmul.mubr.bf16.gmra.mxu0 %v964
        %v1083 = vpop.f32.mrf.mxu0
        %v1084 = vadd.f32 0.0, %v1083
        %v1085 = vpop.f32.mrf.mxu0
        %v1086 = vpop.f32.mrf.mxu0
        %v1087 = vadd.f32 0.0, %v1086
        %v1088 = vpop.f32.mrf.mxu0
        %1089 = vmatprep.mubr.bf16.mxu0 0
        %1090 = vmatmul.mubr.bf16.gmra.mxu0 %v965
        %v1091 = vpop.f32.mrf.mxu0
        %v1092 = vadd.f32 0.0, %v1091
        %v1093 = vpop.f32.mrf.mxu0
        %v1094 = vpop.f32.mrf.mxu0
        %v1095 = vadd.f32 0.0, %v1094
        %v1096 = vpop.f32.mrf.mxu0
        %1097 = vmatprep.mubr.bf16.mxu0 0
        %1098 = vmatmul.mubr.bf16.gmra.mxu0 %v966
        %v1099 = vpop.f32.mrf.mxu0
        %v1100 = vadd.f32 0.0, %v1099
        %v1101 = vpop.f32.mrf.mxu0
        %v1102 = vpop.f32.mrf.mxu0
        %v1103 = vadd.f32 0.0, %v1102
        %v1104 = vpop.f32.mrf.mxu0
        %1105 = vmatprep.mubr.bf16.mxu0 0
        %1106 = vmatmul.mubr.bf16.gmra.mxu0 %v967
        %v1107 = vpop.f32.mrf.mxu0
        %v1108 = vadd.f32 0.0, %v1107
        %v1109 = vpop.f32.mrf.mxu0
        %v1110 = vpop.f32.mrf.mxu0
        %v1111 = vadd.f32 0.0, %v1110
        %v1112 = vpop.f32.mrf.mxu0
        %1113 = vmatprep.mubr.bf16.mxu0 0
        %1114 = vmatmul.mubr.bf16.gmra.mxu0 %v968
        %v1115 = vpop.f32.mrf.mxu0
        %v1116 = vadd.f32 0.0, %v1115
        %v1117 = vpop.f32.mrf.mxu0
        %v1118 = vpop.f32.mrf.mxu0
        %v1119 = vadd.f32 0.0, %v1118
        %v1120 = vpop.f32.mrf.mxu0
        %1121 = vdwg.mxu0
        %v1124 = vunpack.c.l.b16 %v911
        %v1125 = vunpack.c.l.b16 %v927
        %v1126 = vpack.c.b16 %v945, %v1124
        %v1127 = vpack.c.b16 %v947, %v946
        %v1128 = vpack.c.b16 %v949, %v948
        %v1129 = vpack.c.b16 %v951, %v950
        %v1130 = vpack.c.b16 %v953, %v952
        %v1131 = vpack.c.b16 %v955, %v954
        %v1132 = vpack.c.b16 %v957, %v956
        %v1133 = vpack.c.b16 %v959, %v958
        %v1134 = vpack.c.b16 %v1125, %v1125
        %vm1135 = vcmask 1044480
        %v1136 = vrot.slane %v1126, 3
        %v1137 = vrot.slane %v1127, 3
        %v1138 = vsel %vm1135, %v1136, %v1137
        %v1139 = vrot.slane %v1128, 3
        %v1140 = vsel %vm1135, %v1137, %v1139
        %v1141 = vrot.slane %v1129, 3
        %v1142 = vsel %vm1135, %v1139, %v1141
        %v1143 = vrot.slane %v1130, 3
        %v1144 = vsel %vm1135, %v1141, %v1143
        %v1145 = vrot.slane %v1131, 3
        %v1146 = vsel %vm1135, %v1143, %v1145
        %v1147 = vrot.slane %v1132, 3
        %v1148 = vsel %vm1135, %v1145, %v1147
        %v1149 = vrot.slane %v1133, 3
        %v1150 = vsel %vm1135, %v1147, %v1149
        %v1151 = vrot.slane %v1134, 3
        %v1152 = vsel %vm1135, %v1149, %v1151
        %v1177 = vunpack.c.l.b16 %v757
        %v1178 = vunpack.c.l.b16 %v758
        %v1179 = vunpack.c.l.b16 %v759
        %v1180 = vunpack.c.l.b16 %v760
        %v1181 = vunpack.c.l.b16 %v761
        %v1182 = vunpack.c.l.b16 %v762
        %v1183 = vunpack.c.l.b16 %v763
        %v1184 = vunpack.c.l.b16 %v764
        %v1185 = vunpack.c.l.b16 %v765
        %v1186 = vunpack.c.l.b16 %v766
        %v1187 = vunpack.c.l.b16 %v767
        %v1188 = vunpack.c.l.b16 %v768
        %v1189 = vunpack.c.l.b16 %v769
        %v1190 = vunpack.c.l.b16 %v770
        %v1191 = vunpack.c.l.b16 %v771
        %v1192 = vunpack.c.l.b16 %v772
        %v1193 = vpack.c.b16 %v1178, %v1177
        %v1194 = vpack.c.b16 %v1180, %v1179
        %v1195 = vpack.c.b16 %v1182, %v1181
        %v1196 = vpack.c.b16 %v1184, %v1183
        %v1197 = vpack.c.b16 %v1186, %v1185
        %v1198 = vpack.c.b16 %v1188, %v1187
        %v1199 = vpack.c.b16 %v1190, %v1189
        %v1200 = vpack.c.b16 %v1192, %v1191
        %1209 = vmatprep.subr.bf16.mxu0 0
        %1210 = vmatpush1.bf16.msra.mxu0 %v1200
        %1211 = vmatprep.subr.bf16.mxu0 0
        %1212 = vmatpush1.bf16.msra.mxu0 %v1199
        %1213 = vmatprep.subr.bf16.mxu0 0
        %1214 = vmatpush1.bf16.msra.mxu0 %v1198
        %1215 = vmatprep.subr.bf16.mxu0 0
        %1216 = vmatpush1.bf16.msra.mxu0 %v1197
        %1217 = vmatprep.subr.bf16.mxu0 0
        %1218 = vmatpush1.bf16.msra.mxu0 %v1196
        %1219 = vmatprep.subr.bf16.mxu0 0
        %1220 = vmatpush1.bf16.msra.mxu0 %v1195
        %1221 = vmatprep.subr.bf16.mxu0 0
        %1222 = vmatpush1.bf16.msra.mxu0 %v1194
        %1223 = vmatprep.subr.bf16.mxu0 0
        %1224 = vmatpush1.bf16.msra.mxu0 %v1193
        %1225 = vmatprep.subr.bf16.mxu0 0
        %1226 = vmatpush2.bf16.msra.mxu0 0
        %1227 = vmatprep.subr.bf16.mxu0 0
        %1228 = vmatpush2.bf16.msra.mxu0 0
        %1229 = vmatprep.subr.bf16.mxu0 0
        %1230 = vmatpush2.bf16.msra.mxu0 0
        %1231 = vmatprep.subr.bf16.mxu0 0
        %1232 = vmatpush2.bf16.msra.mxu0 0
        %1233 = vmatprep.subr.bf16.mxu0 0
        %1234 = vmatpush2.bf16.msra.mxu0 0
        %1235 = vmatprep.subr.bf16.mxu0 0
        %1236 = vmatpush2.bf16.msra.mxu0 0
        %1237 = vmatprep.subr.bf16.mxu0 0
        %1238 = vmatpush2.bf16.msra.mxu0 0
        %1239 = vmatprep.subr.bf16.mxu0 0
        %1240 = vmatpush2.bf16.msra.mxu0 0
        %1241 = vmatprep.mubr.bf16.mxu0 0
        %1242 = vmatmul.mubr.bf16.gmra.mxu0 %v1138
        %v1243 = vpop.f32.mrf.mxu0
        %v1244 = vadd.f32 %v1060, %v1243
        %v1245 = vpop.f32.mrf.mxu0
        %v1246 = vpop.f32.mrf.mxu0
        %v1247 = vadd.f32 %v1063, %v1246
        %v1248 = vpop.f32.mrf.mxu0
        %1249 = vmatprep.mubr.bf16.mxu0 0
        %1250 = vmatmul.mubr.bf16.gmra.mxu0 %v1140
        %v1251 = vpop.f32.mrf.mxu0
        %v1252 = vadd.f32 %v1068, %v1251
        %v1253 = vpop.f32.mrf.mxu0
        %v1254 = vpop.f32.mrf.mxu0
        %v1255 = vadd.f32 %v1071, %v1254
        %v1256 = vpop.f32.mrf.mxu0
        %1257 = vmatprep.mubr.bf16.mxu0 0
        %1258 = vmatmul.mubr.bf16.gmra.mxu0 %v1142
        %v1259 = vpop.f32.mrf.mxu0
        %v1260 = vadd.f32 %v1076, %v1259
        %v1261 = vpop.f32.mrf.mxu0
        %v1262 = vpop.f32.mrf.mxu0
        %v1263 = vadd.f32 %v1079, %v1262
        %v1264 = vpop.f32.mrf.mxu0
        %1265 = vmatprep.mubr.bf16.mxu0 0
        %1266 = vmatmul.mubr.bf16.gmra.mxu0 %v1144
        %v1267 = vpop.f32.mrf.mxu0
        %v1268 = vadd.f32 %v1084, %v1267
        %v1269 = vpop.f32.mrf.mxu0
        %v1270 = vpop.f32.mrf.mxu0
        %v1271 = vadd.f32 %v1087, %v1270
        %v1272 = vpop.f32.mrf.mxu0
        %1273 = vmatprep.mubr.bf16.mxu0 0
        %1274 = vmatmul.mubr.bf16.gmra.mxu0 %v1146
        %v1275 = vpop.f32.mrf.mxu0
        %v1276 = vadd.f32 %v1092, %v1275
        %v1277 = vpop.f32.mrf.mxu0
        %v1278 = vpop.f32.mrf.mxu0
        %v1279 = vadd.f32 %v1095, %v1278
        %v1280 = vpop.f32.mrf.mxu0
        %1281 = vmatprep.mubr.bf16.mxu0 0
        %1282 = vmatmul.mubr.bf16.gmra.mxu0 %v1148
        %v1283 = vpop.f32.mrf.mxu0
        %v1284 = vadd.f32 %v1100, %v1283
        %v1285 = vpop.f32.mrf.mxu0
        %v1286 = vpop.f32.mrf.mxu0
        %v1287 = vadd.f32 %v1103, %v1286
        %v1288 = vpop.f32.mrf.mxu0
        %1289 = vmatprep.mubr.bf16.mxu0 0
        %1290 = vmatmul.mubr.bf16.gmra.mxu0 %v1150
        %v1291 = vpop.f32.mrf.mxu0
        %v1292 = vadd.f32 %v1108, %v1291
        %v1293 = vpop.f32.mrf.mxu0
        %v1294 = vpop.f32.mrf.mxu0
        %v1295 = vadd.f32 %v1111, %v1294
        %v1296 = vpop.f32.mrf.mxu0
        %1297 = vmatprep.mubr.bf16.mxu0 0
        %1298 = vmatmul.mubr.bf16.gmra.mxu0 %v1152
        %v1299 = vpop.f32.mrf.mxu0
        %v1300 = vadd.f32 %v1116, %v1299
        %v1301 = vpop.f32.mrf.mxu0
        %v1302 = vpop.f32.mrf.mxu0
        %v1303 = vadd.f32 %v1119, %v1302
        %v1304 = vpop.f32.mrf.mxu0
        %1305 = vdwg.mxu0
        %v1306 = vld [vmem:[%s327 + $0x30] sm:$0xe]
        %v1307 = vld [vmem:[%s327 + $0x34] sm:$0xf]
        %v1308 = vld [vmem:[%s327 + $0x38] sm:$0xf]
        %v1309 = vld [vmem:[%s327 + $0x3c] sm:$0xf]
        %v1310 = vld [vmem:[%s327 + $0x40] sm:$0xf]
        %v1311 = vld [vmem:[%s327 + $0x44] sm:$0xf]
        %v1312 = vld [vmem:[%s327 + $0x48] sm:$0xf]
        %v1313 = vld [vmem:[%s327 + $0x4c] sm:$0xf]
        %v1314 = vld [vmem:[%s327 + $0x50] sm:$0xf]
        %v1315 = vld [vmem:[%s327 + $0x54] sm:$0xf]
        %v1316 = vld [vmem:[%s327 + $0x58] sm:$0xf]
        %v1317 = vld [vmem:[%s327 + $0x5c] sm:$0xf]
        %v1318 = vld [vmem:[%s327 + $0x60] sm:$0xf]
        %v1319 = vld [vmem:[%s327 + $0x64] sm:$0xf]
        %v1320 = vld [vmem:[%s327 + $0x68] sm:$0xf]
        %v1321 = vld [vmem:[%s327 + $0x6c] sm:$0xf]
        %v1322 = vld [vmem:[%s327 + $0x70] sm:$0x1]
        %v1340 = vunpack.c.l.b16 %v1306
        %v1341 = vunpack.c.l.b16 %v1307
        %v1342 = vunpack.c.l.b16 %v1308
        %v1343 = vunpack.c.l.b16 %v1309
        %v1344 = vunpack.c.l.b16 %v1310
        %v1345 = vunpack.c.l.b16 %v1311
        %v1346 = vunpack.c.l.b16 %v1312
        %v1347 = vunpack.c.l.b16 %v1313
        %v1348 = vunpack.c.l.b16 %v1314
        %v1349 = vunpack.c.l.b16 %v1315
        %v1350 = vunpack.c.l.b16 %v1316
        %v1351 = vunpack.c.l.b16 %v1317
        %v1352 = vunpack.c.l.b16 %v1318
        %v1353 = vunpack.c.l.b16 %v1319
        %v1354 = vunpack.c.l.b16 %v1320
        %v1355 = vunpack.c.l.b16 %v1321
        %v1356 = vunpack.c.l.b16 %v1322
        %v1357 = vpack.c.b16 %v1341, %v1340
        %v1358 = vpack.c.b16 %v1343, %v1342
        %v1359 = vpack.c.b16 %v1345, %v1344
        %v1360 = vpack.c.b16 %v1347, %v1346
        %v1361 = vpack.c.b16 %v1349, %v1348
        %v1362 = vpack.c.b16 %v1351, %v1350
        %v1363 = vpack.c.b16 %v1353, %v1352
        %v1364 = vpack.c.b16 %v1355, %v1354
        %v1365 = vpack.c.b16 %v1356, %v1356
        %vm1366 = vcmask 1046528
        %v1367 = vrot.slane %v1357, 1
        %v1368 = vrot.slane %v1358, 1
        %v1369 = vsel %vm1366, %v1367, %v1368
        %v1370 = vrot.slane %v1359, 1
        %v1371 = vsel %vm1366, %v1368, %v1370
        %v1372 = vrot.slane %v1360, 1
        %v1373 = vsel %vm1366, %v1370, %v1372
        %v1374 = vrot.slane %v1361, 1
        %v1375 = vsel %vm1366, %v1372, %v1374
        %v1376 = vrot.slane %v1362, 1
        %v1377 = vsel %vm1366, %v1374, %v1376
        %v1378 = vrot.slane %v1363, 1
        %v1379 = vsel %vm1366, %v1376, %v1378
        %v1380 = vrot.slane %v1364, 1
        %v1381 = vsel %vm1366, %v1378, %v1380
        %v1382 = vrot.slane %v1365, 1
        %v1383 = vsel %vm1366, %v1380, %v1382
        %v1408 = vunpack.c.l.b16 %v791
        %v1409 = vunpack.c.l.b16 %v792
        %v1410 = vunpack.c.l.b16 %v793
        %v1411 = vunpack.c.l.b16 %v794
        %v1412 = vunpack.c.l.b16 %v795
        %v1413 = vunpack.c.l.b16 %v796
        %v1414 = vunpack.c.l.b16 %v797
        %v1415 = vunpack.c.l.b16 %v798
        %v1416 = vunpack.c.l.b16 %v799
        %v1417 = vunpack.c.l.b16 %v800
        %v1418 = vunpack.c.l.b16 %v801
        %v1419 = vunpack.c.l.b16 %v802
        %v1420 = vunpack.c.l.b16 %v803
        %v1421 = vunpack.c.l.b16 %v804
        %v1422 = vunpack.c.l.b16 %v805
        %v1423 = vunpack.c.l.b16 %v806
        %v1424 = vpack.c.b16 %v1409, %v1408
        %v1425 = vpack.c.b16 %v1411, %v1410
        %v1426 = vpack.c.b16 %v1413, %v1412
        %v1427 = vpack.c.b16 %v1415, %v1414
        %v1428 = vpack.c.b16 %v1417, %v1416
        %v1429 = vpack.c.b16 %v1419, %v1418
        %v1430 = vpack.c.b16 %v1421, %v1420
        %v1431 = vpack.c.b16 %v1423, %v1422
        %1440 = vmatprep.subr.bf16.mxu0 0
        %1441 = vmatpush1.bf16.msra.mxu0 %v1431
        %1442 = vmatprep.subr.bf16.mxu0 0
        %1443 = vmatpush1.bf16.msra.mxu0 %v1430
        %1444 = vmatprep.subr.bf16.mxu0 0
        %1445 = vmatpush1.bf16.msra.mxu0 %v1429
        %1446 = vmatprep.subr.bf16.mxu0 0
        %1447 = vmatpush1.bf16.msra.mxu0 %v1428
        %1448 = vmatprep.subr.bf16.mxu0 0
        %1449 = vmatpush1.bf16.msra.mxu0 %v1427
        %1450 = vmatprep.subr.bf16.mxu0 0
        %1451 = vmatpush1.bf16.msra.mxu0 %v1426
        %1452 = vmatprep.subr.bf16.mxu0 0
        %1453 = vmatpush1.bf16.msra.mxu0 %v1425
        %1454 = vmatprep.subr.bf16.mxu0 0
        %1455 = vmatpush1.bf16.msra.mxu0 %v1424
        %1456 = vmatprep.subr.bf16.mxu0 0
        %1457 = vmatpush2.bf16.msra.mxu0 0
        %1458 = vmatprep.subr.bf16.mxu0 0
        %1459 = vmatpush2.bf16.msra.mxu0 0
        %1460 = vmatprep.subr.bf16.mxu0 0
        %1461 = vmatpush2.bf16.msra.mxu0 0
        %1462 = vmatprep.subr.bf16.mxu0 0
        %1463 = vmatpush2.bf16.msra.mxu0 0
        %1464 = vmatprep.subr.bf16.mxu0 0
        %1465 = vmatpush2.bf16.msra.mxu0 0
        %1466 = vmatprep.subr.bf16.mxu0 0
        %1467 = vmatpush2.bf16.msra.mxu0 0
        %1468 = vmatprep.subr.bf16.mxu0 0
        %1469 = vmatpush2.bf16.msra.mxu0 0
        %1470 = vmatprep.subr.bf16.mxu0 0
        %1471 = vmatpush2.bf16.msra.mxu0 0
        %1472 = vmatprep.mubr.bf16.mxu0 0
        %1473 = vmatmul.mubr.bf16.gmra.mxu0 %v1369
        %v1474 = vpop.f32.mrf.mxu0
        %v1475 = vadd.f32 0.0, %v1474
        %v1476 = vpop.f32.mrf.mxu0
        %v1477 = vpop.f32.mrf.mxu0
        %v1478 = vadd.f32 0.0, %v1477
        %v1479 = vpop.f32.mrf.mxu0
        %1480 = vmatprep.mubr.bf16.mxu0 0
        %1481 = vmatmul.mubr.bf16.gmra.mxu0 %v1371
        %v1482 = vpop.f32.mrf.mxu0
        %v1483 = vadd.f32 0.0, %v1482
        %v1484 = vpop.f32.mrf.mxu0
        %v1485 = vpop.f32.mrf.mxu0
        %v1486 = vadd.f32 0.0, %v1485
        %v1487 = vpop.f32.mrf.mxu0
        %1488 = vmatprep.mubr.bf16.mxu0 0
        %1489 = vmatmul.mubr.bf16.gmra.mxu0 %v1373
        %v1490 = vpop.f32.mrf.mxu0
        %v1491 = vadd.f32 0.0, %v1490
        %v1492 = vpop.f32.mrf.mxu0
        %v1493 = vpop.f32.mrf.mxu0
        %v1494 = vadd.f32 0.0, %v1493
        %v1495 = vpop.f32.mrf.mxu0
        %1496 = vmatprep.mubr.bf16.mxu0 0
        %1497 = vmatmul.mubr.bf16.gmra.mxu0 %v1375
        %v1498 = vpop.f32.mrf.mxu0
        %v1499 = vadd.f32 0.0, %v1498
        %v1500 = vpop.f32.mrf.mxu0
        %v1501 = vpop.f32.mrf.mxu0
        %v1502 = vadd.f32 0.0, %v1501
        %v1503 = vpop.f32.mrf.mxu0
        %1504 = vmatprep.mubr.bf16.mxu0 0
        %1505 = vmatmul.mubr.bf16.gmra.mxu0 %v1377
        %v1506 = vpop.f32.mrf.mxu0
        %v1507 = vadd.f32 0.0, %v1506
        %v1508 = vpop.f32.mrf.mxu0
        %v1509 = vpop.f32.mrf.mxu0
        %v1510 = vadd.f32 0.0, %v1509
        %v1511 = vpop.f32.mrf.mxu0
        %1512 = vmatprep.mubr.bf16.mxu0 0
        %1513 = vmatmul.mubr.bf16.gmra.mxu0 %v1379
        %v1514 = vpop.f32.mrf.mxu0
        %v1515 = vadd.f32 0.0, %v1514
        %v1516 = vpop.f32.mrf.mxu0
        %v1517 = vpop.f32.mrf.mxu0
        %v1518 = vadd.f32 0.0, %v1517
        %v1519 = vpop.f32.mrf.mxu0
        %1520 = vmatprep.mubr.bf16.mxu0 0
        %1521 = vmatmul.mubr.bf16.gmra.mxu0 %v1381
        %v1522 = vpop.f32.mrf.mxu0
        %v1523 = vadd.f32 0.0, %v1522
        %v1524 = vpop.f32.mrf.mxu0
        %v1525 = vpop.f32.mrf.mxu0
        %v1526 = vadd.f32 0.0, %v1525
        %v1527 = vpop.f32.mrf.mxu0
        %1528 = vmatprep.mubr.bf16.mxu0 0
        %1529 = vmatmul.mubr.bf16.gmra.mxu0 %v1383
        %v1530 = vpop.f32.mrf.mxu0
        %v1531 = vadd.f32 0.0, %v1530
        %v1532 = vpop.f32.mrf.mxu0
        %v1533 = vpop.f32.mrf.mxu0
        %v1534 = vadd.f32 0.0, %v1533
        %v1535 = vpop.f32.mrf.mxu0
        %1536 = vdwg.mxu0
        %v1537 = vadd.f32 %v1244, %v1475
        %v1538 = vadd.f32 %v1247, %v1478
        %v1539 = vadd.f32 %v1252, %v1483
        %v1540 = vadd.f32 %v1255, %v1486
        %v1541 = vadd.f32 %v1260, %v1491
        %v1542 = vadd.f32 %v1263, %v1494
        %v1543 = vadd.f32 %v1268, %v1499
        %v1544 = vadd.f32 %v1271, %v1502
        %v1545 = vadd.f32 %v1276, %v1507
        %v1546 = vadd.f32 %v1279, %v1510
        %v1547 = vadd.f32 %v1284, %v1515
        %v1548 = vadd.f32 %v1287, %v1518
        %v1549 = vadd.f32 %v1292, %v1523
        %v1550 = vadd.f32 %v1295, %v1526
        %v1551 = vadd.f32 %v1300, %v1531
        %v1552 = vadd.f32 %v1303, %v1534
        %v1553 = vld [vmem:[%s327 + $0x4c] sm:$0x8]
        %v1554 = vld [vmem:[%s327 + $0x8c] sm:$0x7]
        %v1557 = vunpack.c.l.b16 %v1553
        %v1558 = vunpack.c.l.b16 %v1554
        %v1559 = vpack.c.b16 %v389, %v1557
        %v1560 = vpack.c.b16 %v391, %v390
        %v1561 = vpack.c.b16 %v393, %v392
        %v1562 = vpack.c.b16 %v395, %v394
        %v1563 = vpack.c.b16 %v397, %v396
        %v1564 = vpack.c.b16 %v399, %v398
        %v1565 = vpack.c.b16 %v401, %v400
        %v1566 = vpack.c.b16 %v403, %v402
        %v1567 = vpack.c.b16 %v1558, %v1558
        %v1568 = vrot.slane %v1559, 3
        %v1569 = vrot.slane %v1560, 3
        %v1570 = vsel %vm1135, %v1568, %v1569
        %v1571 = vrot.slane %v1561, 3
        %v1572 = vsel %vm1135, %v1569, %v1571
        %v1573 = vrot.slane %v1562, 3
        %v1574 = vsel %vm1135, %v1571, %v1573
        %v1575 = vrot.slane %v1563, 3
        %v1576 = vsel %vm1135, %v1573, %v1575
        %v1577 = vrot.slane %v1564, 3
        %v1578 = vsel %vm1135, %v1575, %v1577
        %v1579 = vrot.slane %v1565, 3
        %v1580 = vsel %vm1135, %v1577, %v1579
        %v1581 = vrot.slane %v1566, 3
        %v1582 = vsel %vm1135, %v1579, %v1581
        %v1583 = vrot.slane %v1567, 3
        %v1584 = vsel %vm1135, %v1581, %v1583
        %v1609 = vunpack.c.l.b16 %v808
        %v1610 = vunpack.c.l.b16 %v809
        %v1611 = vunpack.c.l.b16 %v810
        %v1612 = vunpack.c.l.b16 %v811
        %v1613 = vunpack.c.l.b16 %v812
        %v1614 = vunpack.c.l.b16 %v813
        %v1615 = vunpack.c.l.b16 %v814
        %v1616 = vunpack.c.l.b16 %v815
        %v1617 = vunpack.c.l.b16 %v816
        %v1618 = vunpack.c.l.b16 %v817
        %v1619 = vunpack.c.l.b16 %v818
        %v1620 = vunpack.c.l.b16 %v819
        %v1621 = vunpack.c.l.b16 %v820
        %v1622 = vunpack.c.l.b16 %v821
        %v1623 = vunpack.c.l.b16 %v822
        %v1624 = vunpack.c.l.b16 %v823
        %v1625 = vpack.c.b16 %v1610, %v1609
        %v1626 = vpack.c.b16 %v1612, %v1611
        %v1627 = vpack.c.b16 %v1614, %v1613
        %v1628 = vpack.c.b16 %v1616, %v1615
        %v1629 = vpack.c.b16 %v1618, %v1617
        %v1630 = vpack.c.b16 %v1620, %v1619
        %v1631 = vpack.c.b16 %v1622, %v1621
        %v1632 = vpack.c.b16 %v1624, %v1623
        %1641 = vmatprep.subr.bf16.mxu0 0
        %1642 = vmatpush1.bf16.msra.mxu0 %v1632
        %1643 = vmatprep.subr.bf16.mxu0 0
        %1644 = vmatpush1.bf16.msra.mxu0 %v1631
        %1645 = vmatprep.subr.bf16.mxu0 0
        %1646 = vmatpush1.bf16.msra.mxu0 %v1630
        %1647 = vmatprep.subr.bf16.mxu0 0
        %1648 = vmatpush1.bf16.msra.mxu0 %v1629
        %1649 = vmatprep.subr.bf16.mxu0 0
        %1650 = vmatpush1.bf16.msra.mxu0 %v1628
        %1651 = vmatprep.subr.bf16.mxu0 0
        %1652 = vmatpush1.bf16.msra.mxu0 %v1627
        %1653 = vmatprep.subr.bf16.mxu0 0
        %1654 = vmatpush1.bf16.msra.mxu0 %v1626
        %1655 = vmatprep.subr.bf16.mxu0 0
        %1656 = vmatpush1.bf16.msra.mxu0 %v1625
        %1657 = vmatprep.subr.bf16.mxu0 0
        %1658 = vmatpush2.bf16.msra.mxu0 0
        %1659 = vmatprep.subr.bf16.mxu0 0
        %1660 = vmatpush2.bf16.msra.mxu0 0
        %1661 = vmatprep.subr.bf16.mxu0 0
        %1662 = vmatpush2.bf16.msra.mxu0 0
        %1663 = vmatprep.subr.bf16.mxu0 0
        %1664 = vmatpush2.bf16.msra.mxu0 0
        %1665 = vmatprep.subr.bf16.mxu0 0
        %1666 = vmatpush2.bf16.msra.mxu0 0
        %1667 = vmatprep.subr.bf16.mxu0 0
        %1668 = vmatpush2.bf16.msra.mxu0 0
        %1669 = vmatprep.subr.bf16.mxu0 0
        %1670 = vmatpush2.bf16.msra.mxu0 0
        %1671 = vmatprep.subr.bf16.mxu0 0
        %1672 = vmatpush2.bf16.msra.mxu0 0
        %1673 = vmatprep.mubr.bf16.mxu0 0
        %1674 = vmatmul.mubr.bf16.gmra.mxu0 %v1570
        %v1675 = vpop.f32.mrf.mxu0
        %v1676 = vadd.f32 0.0, %v1675
        %v1677 = vpop.f32.mrf.mxu0
        %v1678 = vpop.f32.mrf.mxu0
        %v1679 = vadd.f32 0.0, %v1678
        %v1680 = vpop.f32.mrf.mxu0
        %1681 = vmatprep.mubr.bf16.mxu0 0
        %1682 = vmatmul.mubr.bf16.gmra.mxu0 %v1572
        %v1683 = vpop.f32.mrf.mxu0
        %v1684 = vadd.f32 0.0, %v1683
        %v1685 = vpop.f32.mrf.mxu0
        %v1686 = vpop.f32.mrf.mxu0
        %v1687 = vadd.f32 0.0, %v1686
        %v1688 = vpop.f32.mrf.mxu0
        %1689 = vmatprep.mubr.bf16.mxu0 0
        %1690 = vmatmul.mubr.bf16.gmra.mxu0 %v1574
        %v1691 = vpop.f32.mrf.mxu0
        %v1692 = vadd.f32 0.0, %v1691
        %v1693 = vpop.f32.mrf.mxu0
        %v1694 = vpop.f32.mrf.mxu0
        %v1695 = vadd.f32 0.0, %v1694
        %v1696 = vpop.f32.mrf.mxu0
        %1697 = vmatprep.mubr.bf16.mxu0 0
        %1698 = vmatmul.mubr.bf16.gmra.mxu0 %v1576
        %v1699 = vpop.f32.mrf.mxu0
        %v1700 = vadd.f32 0.0, %v1699
        %v1701 = vpop.f32.mrf.mxu0
        %v1702 = vpop.f32.mrf.mxu0
        %v1703 = vadd.f32 0.0, %v1702
        %v1704 = vpop.f32.mrf.mxu0
        %1705 = vmatprep.mubr.bf16.mxu0 0
        %1706 = vmatmul.mubr.bf16.gmra.mxu0 %v1578
        %v1707 = vpop.f32.mrf.mxu0
        %v1708 = vadd.f32 0.0, %v1707
        %v1709 = vpop.f32.mrf.mxu0
        %v1710 = vpop.f32.mrf.mxu0
        %v1711 = vadd.f32 0.0, %v1710
        %v1712 = vpop.f32.mrf.mxu0
        %1713 = vmatprep.mubr.bf16.mxu0 0
        %1714 = vmatmul.mubr.bf16.gmra.mxu0 %v1580
        %v1715 = vpop.f32.mrf.mxu0
        %v1716 = vadd.f32 0.0, %v1715
        %v1717 = vpop.f32.mrf.mxu0
        %v1718 = vpop.f32.mrf.mxu0
        %v1719 = vadd.f32 0.0, %v1718
        %v1720 = vpop.f32.mrf.mxu0
        %1721 = vmatprep.mubr.bf16.mxu0 0
        %1722 = vmatmul.mubr.bf16.gmra.mxu0 %v1582
        %v1723 = vpop.f32.mrf.mxu0
        %v1724 = vadd.f32 0.0, %v1723
        %v1725 = vpop.f32.mrf.mxu0
        %v1726 = vpop.f32.mrf.mxu0
        %v1727 = vadd.f32 0.0, %v1726
        %v1728 = vpop.f32.mrf.mxu0
        %1729 = vmatprep.mubr.bf16.mxu0 0
        %1730 = vmatmul.mubr.bf16.gmra.mxu0 %v1584
        %v1731 = vpop.f32.mrf.mxu0
        %v1732 = vadd.f32 0.0, %v1731
        %v1733 = vpop.f32.mrf.mxu0
        %v1734 = vpop.f32.mrf.mxu0
        %v1735 = vadd.f32 0.0, %v1734
        %v1736 = vpop.f32.mrf.mxu0
        %1737 = vdwg.mxu0
        %v1738 = vadd.f32 %v1537, %v1676
        %v1739 = vadd.f32 %v1538, %v1679
        %v1740 = vadd.f32 %v1539, %v1684
        %v1741 = vadd.f32 %v1540, %v1687
        %v1742 = vadd.f32 %v1541, %v1692
        %v1743 = vadd.f32 %v1542, %v1695
        %v1744 = vadd.f32 %v1543, %v1700
        %v1745 = vadd.f32 %v1544, %v1703
        %v1746 = vadd.f32 %v1545, %v1708
        %v1747 = vadd.f32 %v1546, %v1711
        %v1748 = vadd.f32 %v1547, %v1716
        %v1749 = vadd.f32 %v1548, %v1719
        %v1750 = vadd.f32 %v1549, %v1724
        %v1751 = vadd.f32 %v1550, %v1727
        %v1752 = vadd.f32 %v1551, %v1732
        %v1753 = vadd.f32 %v1552, %v1735
        %v1770 = vunpack.c.l.b16 %v825
        %v1771 = vunpack.c.l.b16 %v826
        %v1772 = vunpack.c.l.b16 %v827
        %v1773 = vunpack.c.l.b16 %v828
        %v1774 = vunpack.c.l.b16 %v829
        %v1775 = vunpack.c.l.b16 %v830
        %v1776 = vunpack.c.l.b16 %v831
        %v1777 = vunpack.c.l.b16 %v832
        %v1778 = vunpack.c.l.b16 %v833
        %v1779 = vunpack.c.l.b16 %v834
        %v1780 = vunpack.c.l.b16 %v835
        %v1781 = vunpack.c.l.b16 %v836
        %v1782 = vunpack.c.l.b16 %v837
        %v1783 = vunpack.c.l.b16 %v838
        %v1784 = vunpack.c.l.b16 %v839
        %v1785 = vunpack.c.l.b16 %v840
        %v1786 = vpack.c.b16 %v1771, %v1770
        %v1787 = vpack.c.b16 %v1773, %v1772
        %v1788 = vpack.c.b16 %v1775, %v1774
        %v1789 = vpack.c.b16 %v1777, %v1776
        %v1790 = vpack.c.b16 %v1779, %v1778
        %v1791 = vpack.c.b16 %v1781, %v1780
        %v1792 = vpack.c.b16 %v1783, %v1782
        %v1793 = vpack.c.b16 %v1785, %v1784
        %1802 = vmatprep.subr.bf16.mxu0 0
        %1803 = vmatpush1.bf16.msra.mxu0 %v1793
        %1804 = vmatprep.subr.bf16.mxu0 0
        %1805 = vmatpush1.bf16.msra.mxu0 %v1792
        %1806 = vmatprep.subr.bf16.mxu0 0
        %1807 = vmatpush1.bf16.msra.mxu0 %v1791
        %1808 = vmatprep.subr.bf16.mxu0 0
        %1809 = vmatpush1.bf16.msra.mxu0 %v1790
        %1810 = vmatprep.subr.bf16.mxu0 0
        %1811 = vmatpush1.bf16.msra.mxu0 %v1789
        %1812 = vmatprep.subr.bf16.mxu0 0
        %1813 = vmatpush1.bf16.msra.mxu0 %v1788
        %1814 = vmatprep.subr.bf16.mxu0 0
        %1815 = vmatpush1.bf16.msra.mxu0 %v1787
        %1816 = vmatprep.subr.bf16.mxu0 0
        %1817 = vmatpush1.bf16.msra.mxu0 %v1786
        %1818 = vmatprep.subr.bf16.mxu0 0
        %1819 = vmatpush2.bf16.msra.mxu0 0
        %1820 = vmatprep.subr.bf16.mxu0 0
        %1821 = vmatpush2.bf16.msra.mxu0 0
        %1822 = vmatprep.subr.bf16.mxu0 0
        %1823 = vmatpush2.bf16.msra.mxu0 0
        %1824 = vmatprep.subr.bf16.mxu0 0
        %1825 = vmatpush2.bf16.msra.mxu0 0
        %1826 = vmatprep.subr.bf16.mxu0 0
        %1827 = vmatpush2.bf16.msra.mxu0 0
        %1828 = vmatprep.subr.bf16.mxu0 0
        %1829 = vmatpush2.bf16.msra.mxu0 0
        %1830 = vmatprep.subr.bf16.mxu0 0
        %1831 = vmatpush2.bf16.msra.mxu0 0
        %1832 = vmatprep.subr.bf16.mxu0 0
        %1833 = vmatpush2.bf16.msra.mxu0 0
        %1834 = vmatprep.mubr.bf16.mxu0 0
        %1835 = vmatmul.mubr.bf16.gmra.mxu0 %v405
        %v1836 = vpop.f32.mrf.mxu0
        %v1837 = vadd.f32 0.0, %v1836
        %v1838 = vpop.f32.mrf.mxu0
        %v1839 = vpop.f32.mrf.mxu0
        %v1840 = vadd.f32 0.0, %v1839
        %v1841 = vpop.f32.mrf.mxu0
        %1842 = vmatprep.mubr.bf16.mxu0 0
        %1843 = vmatmul.mubr.bf16.gmra.mxu0 %v406
        %v1844 = vpop.f32.mrf.mxu0
        %v1845 = vadd.f32 0.0, %v1844
        %v1846 = vpop.f32.mrf.mxu0
        %v1847 = vpop.f32.mrf.mxu0
        %v1848 = vadd.f32 0.0, %v1847
        %v1849 = vpop.f32.mrf.mxu0
        %1850 = vmatprep.mubr.bf16.mxu0 0
        %1851 = vmatmul.mubr.bf16.gmra.mxu0 %v407
        %v1852 = vpop.f32.mrf.mxu0
        %v1853 = vadd.f32 0.0, %v1852
        %v1854 = vpop.f32.mrf.mxu0
        %v1855 = vpop.f32.mrf.mxu0
        %v1856 = vadd.f32 0.0, %v1855
        %v1857 = vpop.f32.mrf.mxu0
        %1858 = vmatprep.mubr.bf16.mxu0 0
        %1859 = vmatmul.mubr.bf16.gmra.mxu0 %v408
        %v1860 = vpop.f32.mrf.mxu0
        %v1861 = vadd.f32 0.0, %v1860
        %v1862 = vpop.f32.mrf.mxu0
        %v1863 = vpop.f32.mrf.mxu0
        %v1864 = vadd.f32 0.0, %v1863
        %v1865 = vpop.f32.mrf.mxu0
        %1866 = vmatprep.mubr.bf16.mxu0 0
        %1867 = vmatmul.mubr.bf16.gmra.mxu0 %v409
        %v1868 = vpop.f32.mrf.mxu0
        %v1869 = vadd.f32 0.0, %v1868
        %v1870 = vpop.f32.mrf.mxu0
        %v1871 = vpop.f32.mrf.mxu0
        %v1872 = vadd.f32 0.0, %v1871
        %v1873 = vpop.f32.mrf.mxu0
        %1874 = vmatprep.mubr.bf16.mxu0 0
        %1875 = vmatmul.mubr.bf16.gmra.mxu0 %v410
        %v1876 = vpop.f32.mrf.mxu0
        %v1877 = vadd.f32 0.0, %v1876
        %v1878 = vpop.f32.mrf.mxu0
        %v1879 = vpop.f32.mrf.mxu0
        %v1880 = vadd.f32 0.0, %v1879
        %v1881 = vpop.f32.mrf.mxu0
        %1882 = vmatprep.mubr.bf16.mxu0 0
        %1883 = vmatmul.mubr.bf16.gmra.mxu0 %v411
        %v1884 = vpop.f32.mrf.mxu0
        %v1885 = vadd.f32 0.0, %v1884
        %v1886 = vpop.f32.mrf.mxu0
        %v1887 = vpop.f32.mrf.mxu0
        %v1888 = vadd.f32 0.0, %v1887
        %v1889 = vpop.f32.mrf.mxu0
        %1890 = vmatprep.mubr.bf16.mxu0 0
        %1891 = vmatmul.mubr.bf16.gmra.mxu0 %v412
        %v1892 = vpop.f32.mrf.mxu0
        %v1893 = vadd.f32 0.0, %v1892
        %v1894 = vpop.f32.mrf.mxu0
        %v1895 = vpop.f32.mrf.mxu0
        %v1896 = vadd.f32 0.0, %v1895
        %v1897 = vpop.f32.mrf.mxu0
        %1898 = vdwg.mxu0
        %v1899 = vadd.f32 %v1738, %v1837
        %v1900 = vadd.f32 %v1739, %v1840
        %v1901 = vadd.f32 %v1740, %v1845
        %v1902 = vadd.f32 %v1741, %v1848
        %v1903 = vadd.f32 %v1742, %v1853
        %v1904 = vadd.f32 %v1743, %v1856
        %v1905 = vadd.f32 %v1744, %v1861
        %v1906 = vadd.f32 %v1745, %v1864
        %v1907 = vadd.f32 %v1746, %v1869
        %v1908 = vadd.f32 %v1747, %v1872
        %v1909 = vadd.f32 %v1748, %v1877
        %v1910 = vadd.f32 %v1749, %v1880
        %v1911 = vadd.f32 %v1750, %v1885
        %v1912 = vadd.f32 %v1751, %v1888
        %v1913 = vadd.f32 %v1752, %v1893
        %v1914 = vadd.f32 %v1753, %v1896
        %v1915 = vld [vmem:[%s327 + $0x50] sm:$0xe]
        %v1916 = vld [vmem:[%s327 + $0x54] sm:$0xf]
        %v1917 = vld [vmem:[%s327 + $0x58] sm:$0xf]
        %v1918 = vld [vmem:[%s327 + $0x5c] sm:$0xf]
        %v1919 = vld [vmem:[%s327 + $0x60] sm:$0xf]
        %v1920 = vld [vmem:[%s327 + $0x64] sm:$0xf]
        %v1921 = vld [vmem:[%s327 + $0x68] sm:$0xf]
        %v1922 = vld [vmem:[%s327 + $0x6c] sm:$0xf]
        %v1923 = vld [vmem:[%s327 + $0x70] sm:$0xf]
        %v1924 = vld [vmem:[%s327 + $0x74] sm:$0xf]
        %v1925 = vld [vmem:[%s327 + $0x78] sm:$0xf]
        %v1926 = vld [vmem:[%s327 + $0x7c] sm:$0xf]
        %v1927 = vld [vmem:[%s327 + $0x80] sm:$0xf]
        %v1928 = vld [vmem:[%s327 + $0x84] sm:$0xf]
        %v1929 = vld [vmem:[%s327 + $0x88] sm:$0xf]
        %v1930 = vld [vmem:[%s327 + $0x8c] sm:$0xf]
        %v1931 = vld [vmem:[%s327 + $0x90] sm:$0x1]
        %v1949 = vunpack.c.l.b16 %v1915
        %v1950 = vunpack.c.l.b16 %v1916
        %v1951 = vunpack.c.l.b16 %v1917
        %v1952 = vunpack.c.l.b16 %v1918
        %v1953 = vunpack.c.l.b16 %v1919
        %v1954 = vunpack.c.l.b16 %v1920
        %v1955 = vunpack.c.l.b16 %v1921
        %v1956 = vunpack.c.l.b16 %v1922
        %v1957 = vunpack.c.l.b16 %v1923
        %v1958 = vunpack.c.l.b16 %v1924
        %v1959 = vunpack.c.l.b16 %v1925
        %v1960 = vunpack.c.l.b16 %v1926
        %v1961 = vunpack.c.l.b16 %v1927
        %v1962 = vunpack.c.l.b16 %v1928
        %v1963 = vunpack.c.l.b16 %v1929
        %v1964 = vunpack.c.l.b16 %v1930
        %v1965 = vunpack.c.l.b16 %v1931
        %v1966 = vpack.c.b16 %v1950, %v1949
        %v1967 = vpack.c.b16 %v1952, %v1951
        %v1968 = vpack.c.b16 %v1954, %v1953
        %v1969 = vpack.c.b16 %v1956, %v1955
        %v1970 = vpack.c.b16 %v1958, %v1957
        %v1971 = vpack.c.b16 %v1960, %v1959
        %v1972 = vpack.c.b16 %v1962, %v1961
        %v1973 = vpack.c.b16 %v1964, %v1963
        %v1974 = vpack.c.b16 %v1965, %v1965
        %v1975 = vrot.slane %v1966, 1
        %v1976 = vrot.slane %v1967, 1
        %v1977 = vsel %vm1366, %v1975, %v1976
        %v1978 = vrot.slane %v1968, 1
        %v1979 = vsel %vm1366, %v1976, %v1978
        %v1980 = vrot.slane %v1969, 1
        %v1981 = vsel %vm1366, %v1978, %v1980
        %v1982 = vrot.slane %v1970, 1
        %v1983 = vsel %vm1366, %v1980, %v1982
        %v1984 = vrot.slane %v1971, 1
        %v1985 = vsel %vm1366, %v1982, %v1984
        %v1986 = vrot.slane %v1972, 1
        %v1987 = vsel %vm1366, %v1984, %v1986
        %v1988 = vrot.slane %v1973, 1
        %v1989 = vsel %vm1366, %v1986, %v1988
        %v1990 = vrot.slane %v1974, 1
        %v1991 = vsel %vm1366, %v1988, %v1990
        %v2016 = vunpack.c.l.b16 %v842
        %v2017 = vunpack.c.l.b16 %v843
        %v2018 = vunpack.c.l.b16 %v844
        %v2019 = vunpack.c.l.b16 %v845
        %v2020 = vunpack.c.l.b16 %v846
        %v2021 = vunpack.c.l.b16 %v847
        %v2022 = vunpack.c.l.b16 %v848
        %v2023 = vunpack.c.l.b16 %v849
        %v2024 = vunpack.c.l.b16 %v850
        %v2025 = vunpack.c.l.b16 %v851
        %v2026 = vunpack.c.l.b16 %v852
        %v2027 = vunpack.c.l.b16 %v853
        %v2028 = vunpack.c.l.b16 %v854
        %v2029 = vunpack.c.l.b16 %v855
        %v2030 = vunpack.c.l.b16 %v856
        %v2031 = vunpack.c.l.b16 %v857
        %v2032 = vpack.c.b16 %v2017, %v2016
        %v2033 = vpack.c.b16 %v2019, %v2018
        %v2034 = vpack.c.b16 %v2021, %v2020
        %v2035 = vpack.c.b16 %v2023, %v2022
        %v2036 = vpack.c.b16 %v2025, %v2024
        %v2037 = vpack.c.b16 %v2027, %v2026
        %v2038 = vpack.c.b16 %v2029, %v2028
        %v2039 = vpack.c.b16 %v2031, %v2030
        %2048 = vmatprep.subr.bf16.mxu0 0
        %2049 = vmatpush1.bf16.msra.mxu0 %v2039
        %2050 = vmatprep.subr.bf16.mxu0 0
        %2051 = vmatpush1.bf16.msra.mxu0 %v2038
        %2052 = vmatprep.subr.bf16.mxu0 0
        %2053 = vmatpush1.bf16.msra.mxu0 %v2037
        %2054 = vmatprep.subr.bf16.mxu0 0
        %2055 = vmatpush1.bf16.msra.mxu0 %v2036
        %2056 = vmatprep.subr.bf16.mxu0 0
        %2057 = vmatpush1.bf16.msra.mxu0 %v2035
        %2058 = vmatprep.subr.bf16.mxu0 0
        %2059 = vmatpush1.bf16.msra.mxu0 %v2034
        %2060 = vmatprep.subr.bf16.mxu0 0
        %2061 = vmatpush1.bf16.msra.mxu0 %v2033
        %2062 = vmatprep.subr.bf16.mxu0 0
        %2063 = vmatpush1.bf16.msra.mxu0 %v2032
        %2064 = vmatprep.subr.bf16.mxu0 0
        %2065 = vmatpush2.bf16.msra.mxu0 0
        %2066 = vmatprep.subr.bf16.mxu0 0
        %2067 = vmatpush2.bf16.msra.mxu0 0
        %2068 = vmatprep.subr.bf16.mxu0 0
        %2069 = vmatpush2.bf16.msra.mxu0 0
        %2070 = vmatprep.subr.bf16.mxu0 0
        %2071 = vmatpush2.bf16.msra.mxu0 0
        %2072 = vmatprep.subr.bf16.mxu0 0
        %2073 = vmatpush2.bf16.msra.mxu0 0
        %2074 = vmatprep.subr.bf16.mxu0 0
        %2075 = vmatpush2.bf16.msra.mxu0 0
        %2076 = vmatprep.subr.bf16.mxu0 0
        %2077 = vmatpush2.bf16.msra.mxu0 0
        %2078 = vmatprep.subr.bf16.mxu0 0
        %2079 = vmatpush2.bf16.msra.mxu0 0
        %2080 = vmatprep.mubr.bf16.mxu0 0
        %2081 = vmatmul.mubr.bf16.gmra.mxu0 %v1977
        %v2082 = vpop.f32.mrf.mxu0
        %v2083 = vadd.f32 0.0, %v2082
        %v2084 = vpop.f32.mrf.mxu0
        %v2085 = vpop.f32.mrf.mxu0
        %v2086 = vadd.f32 0.0, %v2085
        %v2087 = vpop.f32.mrf.mxu0
        %2088 = vmatprep.mubr.bf16.mxu0 0
        %2089 = vmatmul.mubr.bf16.gmra.mxu0 %v1979
        %v2090 = vpop.f32.mrf.mxu0
        %v2091 = vadd.f32 0.0, %v2090
        %v2092 = vpop.f32.mrf.mxu0
        %v2093 = vpop.f32.mrf.mxu0
        %v2094 = vadd.f32 0.0, %v2093
        %v2095 = vpop.f32.mrf.mxu0
        %2096 = vmatprep.mubr.bf16.mxu0 0
        %2097 = vmatmul.mubr.bf16.gmra.mxu0 %v1981
        %v2098 = vpop.f32.mrf.mxu0
        %v2099 = vadd.f32 0.0, %v2098
        %v2100 = vpop.f32.mrf.mxu0
        %v2101 = vpop.f32.mrf.mxu0
        %v2102 = vadd.f32 0.0, %v2101
        %v2103 = vpop.f32.mrf.mxu0
        %2104 = vmatprep.mubr.bf16.mxu0 0
        %2105 = vmatmul.mubr.bf16.gmra.mxu0 %v1983
        %v2106 = vpop.f32.mrf.mxu0
        %v2107 = vadd.f32 0.0, %v2106
        %v2108 = vpop.f32.mrf.mxu0
        %v2109 = vpop.f32.mrf.mxu0
        %v2110 = vadd.f32 0.0, %v2109
        %v2111 = vpop.f32.mrf.mxu0
        %2112 = vmatprep.mubr.bf16.mxu0 0
        %2113 = vmatmul.mubr.bf16.gmra.mxu0 %v1985
        %v2114 = vpop.f32.mrf.mxu0
        %v2115 = vadd.f32 0.0, %v2114
        %v2116 = vpop.f32.mrf.mxu0
        %v2117 = vpop.f32.mrf.mxu0
        %v2118 = vadd.f32 0.0, %v2117
        %v2119 = vpop.f32.mrf.mxu0
        %2120 = vmatprep.mubr.bf16.mxu0 0
        %2121 = vmatmul.mubr.bf16.gmra.mxu0 %v1987
        %v2122 = vpop.f32.mrf.mxu0
        %v2123 = vadd.f32 0.0, %v2122
        %v2124 = vpop.f32.mrf.mxu0
        %v2125 = vpop.f32.mrf.mxu0
        %v2126 = vadd.f32 0.0, %v2125
        %v2127 = vpop.f32.mrf.mxu0
        %2128 = vmatprep.mubr.bf16.mxu0 0
        %2129 = vmatmul.mubr.bf16.gmra.mxu0 %v1989
        %v2130 = vpop.f32.mrf.mxu0
        %v2131 = vadd.f32 0.0, %v2130
        %v2132 = vpop.f32.mrf.mxu0
        %v2133 = vpop.f32.mrf.mxu0
        %v2134 = vadd.f32 0.0, %v2133
        %v2135 = vpop.f32.mrf.mxu0
        %2136 = vmatprep.mubr.bf16.mxu0 0
        %2137 = vmatmul.mubr.bf16.gmra.mxu0 %v1991
        %v2138 = vpop.f32.mrf.mxu0
        %v2139 = vadd.f32 0.0, %v2138
        %v2140 = vpop.f32.mrf.mxu0
        %v2141 = vpop.f32.mrf.mxu0
        %v2142 = vadd.f32 0.0, %v2141
        %v2143 = vpop.f32.mrf.mxu0
        %2144 = vdwg.mxu0
        %v2145 = vadd.f32 %v1899, %v2083
        %v2146 = vadd.f32 %v1900, %v2086
        %v2147 = vadd.f32 %v1901, %v2091
        %v2148 = vadd.f32 %v1902, %v2094
        %v2149 = vadd.f32 %v1903, %v2099
        %v2150 = vadd.f32 %v1904, %v2102
        %v2151 = vadd.f32 %v1905, %v2107
        %v2152 = vadd.f32 %v1906, %v2110
        %v2153 = vadd.f32 %v1907, %v2115
        %v2154 = vadd.f32 %v1908, %v2118
        %v2155 = vadd.f32 %v1909, %v2123
        %v2156 = vadd.f32 %v1910, %v2126
        %v2157 = vadd.f32 %v1911, %v2131
        %v2158 = vadd.f32 %v1912, %v2134
        %v2159 = vadd.f32 %v1913, %v2139
        %v2160 = vadd.f32 %v1914, %v2142
        %v2161 = vld [vmem:[%s327 + $0x6c] sm:$0x8]
        %v2162 = vld [vmem:[%s327 + $0x70] sm:$0xf]
        %v2163 = vld [vmem:[%s327 + $0x74] sm:$0xf]
        %v2164 = vld [vmem:[%s327 + $0x78] sm:$0xf]
        %v2165 = vld [vmem:[%s327 + $0x7c] sm:$0xf]
        %v2166 = vld [vmem:[%s327 + $0x80] sm:$0xf]
        %v2167 = vld [vmem:[%s327 + $0x84] sm:$0xf]
        %v2168 = vld [vmem:[%s327 + $0x88] sm:$0xf]
        %v2169 = vld [vmem:[%s327 + $0x8c] sm:$0xf]
        %v2170 = vld [vmem:[%s327 + $0x90] sm:$0xf]
        %v2171 = vld [vmem:[%s327 + $0x94] sm:$0xf]
        %v2172 = vld [vmem:[%s327 + $0x98] sm:$0xf]
        %v2173 = vld [vmem:[%s327 + $0x9c] sm:$0xf]
        %v2174 = vld [vmem:[%s327 + $0xa0] sm:$0xf]
        %v2175 = vld [vmem:[%s327 + $0xa4] sm:$0xf]
        %v2176 = vld [vmem:[%s327 + $0xa8] sm:$0xf]
        %v2177 = vld [vmem:[%s327 + $0xac] sm:$0x7]
        %v2195 = vunpack.c.l.b16 %v2161
        %v2196 = vunpack.c.l.b16 %v2162
        %v2197 = vunpack.c.l.b16 %v2163
        %v2198 = vunpack.c.l.b16 %v2164
        %v2199 = vunpack.c.l.b16 %v2165
        %v2200 = vunpack.c.l.b16 %v2166
        %v2201 = vunpack.c.l.b16 %v2167
        %v2202 = vunpack.c.l.b16 %v2168
        %v2203 = vunpack.c.l.b16 %v2169
        %v2204 = vunpack.c.l.b16 %v2170
        %v2205 = vunpack.c.l.b16 %v2171
        %v2206 = vunpack.c.l.b16 %v2172
        %v2207 = vunpack.c.l.b16 %v2173
        %v2208 = vunpack.c.l.b16 %v2174
        %v2209 = vunpack.c.l.b16 %v2175
        %v2210 = vunpack.c.l.b16 %v2176
        %v2211 = vunpack.c.l.b16 %v2177
        %v2212 = vpack.c.b16 %v2196, %v2195
        %v2213 = vpack.c.b16 %v2198, %v2197
        %v2214 = vpack.c.b16 %v2200, %v2199
        %v2215 = vpack.c.b16 %v2202, %v2201
        %v2216 = vpack.c.b16 %v2204, %v2203
        %v2217 = vpack.c.b16 %v2206, %v2205
        %v2218 = vpack.c.b16 %v2208, %v2207
        %v2219 = vpack.c.b16 %v2210, %v2209
        %v2220 = vpack.c.b16 %v2211, %v2211
        %v2221 = vrot.slane %v2212, 3
        %v2222 = vrot.slane %v2213, 3
        %v2223 = vsel %vm1135, %v2221, %v2222
        %v2224 = vrot.slane %v2214, 3
        %v2225 = vsel %vm1135, %v2222, %v2224
        %v2226 = vrot.slane %v2215, 3
        %v2227 = vsel %vm1135, %v2224, %v2226
        %v2228 = vrot.slane %v2216, 3
        %v2229 = vsel %vm1135, %v2226, %v2228
        %v2230 = vrot.slane %v2217, 3
        %v2231 = vsel %vm1135, %v2228, %v2230
        %v2232 = vrot.slane %v2218, 3
        %v2233 = vsel %vm1135, %v2230, %v2232
        %v2234 = vrot.slane %v2219, 3
        %v2235 = vsel %vm1135, %v2232, %v2234
        %v2236 = vrot.slane %v2220, 3
        %v2237 = vsel %vm1135, %v2234, %v2236
        %v2262 = vunpack.c.l.b16 %v859
        %v2263 = vunpack.c.l.b16 %v860
        %v2264 = vunpack.c.l.b16 %v861
        %v2265 = vunpack.c.l.b16 %v862
        %v2266 = vunpack.c.l.b16 %v863
        %v2267 = vunpack.c.l.b16 %v864
        %v2268 = vunpack.c.l.b16 %v865
        %v2269 = vunpack.c.l.b16 %v866
        %v2270 = vunpack.c.l.b16 %v867
        %v2271 = vunpack.c.l.b16 %v868
        %v2272 = vunpack.c.l.b16 %v869
        %v2273 = vunpack.c.l.b16 %v870
        %v2274 = vunpack.c.l.b16 %v871
        %v2275 = vunpack.c.l.b16 %v872
        %v2276 = vunpack.c.l.b16 %v873
        %v2277 = vunpack.c.l.b16 %v874
        %v2278 = vpack.c.b16 %v2263, %v2262
        %v2279 = vpack.c.b16 %v2265, %v2264
        %v2280 = vpack.c.b16 %v2267, %v2266
        %v2281 = vpack.c.b16 %v2269, %v2268
        %v2282 = vpack.c.b16 %v2271, %v2270
        %v2283 = vpack.c.b16 %v2273, %v2272
        %v2284 = vpack.c.b16 %v2275, %v2274
        %v2285 = vpack.c.b16 %v2277, %v2276
        %2294 = vmatprep.subr.bf16.mxu0 0
        %2295 = vmatpush1.bf16.msra.mxu0 %v2285
        %2296 = vmatprep.subr.bf16.mxu0 0
        %2297 = vmatpush1.bf16.msra.mxu0 %v2284
        %2298 = vmatprep.subr.bf16.mxu0 0
        %2299 = vmatpush1.bf16.msra.mxu0 %v2283
        %2300 = vmatprep.subr.bf16.mxu0 0
        %2301 = vmatpush1.bf16.msra.mxu0 %v2282
        %2302 = vmatprep.subr.bf16.mxu0 0
        %2303 = vmatpush1.bf16.msra.mxu0 %v2281
        %2304 = vmatprep.subr.bf16.mxu0 0
        %2305 = vmatpush1.bf16.msra.mxu0 %v2280
        %2306 = vmatprep.subr.bf16.mxu0 0
        %2307 = vmatpush1.bf16.msra.mxu0 %v2279
        %2308 = vmatprep.subr.bf16.mxu0 0
        %2309 = vmatpush1.bf16.msra.mxu0 %v2278
        %2310 = vmatprep.subr.bf16.mxu0 0
        %2311 = vmatpush2.bf16.msra.mxu0 0
        %2312 = vmatprep.subr.bf16.mxu0 0
        %2313 = vmatpush2.bf16.msra.mxu0 0
        %2314 = vmatprep.subr.bf16.mxu0 0
        %2315 = vmatpush2.bf16.msra.mxu0 0
        %2316 = vmatprep.subr.bf16.mxu0 0
        %2317 = vmatpush2.bf16.msra.mxu0 0
        %2318 = vmatprep.subr.bf16.mxu0 0
        %2319 = vmatpush2.bf16.msra.mxu0 0
        %2320 = vmatprep.subr.bf16.mxu0 0
        %2321 = vmatpush2.bf16.msra.mxu0 0
        %2322 = vmatprep.subr.bf16.mxu0 0
        %2323 = vmatpush2.bf16.msra.mxu0 0
        %2324 = vmatprep.subr.bf16.mxu0 0
        %2325 = vmatpush2.bf16.msra.mxu0 0
        %2326 = vmatprep.mubr.bf16.mxu0 0
        %2327 = vmatmul.mubr.bf16.gmra.mxu0 %v2223
        %v2328 = vpop.f32.mrf.mxu0
        %v2329 = vadd.f32 0.0, %v2328
        %v2330 = vpop.f32.mrf.mxu0
        %v2331 = vpop.f32.mrf.mxu0
        %v2332 = vadd.f32 0.0, %v2331
        %v2333 = vpop.f32.mrf.mxu0
        %2334 = vmatprep.mubr.bf16.mxu0 0
        %2335 = vmatmul.mubr.bf16.gmra.mxu0 %v2225
        %v2336 = vpop.f32.mrf.mxu0
        %v2337 = vadd.f32 0.0, %v2336
        %v2338 = vpop.f32.mrf.mxu0
        %v2339 = vpop.f32.mrf.mxu0
        %v2340 = vadd.f32 0.0, %v2339
        %v2341 = vpop.f32.mrf.mxu0
        %2342 = vmatprep.mubr.bf16.mxu0 0
        %2343 = vmatmul.mubr.bf16.gmra.mxu0 %v2227
        %v2344 = vpop.f32.mrf.mxu0
        %v2345 = vadd.f32 0.0, %v2344
        %v2346 = vpop.f32.mrf.mxu0
        %v2347 = vpop.f32.mrf.mxu0
        %v2348 = vadd.f32 0.0, %v2347
        %v2349 = vpop.f32.mrf.mxu0
        %2350 = vmatprep.mubr.bf16.mxu0 0
        %2351 = vmatmul.mubr.bf16.gmra.mxu0 %v2229
        %v2352 = vpop.f32.mrf.mxu0
        %v2353 = vadd.f32 0.0, %v2352
        %v2354 = vpop.f32.mrf.mxu0
        %v2355 = vpop.f32.mrf.mxu0
        %v2356 = vadd.f32 0.0, %v2355
        %v2357 = vpop.f32.mrf.mxu0
        %2358 = vmatprep.mubr.bf16.mxu0 0
        %2359 = vmatmul.mubr.bf16.gmra.mxu0 %v2231
        %v2360 = vpop.f32.mrf.mxu0
        %v2361 = vadd.f32 0.0, %v2360
        %v2362 = vpop.f32.mrf.mxu0
        %v2363 = vpop.f32.mrf.mxu0
        %v2364 = vadd.f32 0.0, %v2363
        %v2365 = vpop.f32.mrf.mxu0
        %2366 = vmatprep.mubr.bf16.mxu0 0
        %2367 = vmatmul.mubr.bf16.gmra.mxu0 %v2233
        %v2368 = vpop.f32.mrf.mxu0
        %v2369 = vadd.f32 0.0, %v2368
        %v2370 = vpop.f32.mrf.mxu0
        %v2371 = vpop.f32.mrf.mxu0
        %v2372 = vadd.f32 0.0, %v2371
        %v2373 = vpop.f32.mrf.mxu0
        %2374 = vmatprep.mubr.bf16.mxu0 0
        %2375 = vmatmul.mubr.bf16.gmra.mxu0 %v2235
        %v2376 = vpop.f32.mrf.mxu0
        %v2377 = vadd.f32 0.0, %v2376
        %v2378 = vpop.f32.mrf.mxu0
        %v2379 = vpop.f32.mrf.mxu0
        %v2380 = vadd.f32 0.0, %v2379
        %v2381 = vpop.f32.mrf.mxu0
        %2382 = vmatprep.mubr.bf16.mxu0 0
        %2383 = vmatmul.mubr.bf16.gmra.mxu0 %v2237
        %v2384 = vpop.f32.mrf.mxu0
        %v2385 = vadd.f32 0.0, %v2384
        %v2386 = vpop.f32.mrf.mxu0
        %v2387 = vpop.f32.mrf.mxu0
        %v2388 = vadd.f32 0.0, %v2387
        %v2389 = vpop.f32.mrf.mxu0
        %2390 = vdwg.mxu0
        %v2391 = vadd.f32 %v2145, %v2329
        %v2392 = vadd.f32 %v2146, %v2332
        %v2393 = vadd.f32 %v2147, %v2337
        %v2394 = vadd.f32 %v2148, %v2340
        %v2395 = vadd.f32 %v2149, %v2345
        %v2396 = vadd.f32 %v2150, %v2348
        %v2397 = vadd.f32 %v2151, %v2353
        %v2398 = vadd.f32 %v2152, %v2356
        %v2399 = vadd.f32 %v2153, %v2361
        %v2400 = vadd.f32 %v2154, %v2364
        %v2401 = vadd.f32 %v2155, %v2369
        %v2402 = vadd.f32 %v2156, %v2372
        %v2403 = vadd.f32 %v2157, %v2377
        %v2404 = vadd.f32 %v2158, %v2380
        %v2405 = vadd.f32 %v2159, %v2385
        %v2406 = vadd.f32 %v2160, %v2388
        %v2407 = vld [vmem:[%s327 + $0xac] sm:$0xf]
        %v2409 = vunpack.c.l.b16 %v2407
        %v2410 = vpack.c.b16 %v2197, %v2196
        %v2411 = vpack.c.b16 %v2199, %v2198
        %v2412 = vpack.c.b16 %v2201, %v2200
        %v2413 = vpack.c.b16 %v2203, %v2202
        %v2414 = vpack.c.b16 %v2205, %v2204
        %v2415 = vpack.c.b16 %v2207, %v2206
        %v2416 = vpack.c.b16 %v2209, %v2208
        %v2417 = vpack.c.b16 %v2409, %v2210
        %v2442 = vunpack.c.l.b16 %v876
        %v2443 = vunpack.c.l.b16 %v877
        %v2444 = vunpack.c.l.b16 %v878
        %v2445 = vunpack.c.l.b16 %v879
        %v2446 = vunpack.c.l.b16 %v880
        %v2447 = vunpack.c.l.b16 %v881
        %v2448 = vunpack.c.l.b16 %v882
        %v2449 = vunpack.c.l.b16 %v883
        %v2450 = vunpack.c.l.b16 %v884
        %v2451 = vunpack.c.l.b16 %v885
        %v2452 = vunpack.c.l.b16 %v886
        %v2453 = vunpack.c.l.b16 %v887
        %v2454 = vunpack.c.l.b16 %v888
        %v2455 = vunpack.c.l.b16 %v889
        %v2456 = vunpack.c.l.b16 %v890
        %v2457 = vunpack.c.l.b16 %v891
        %v2458 = vpack.c.b16 %v2443, %v2442
        %v2459 = vpack.c.b16 %v2445, %v2444
        %v2460 = vpack.c.b16 %v2447, %v2446
        %v2461 = vpack.c.b16 %v2449, %v2448
        %v2462 = vpack.c.b16 %v2451, %v2450
        %v2463 = vpack.c.b16 %v2453, %v2452
        %v2464 = vpack.c.b16 %v2455, %v2454
        %v2465 = vpack.c.b16 %v2457, %v2456
        %2474 = vmatprep.subr.bf16.mxu0 0
        %2475 = vmatpush1.bf16.msra.mxu0 %v2465
        %2476 = vmatprep.subr.bf16.mxu0 0
        %2477 = vmatpush1.bf16.msra.mxu0 %v2464
        %2478 = vmatprep.subr.bf16.mxu0 0
        %2479 = vmatpush1.bf16.msra.mxu0 %v2463
        %2480 = vmatprep.subr.bf16.mxu0 0
        %2481 = vmatpush1.bf16.msra.mxu0 %v2462
        %2482 = vmatprep.subr.bf16.mxu0 0
        %2483 = vmatpush1.bf16.msra.mxu0 %v2461
        %2484 = vmatprep.subr.bf16.mxu0 0
        %2485 = vmatpush1.bf16.msra.mxu0 %v2460
        %2486 = vmatprep.subr.bf16.mxu0 0
        %2487 = vmatpush1.bf16.msra.mxu0 %v2459
        %2488 = vmatprep.subr.bf16.mxu0 0
        %2489 = vmatpush1.bf16.msra.mxu0 %v2458
        %2490 = vmatprep.subr.bf16.mxu0 0
        %2491 = vmatpush2.bf16.msra.mxu0 0
        %2492 = vmatprep.subr.bf16.mxu0 0
        %2493 = vmatpush2.bf16.msra.mxu0 0
        %2494 = vmatprep.subr.bf16.mxu0 0
        %2495 = vmatpush2.bf16.msra.mxu0 0
        %2496 = vmatprep.subr.bf16.mxu0 0
        %2497 = vmatpush2.bf16.msra.mxu0 0
        %2498 = vmatprep.subr.bf16.mxu0 0
        %2499 = vmatpush2.bf16.msra.mxu0 0
        %2500 = vmatprep.subr.bf16.mxu0 0
        %2501 = vmatpush2.bf16.msra.mxu0 0
        %2502 = vmatprep.subr.bf16.mxu0 0
        %2503 = vmatpush2.bf16.msra.mxu0 0
        %2504 = vmatprep.subr.bf16.mxu0 0
        %2505 = vmatpush2.bf16.msra.mxu0 0
        %2506 = vmatprep.mubr.bf16.mxu0 0
        %2507 = vmatmul.mubr.bf16.gmra.mxu0 %v2410
        %v2508 = vpop.f32.mrf.mxu0
        %v2509 = vadd.f32 0.0, %v2508
        %v2510 = vpop.f32.mrf.mxu0
        %v2511 = vpop.f32.mrf.mxu0
        %v2512 = vadd.f32 0.0, %v2511
        %v2513 = vpop.f32.mrf.mxu0
        %2514 = vmatprep.mubr.bf16.mxu0 0
        %2515 = vmatmul.mubr.bf16.gmra.mxu0 %v2411
        %v2516 = vpop.f32.mrf.mxu0
        %v2517 = vadd.f32 0.0, %v2516
        %v2518 = vpop.f32.mrf.mxu0
        %v2519 = vpop.f32.mrf.mxu0
        %v2520 = vadd.f32 0.0, %v2519
        %v2521 = vpop.f32.mrf.mxu0
        %2522 = vmatprep.mubr.bf16.mxu0 0
        %2523 = vmatmul.mubr.bf16.gmra.mxu0 %v2412
        %v2524 = vpop.f32.mrf.mxu0
        %v2525 = vadd.f32 0.0, %v2524
        %v2526 = vpop.f32.mrf.mxu0
        %v2527 = vpop.f32.mrf.mxu0
        %v2528 = vadd.f32 0.0, %v2527
        %v2529 = vpop.f32.mrf.mxu0
        %2530 = vmatprep.mubr.bf16.mxu0 0
        %2531 = vmatmul.mubr.bf16.gmra.mxu0 %v2413
        %v2532 = vpop.f32.mrf.mxu0
        %v2533 = vadd.f32 0.0, %v2532
        %v2534 = vpop.f32.mrf.mxu0
        %v2535 = vpop.f32.mrf.mxu0
        %v2536 = vadd.f32 0.0, %v2535
        %v2537 = vpop.f32.mrf.mxu0
        %2538 = vmatprep.mubr.bf16.mxu0 0
        %2539 = vmatmul.mubr.bf16.gmra.mxu0 %v2414
        %v2540 = vpop.f32.mrf.mxu0
        %v2541 = vadd.f32 0.0, %v2540
        %v2542 = vpop.f32.mrf.mxu0
        %v2543 = vpop.f32.mrf.mxu0
        %v2544 = vadd.f32 0.0, %v2543
        %v2545 = vpop.f32.mrf.mxu0
        %2546 = vmatprep.mubr.bf16.mxu0 0
        %2547 = vmatmul.mubr.bf16.gmra.mxu0 %v2415
        %v2548 = vpop.f32.mrf.mxu0
        %v2549 = vadd.f32 0.0, %v2548
        %v2550 = vpop.f32.mrf.mxu0
        %v2551 = vpop.f32.mrf.mxu0
        %v2552 = vadd.f32 0.0, %v2551
        %v2553 = vpop.f32.mrf.mxu0
        %2554 = vmatprep.mubr.bf16.mxu0 0
        %2555 = vmatmul.mubr.bf16.gmra.mxu0 %v2416
        %v2556 = vpop.f32.mrf.mxu0
        %v2557 = vadd.f32 0.0, %v2556
        %v2558 = vpop.f32.mrf.mxu0
        %v2559 = vpop.f32.mrf.mxu0
        %v2560 = vadd.f32 0.0, %v2559
        %v2561 = vpop.f32.mrf.mxu0
        %2562 = vmatprep.mubr.bf16.mxu0 0
        %2563 = vmatmul.mubr.bf16.gmra.mxu0 %v2417
        %v2564 = vpop.f32.mrf.mxu0
        %v2565 = vadd.f32 0.0, %v2564
        %v2566 = vpop.f32.mrf.mxu0
        %v2567 = vpop.f32.mrf.mxu0
        %v2568 = vadd.f32 0.0, %v2567
        %v2569 = vpop.f32.mrf.mxu0
        %2570 = vdwg.mxu0
        %v2571 = vadd.f32 %v2391, %v2509
        %v2572 = vadd.f32 %v2392, %v2512
        %v2573 = vadd.f32 %v2393, %v2517
        %v2574 = vadd.f32 %v2394, %v2520
        %v2575 = vadd.f32 %v2395, %v2525
        %v2576 = vadd.f32 %v2396, %v2528
        %v2577 = vadd.f32 %v2397, %v2533
        %v2578 = vadd.f32 %v2398, %v2536
        %v2579 = vadd.f32 %v2399, %v2541
        %v2580 = vadd.f32 %v2400, %v2544
        %v2581 = vadd.f32 %v2401, %v2549
        %v2582 = vadd.f32 %v2402, %v2552
        %v2583 = vadd.f32 %v2403, %v2557
        %v2584 = vadd.f32 %v2404, %v2560
        %v2585 = vadd.f32 %v2405, %v2565
        %v2586 = vadd.f32 %v2406, %v2568
        %v2587 = vld [vmem:[%s327 + $0x70] sm:$0xe]
        %v2588 = vld [vmem:[%s327 + $0x74] sm:$0xf]
        %v2589 = vld [vmem:[%s327 + $0x78] sm:$0xf]
        %v2590 = vld [vmem:[%s327 + $0x7c] sm:$0xf]
        %v2591 = vld [vmem:[%s327 + $0x80] sm:$0xf]
        %v2592 = vld [vmem:[%s327 + $0x84] sm:$0xf]
        %v2593 = vld [vmem:[%s327 + $0x88] sm:$0xf]
        %v2594 = vld [vmem:[%s327 + $0x8c] sm:$0xf]
        %v2595 = vld [vmem:[%s327 + $0x90] sm:$0xf]
        %v2596 = vld [vmem:[%s327 + $0x94] sm:$0xf]
        %v2597 = vld [vmem:[%s327 + $0x98] sm:$0xf]
        %v2598 = vld [vmem:[%s327 + $0x9c] sm:$0xf]
        %v2599 = vld [vmem:[%s327 + $0xa0] sm:$0xf]
        %v2600 = vld [vmem:[%s327 + $0xa4] sm:$0xf]
        %v2601 = vld [vmem:[%s327 + $0xa8] sm:$0xf]
        %v2602 = vld [vmem:[%s327 + $0xac] sm:$0xf]
        %v2603 = vld [vmem:[%s327 + $0xb0] sm:$0x1]
        %v2621 = vunpack.c.l.b16 %v2587
        %v2622 = vunpack.c.l.b16 %v2588
        %v2623 = vunpack.c.l.b16 %v2589
        %v2624 = vunpack.c.l.b16 %v2590
        %v2625 = vunpack.c.l.b16 %v2591
        %v2626 = vunpack.c.l.b16 %v2592
        %v2627 = vunpack.c.l.b16 %v2593
        %v2628 = vunpack.c.l.b16 %v2594
        %v2629 = vunpack.c.l.b16 %v2595
        %v2630 = vunpack.c.l.b16 %v2596
        %v2631 = vunpack.c.l.b16 %v2597
        %v2632 = vunpack.c.l.b16 %v2598
        %v2633 = vunpack.c.l.b16 %v2599
        %v2634 = vunpack.c.l.b16 %v2600
        %v2635 = vunpack.c.l.b16 %v2601
        %v2636 = vunpack.c.l.b16 %v2602
        %v2637 = vunpack.c.l.b16 %v2603
        %v2638 = vpack.c.b16 %v2622, %v2621
        %v2639 = vpack.c.b16 %v2624, %v2623
        %v2640 = vpack.c.b16 %v2626, %v2625
        %v2641 = vpack.c.b16 %v2628, %v2627
        %v2642 = vpack.c.b16 %v2630, %v2629
        %v2643 = vpack.c.b16 %v2632, %v2631
        %v2644 = vpack.c.b16 %v2634, %v2633
        %v2645 = vpack.c.b16 %v2636, %v2635
        %v2646 = vpack.c.b16 %v2637, %v2637
        %v2647 = vrot.slane %v2638, 1
        %v2648 = vrot.slane %v2639, 1
        %v2649 = vsel %vm1366, %v2647, %v2648
        %v2650 = vrot.slane %v2640, 1
        %v2651 = vsel %vm1366, %v2648, %v2650
        %v2652 = vrot.slane %v2641, 1
        %v2653 = vsel %vm1366, %v2650, %v2652
        %v2654 = vrot.slane %v2642, 1
        %v2655 = vsel %vm1366, %v2652, %v2654
        %v2656 = vrot.slane %v2643, 1
        %v2657 = vsel %vm1366, %v2654, %v2656
        %v2658 = vrot.slane %v2644, 1
        %v2659 = vsel %vm1366, %v2656, %v2658
        %v2660 = vrot.slane %v2645, 1
        %v2661 = vsel %vm1366, %v2658, %v2660
        %v2662 = vrot.slane %v2646, 1
        %v2663 = vsel %vm1366, %v2660, %v2662
        %v2688 = vunpack.c.l.b16 %v893
        %v2689 = vunpack.c.l.b16 %v894
        %v2690 = vunpack.c.l.b16 %v895
        %v2691 = vunpack.c.l.b16 %v896
        %v2692 = vunpack.c.l.b16 %v897
        %v2693 = vunpack.c.l.b16 %v898
        %v2694 = vunpack.c.l.b16 %v899
        %v2695 = vunpack.c.l.b16 %v900
        %v2696 = vunpack.c.l.b16 %v901
        %v2697 = vunpack.c.l.b16 %v902
        %v2698 = vunpack.c.l.b16 %v903
        %v2699 = vunpack.c.l.b16 %v904
        %v2700 = vunpack.c.l.b16 %v905
        %v2701 = vunpack.c.l.b16 %v906
        %v2702 = vunpack.c.l.b16 %v907
        %v2703 = vunpack.c.l.b16 %v908
        %v2704 = vpack.c.b16 %v2689, %v2688
        %v2705 = vpack.c.b16 %v2691, %v2690
        %v2706 = vpack.c.b16 %v2693, %v2692
        %v2707 = vpack.c.b16 %v2695, %v2694
        %v2708 = vpack.c.b16 %v2697, %v2696
        %v2709 = vpack.c.b16 %v2699, %v2698
        %v2710 = vpack.c.b16 %v2701, %v2700
        %v2711 = vpack.c.b16 %v2703, %v2702
        %2720 = vmatprep.subr.bf16.mxu0 0
        %2721 = vmatpush1.bf16.msra.mxu0 %v2711
        %2722 = vmatprep.subr.bf16.mxu0 0
        %2723 = vmatpush1.bf16.msra.mxu0 %v2710
        %2724 = vmatprep.subr.bf16.mxu0 0
        %2725 = vmatpush1.bf16.msra.mxu0 %v2709
        %2726 = vmatprep.subr.bf16.mxu0 0
        %2727 = vmatpush1.bf16.msra.mxu0 %v2708
        %2728 = vmatprep.subr.bf16.mxu0 0
        %2729 = vmatpush1.bf16.msra.mxu0 %v2707
        %2730 = vmatprep.subr.bf16.mxu0 0
        %2731 = vmatpush1.bf16.msra.mxu0 %v2706
        %2732 = vmatprep.subr.bf16.mxu0 0
        %2733 = vmatpush1.bf16.msra.mxu0 %v2705
        %2734 = vmatprep.subr.bf16.mxu0 0
        %2735 = vmatpush1.bf16.msra.mxu0 %v2704
        %2736 = vmatprep.subr.bf16.mxu0 0
        %2737 = vmatpush2.bf16.msra.mxu0 0
        %2738 = vmatprep.subr.bf16.mxu0 0
        %2739 = vmatpush2.bf16.msra.mxu0 0
        %2740 = vmatprep.subr.bf16.mxu0 0
        %2741 = vmatpush2.bf16.msra.mxu0 0
        %2742 = vmatprep.subr.bf16.mxu0 0
        %2743 = vmatpush2.bf16.msra.mxu0 0
        %2744 = vmatprep.subr.bf16.mxu0 0
        %2745 = vmatpush2.bf16.msra.mxu0 0
        %2746 = vmatprep.subr.bf16.mxu0 0
        %2747 = vmatpush2.bf16.msra.mxu0 0
        %2748 = vmatprep.subr.bf16.mxu0 0
        %2749 = vmatpush2.bf16.msra.mxu0 0
        %2750 = vmatprep.subr.bf16.mxu0 0
        %2751 = vmatpush2.bf16.msra.mxu0 0
        %2752 = vmatprep.mubr.bf16.mxu0 0
        %2753 = vmatmul.mubr.bf16.gmra.mxu0 %v2649
        %v2754 = vpop.f32.mrf.mxu0
        %v2755 = vadd.f32 0.0, %v2754
        %v2756 = vpop.f32.mrf.mxu0
        %v2757 = vpop.f32.mrf.mxu0
        %v2758 = vadd.f32 0.0, %v2757
        %v2759 = vpop.f32.mrf.mxu0
        %2760 = vmatprep.mubr.bf16.mxu0 0
        %2761 = vmatmul.mubr.bf16.gmra.mxu0 %v2651
        %v2762 = vpop.f32.mrf.mxu0
        %v2763 = vadd.f32 0.0, %v2762
        %v2764 = vpop.f32.mrf.mxu0
        %v2765 = vpop.f32.mrf.mxu0
        %v2766 = vadd.f32 0.0, %v2765
        %v2767 = vpop.f32.mrf.mxu0
        %2768 = vmatprep.mubr.bf16.mxu0 0
        %2769 = vmatmul.mubr.bf16.gmra.mxu0 %v2653
        %v2770 = vpop.f32.mrf.mxu0
        %v2771 = vadd.f32 0.0, %v2770
        %v2772 = vpop.f32.mrf.mxu0
        %v2773 = vpop.f32.mrf.mxu0
        %v2774 = vadd.f32 0.0, %v2773
        %v2775 = vpop.f32.mrf.mxu0
        %2776 = vmatprep.mubr.bf16.mxu0 0
        %2777 = vmatmul.mubr.bf16.gmra.mxu0 %v2655
        %v2778 = vpop.f32.mrf.mxu0
        %v2779 = vadd.f32 0.0, %v2778
        %v2780 = vpop.f32.mrf.mxu0
        %v2781 = vpop.f32.mrf.mxu0
        %v2782 = vadd.f32 0.0, %v2781
        %v2783 = vpop.f32.mrf.mxu0
        %2784 = vmatprep.mubr.bf16.mxu0 0
        %2785 = vmatmul.mubr.bf16.gmra.mxu0 %v2657
        %v2786 = vpop.f32.mrf.mxu0
        %v2787 = vadd.f32 0.0, %v2786
        %v2788 = vpop.f32.mrf.mxu0
        %v2789 = vpop.f32.mrf.mxu0
        %v2790 = vadd.f32 0.0, %v2789
        %v2791 = vpop.f32.mrf.mxu0
        %2792 = vmatprep.mubr.bf16.mxu0 0
        %2793 = vmatmul.mubr.bf16.gmra.mxu0 %v2659
        %v2794 = vpop.f32.mrf.mxu0
        %v2795 = vadd.f32 0.0, %v2794
        %v2796 = vpop.f32.mrf.mxu0
        %v2797 = vpop.f32.mrf.mxu0
        %v2798 = vadd.f32 0.0, %v2797
        %v2799 = vpop.f32.mrf.mxu0
        %2800 = vmatprep.mubr.bf16.mxu0 0
        %2801 = vmatmul.mubr.bf16.gmra.mxu0 %v2661
        %v2802 = vpop.f32.mrf.mxu0
        %v2803 = vadd.f32 0.0, %v2802
        %v2804 = vpop.f32.mrf.mxu0
        %v2805 = vpop.f32.mrf.mxu0
        %v2806 = vadd.f32 0.0, %v2805
        %v2807 = vpop.f32.mrf.mxu0
        %2808 = vmatprep.mubr.bf16.mxu0 0
        %2809 = vmatmul.mubr.bf16.gmra.mxu0 %v2663
        %v2810 = vpop.f32.mrf.mxu0
        %v2811 = vadd.f32 0.0, %v2810
        %v2812 = vpop.f32.mrf.mxu0
        %v2813 = vpop.f32.mrf.mxu0
        %v2814 = vadd.f32 0.0, %v2813
        %v2815 = vpop.f32.mrf.mxu0
        %2816 = vdwg.mxu0
        %v2817 = vadd.f32 %v2571, %v2755
        %v2818 = vadd.f32 %v2572, %v2758
        %v2819 = vadd.f32 %v2573, %v2763
        %v2820 = vadd.f32 %v2574, %v2766
        %v2821 = vadd.f32 %v2575, %v2771
        %v2822 = vadd.f32 %v2576, %v2774
        %v2823 = vadd.f32 %v2577, %v2779
        %v2824 = vadd.f32 %v2578, %v2782
        %v2825 = vadd.f32 %v2579, %v2787
        %v2826 = vadd.f32 %v2580, %v2790
        %v2827 = vadd.f32 %v2581, %v2795
        %v2828 = vadd.f32 %v2582, %v2798
        %v2829 = vadd.f32 %v2583, %v2803
        %v2830 = vadd.f32 %v2584, %v2806
        %v2831 = vadd.f32 %v2585, %v2811
        %v2832 = vadd.f32 %v2586, %v2814
        %v2834 = vlaneseq
        %v2835 = vshrl.u32 %v2834, 7
        %v2836 = vsub.s32 0, %v2835
        %v2837 = vrot.slane %v910, %v2836
        %v2839 = vadd.f32 %v2817, %v2837
        %v2840 = vadd.f32 %v2818, %v2837
        %v2841 = vadd.f32 %v2819, %v2837
        %v2842 = vadd.f32 %v2820, %v2837
        %v2843 = vadd.f32 %v2821, %v2837
        %v2844 = vadd.f32 %v2822, %v2837
        %v2845 = vadd.f32 %v2823, %v2837
        %v2846 = vadd.f32 %v2824, %v2837
        %v2847 = vadd.f32 %v2825, %v2837
        %v2848 = vadd.f32 %v2826, %v2837
        %v2849 = vadd.f32 %v2827, %v2837
        %v2850 = vadd.f32 %v2828, %v2837
        %v2851 = vadd.f32 %v2829, %v2837
        %v2852 = vadd.f32 %v2830, %v2837
        %v2853 = vadd.f32 %v2831, %v2837
        %v2854 = vadd.f32 %v2832, %v2837
        %v2855 = vmax.f32 %v2839, 0.0
        %v2856 = vmax.f32 %v2840, 0.0
        %v2857 = vmax.f32 %v2841, 0.0
        %v2858 = vmax.f32 %v2842, 0.0
        %v2859 = vmax.f32 %v2843, 0.0
        %v2860 = vmax.f32 %v2844, 0.0
        %v2861 = vmax.f32 %v2845, 0.0
        %v2862 = vmax.f32 %v2846, 0.0
        %v2863 = vmax.f32 %v2847, 0.0
        %v2864 = vmax.f32 %v2848, 0.0
        %v2865 = vmax.f32 %v2849, 0.0
        %v2866 = vmax.f32 %v2850, 0.0
        %v2867 = vmax.f32 %v2851, 0.0
        %v2868 = vmax.f32 %v2852, 0.0
        %v2869 = vmax.f32 %v2853, 0.0
        %v2870 = vmax.f32 %v2854, 0.0
        %v2871 = vpack.c.bf16 %v2856, %v2855
        %v2872 = vpack.c.bf16 %v2858, %v2857
        %v2873 = vpack.c.bf16 %v2860, %v2859
        %v2874 = vpack.c.bf16 %v2862, %v2861
        %v2875 = vpack.c.bf16 %v2864, %v2863
        %v2876 = vpack.c.bf16 %v2866, %v2865
        %v2877 = vpack.c.bf16 %v2868, %v2867
        %v2878 = vpack.c.bf16 %v2870, %v2869
        %s2879 = scalar_lea.vmem [#allocation9], 64
        %v2880 = vld [vmem:[%s2879] sm:$0xf]
        %v2881 = vld [vmem:[%s2879 + $0x4] sm:$0xf]
        %v2882 = vld [vmem:[%s2879 + $0x8] sm:$0xf]
        %v2883 = vld [vmem:[%s2879 + $0xc] sm:$0xf]
        %v2884 = vld [vmem:[%s2879 + $0x10] sm:$0xf]
        %v2885 = vld [vmem:[%s2879 + $0x14] sm:$0xf]
        %v2886 = vld [vmem:[%s2879 + $0x18] sm:$0xf]
        %v2887 = vld [vmem:[%s2879 + $0x1c] sm:$0xf]
        %v2888 = vld [vmem:[%s2879 + $0x20] sm:$0xf]
        %v2889 = vld [vmem:[%s2879 + $0x24] sm:$0xf]
        %v2890 = vld [vmem:[%s2879 + $0x28] sm:$0xf]
        %v2891 = vld [vmem:[%s2879 + $0x2c] sm:$0xf]
        %v2892 = vld [vmem:[%s2879 + $0x30] sm:$0xf]
        %v2893 = vld [vmem:[%s2879 + $0x34] sm:$0xf]
        %v2894 = vld [vmem:[%s2879 + $0x38] sm:$0xf]
        %v2895 = vld [vmem:[%s2879 + $0x3c] sm:$0xf]
        %v2912 = vunpack.c.l.b16 %v2880
        %v2913 = vunpack.c.l.b16 %v2881
        %v2914 = vunpack.c.l.b16 %v2882
        %v2915 = vunpack.c.l.b16 %v2883
        %v2916 = vunpack.c.l.b16 %v2884
        %v2917 = vunpack.c.l.b16 %v2885
        %v2918 = vunpack.c.l.b16 %v2886
        %v2919 = vunpack.c.l.b16 %v2887
        %v2920 = vunpack.c.l.b16 %v2888
        %v2921 = vunpack.c.l.b16 %v2889
        %v2922 = vunpack.c.l.b16 %v2890
        %v2923 = vunpack.c.l.b16 %v2891
        %v2924 = vunpack.c.l.b16 %v2892
        %v2925 = vunpack.c.l.b16 %v2893
        %v2926 = vunpack.c.l.b16 %v2894
        %v2927 = vunpack.c.l.b16 %v2895
        %v2928 = vpack.c.b16 %v2913, %v2912
        %v2929 = vpack.c.b16 %v2915, %v2914
        %v2930 = vpack.c.b16 %v2917, %v2916
        %v2931 = vpack.c.b16 %v2919, %v2918
        %v2932 = vpack.c.b16 %v2921, %v2920
        %v2933 = vpack.c.b16 %v2923, %v2922
        %v2934 = vpack.c.b16 %v2925, %v2924
        %v2935 = vpack.c.b16 %v2927, %v2926
        %2944 = vmatprep.subr.bf16.mxu0 0
        %2945 = vmatpush1.bf16.msra.mxu0 %v2935
        %2946 = vmatprep.subr.bf16.mxu0 0
        %2947 = vmatpush1.bf16.msra.mxu0 %v2934
        %2948 = vmatprep.subr.bf16.mxu0 0
        %2949 = vmatpush1.bf16.msra.mxu0 %v2933
        %2950 = vmatprep.subr.bf16.mxu0 0
        %2951 = vmatpush1.bf16.msra.mxu0 %v2932
        %2952 = vmatprep.subr.bf16.mxu0 0
        %2953 = vmatpush1.bf16.msra.mxu0 %v2931
        %2954 = vmatprep.subr.bf16.mxu0 0
        %2955 = vmatpush1.bf16.msra.mxu0 %v2930
        %2956 = vmatprep.subr.bf16.mxu0 0
        %2957 = vmatpush1.bf16.msra.mxu0 %v2929
        %2958 = vmatprep.subr.bf16.mxu0 0
        %2959 = vmatpush1.bf16.msra.mxu0 %v2928
        %2960 = vmatprep.subr.bf16.mxu0 0
        %2961 = vmatpush2.bf16.msra.mxu0 0
        %2962 = vmatprep.subr.bf16.mxu0 0
        %2963 = vmatpush2.bf16.msra.mxu0 0
        %2964 = vmatprep.subr.bf16.mxu0 0
        %2965 = vmatpush2.bf16.msra.mxu0 0
        %2966 = vmatprep.subr.bf16.mxu0 0
        %2967 = vmatpush2.bf16.msra.mxu0 0
        %2968 = vmatprep.subr.bf16.mxu0 0
        %2969 = vmatpush2.bf16.msra.mxu0 0
        %2970 = vmatprep.subr.bf16.mxu0 0
        %2971 = vmatpush2.bf16.msra.mxu0 0
        %2972 = vmatprep.subr.bf16.mxu0 0
        %2973 = vmatpush2.bf16.msra.mxu0 0
        %2974 = vmatprep.subr.bf16.mxu0 0
        %2975 = vmatpush2.bf16.msra.mxu0 0
        %2976 = vmatprep.mubr.bf16.mxu0 0
        %2977 = vmatmul.mubr.bf16.gmra.mxu0 %v2871
        %v2978 = vpop.f32.mrf.mxu0
        %v2979 = vpop.f32.mrf.mxu0
        %v2980 = vpop.f32.mrf.mxu0
        %v2981 = vadd.f32 0.0, %v2980
        %v2982 = vpop.f32.mrf.mxu0
        %2983 = vmatprep.mubr.bf16.mxu0 0
        %2984 = vmatmul.mubr.bf16.gmra.mxu0 %v2872
        %v2985 = vpop.f32.mrf.mxu0
        %v2986 = vadd.f32 0.0, %v2985
        %v2987 = vpop.f32.mrf.mxu0
        %v2988 = vpop.f32.mrf.mxu0
        %v2989 = vpop.f32.mrf.mxu0
        %2990 = vmatprep.mubr.bf16.mxu0 0
        %2991 = vmatmul.mubr.bf16.gmra.mxu0 %v2873
        %v2992 = vpop.f32.mrf.mxu0
        %v2993 = vpop.f32.mrf.mxu0
        %v2994 = vpop.f32.mrf.mxu0
        %v2995 = vadd.f32 0.0, %v2994
        %v2996 = vpop.f32.mrf.mxu0
        %2997 = vmatprep.mubr.bf16.mxu0 0
        %2998 = vmatmul.mubr.bf16.gmra.mxu0 %v2874
        %v2999 = vpop.f32.mrf.mxu0
        %v3000 = vadd.f32 0.0, %v2999
        %v3001 = vpop.f32.mrf.mxu0
        %v3002 = vpop.f32.mrf.mxu0
        %v3003 = vpop.f32.mrf.mxu0
        %3004 = vmatprep.mubr.bf16.mxu0 0
        %3005 = vmatmul.mubr.bf16.gmra.mxu0 %v2875
        %v3006 = vpop.f32.mrf.mxu0
        %v3007 = vpop.f32.mrf.mxu0
        %v3008 = vpop.f32.mrf.mxu0
        %v3009 = vadd.f32 0.0, %v3008
        %v3010 = vpop.f32.mrf.mxu0
        %3011 = vmatprep.mubr.bf16.mxu0 0
        %3012 = vmatmul.mubr.bf16.gmra.mxu0 %v2876
        %v3013 = vpop.f32.mrf.mxu0
        %v3014 = vadd.f32 0.0, %v3013
        %v3015 = vpop.f32.mrf.mxu0
        %v3016 = vpop.f32.mrf.mxu0
        %v3017 = vpop.f32.mrf.mxu0
        %3018 = vmatprep.mubr.bf16.mxu0 0
        %3019 = vmatmul.mubr.bf16.gmra.mxu0 %v2877
        %v3020 = vpop.f32.mrf.mxu0
        %v3021 = vpop.f32.mrf.mxu0
        %v3022 = vpop.f32.mrf.mxu0
        %v3023 = vadd.f32 0.0, %v3022
        %v3024 = vpop.f32.mrf.mxu0
        %3025 = vmatprep.mubr.bf16.mxu0 0
        %3026 = vmatmul.mubr.bf16.gmra.mxu0 %v2878
        %v3027 = vpop.f32.mrf.mxu0
        %v3028 = vadd.f32 0.0, %v3027
        %v3029 = vpop.f32.mrf.mxu0
        %v3030 = vpop.f32.mrf.mxu0
        %v3031 = vpop.f32.mrf.mxu0
        %3032 = vdwg.mxu0
        %v3033 = vadd.f32 %v749, %v2981
        %v3034 = vadd.f32 %v750, %v2986
        %v3035 = vadd.f32 %v751, %v2995
        %v3036 = vadd.f32 %v752, %v3000
        %v3037 = vadd.f32 %v753, %v3009
        %v3038 = vadd.f32 %v754, %v3014
        %v3039 = vadd.f32 %v755, %v3023
        %v3040 = vadd.f32 %v756, %v3028
        %s3041 = scalar_lea.vmem [#allocation7], 576
        %v3042 = vld [vmem:[%s3041] sm:$0xf]
        %v3043 = vld [vmem:[%s3041 + $0x4] sm:$0xf]
        %v3044 = vld [vmem:[%s3041 + $0x8] sm:$0xf]
        %v3045 = vld [vmem:[%s3041 + $0xc] sm:$0xf]
        %v3046 = vld [vmem:[%s3041 + $0x10] sm:$0xf]
        %v3047 = vld [vmem:[%s3041 + $0x14] sm:$0xf]
        %v3048 = vld [vmem:[%s3041 + $0x18] sm:$0xf]
        %v3049 = vld [vmem:[%s3041 + $0x1c] sm:$0xf]
        %v3050 = vld [vmem:[%s3041 + $0x20] sm:$0xf]
        %v3051 = vld [vmem:[%s3041 + $0x24] sm:$0xf]
        %v3052 = vld [vmem:[%s3041 + $0x28] sm:$0xf]
        %v3053 = vld [vmem:[%s3041 + $0x2c] sm:$0xf]
        %v3054 = vld [vmem:[%s3041 + $0x30] sm:$0xf]
        %v3055 = vld [vmem:[%s3041 + $0x34] sm:$0xf]
        %v3056 = vld [vmem:[%s3041 + $0x38] sm:$0xf]
        %v3057 = vld [vmem:[%s3041 + $0x3c] sm:$0xf]
        %s3058 = scalar_lea.vmem [#allocation7], 640
        %v3059 = vld [vmem:[%s3058] sm:$0xf]
        %v3060 = vld [vmem:[%s3058 + $0x4] sm:$0xf]
        %v3061 = vld [vmem:[%s3058 + $0x8] sm:$0xf]
        %v3062 = vld [vmem:[%s3058 + $0xc] sm:$0xf]
        %v3063 = vld [vmem:[%s3058 + $0x10] sm:$0xf]
        %v3064 = vld [vmem:[%s3058 + $0x14] sm:$0xf]
        %v3065 = vld [vmem:[%s3058 + $0x18] sm:$0xf]
        %v3066 = vld [vmem:[%s3058 + $0x1c] sm:$0xf]
        %v3067 = vld [vmem:[%s3058 + $0x20] sm:$0xf]
        %v3068 = vld [vmem:[%s3058 + $0x24] sm:$0xf]
        %v3069 = vld [vmem:[%s3058 + $0x28] sm:$0xf]
        %v3070 = vld [vmem:[%s3058 + $0x2c] sm:$0xf]
        %v3071 = vld [vmem:[%s3058 + $0x30] sm:$0xf]
        %v3072 = vld [vmem:[%s3058 + $0x34] sm:$0xf]
        %v3073 = vld [vmem:[%s3058 + $0x38] sm:$0xf]
        %v3074 = vld [vmem:[%s3058 + $0x3c] sm:$0xf]
        %s3075 = scalar_lea.vmem [#allocation7], 704
        %v3076 = vld [vmem:[%s3075] sm:$0xf]
        %v3077 = vld [vmem:[%s3075 + $0x4] sm:$0xf]
        %v3078 = vld [vmem:[%s3075 + $0x8] sm:$0xf]
        %v3079 = vld [vmem:[%s3075 + $0xc] sm:$0xf]
        %v3080 = vld [vmem:[%s3075 + $0x10] sm:$0xf]
        %v3081 = vld [vmem:[%s3075 + $0x14] sm:$0xf]
        %v3082 = vld [vmem:[%s3075 + $0x18] sm:$0xf]
        %v3083 = vld [vmem:[%s3075 + $0x1c] sm:$0xf]
        %v3084 = vld [vmem:[%s3075 + $0x20] sm:$0xf]
        %v3085 = vld [vmem:[%s3075 + $0x24] sm:$0xf]
        %v3086 = vld [vmem:[%s3075 + $0x28] sm:$0xf]
        %v3087 = vld [vmem:[%s3075 + $0x2c] sm:$0xf]
        %v3088 = vld [vmem:[%s3075 + $0x30] sm:$0xf]
        %v3089 = vld [vmem:[%s3075 + $0x34] sm:$0xf]
        %v3090 = vld [vmem:[%s3075 + $0x38] sm:$0xf]
        %v3091 = vld [vmem:[%s3075 + $0x3c] sm:$0xf]
        %s3092 = scalar_lea.vmem [#allocation7], 768
        %v3093 = vld [vmem:[%s3092] sm:$0xf]
        %v3094 = vld [vmem:[%s3092 + $0x4] sm:$0xf]
        %v3095 = vld [vmem:[%s3092 + $0x8] sm:$0xf]
        %v3096 = vld [vmem:[%s3092 + $0xc] sm:$0xf]
        %v3097 = vld [vmem:[%s3092 + $0x10] sm:$0xf]
        %v3098 = vld [vmem:[%s3092 + $0x14] sm:$0xf]
        %v3099 = vld [vmem:[%s3092 + $0x18] sm:$0xf]
        %v3100 = vld [vmem:[%s3092 + $0x1c] sm:$0xf]
        %v3101 = vld [vmem:[%s3092 + $0x20] sm:$0xf]
        %v3102 = vld [vmem:[%s3092 + $0x24] sm:$0xf]
        %v3103 = vld [vmem:[%s3092 + $0x28] sm:$0xf]
        %v3104 = vld [vmem:[%s3092 + $0x2c] sm:$0xf]
        %v3105 = vld [vmem:[%s3092 + $0x30] sm:$0xf]
        %v3106 = vld [vmem:[%s3092 + $0x34] sm:$0xf]
        %v3107 = vld [vmem:[%s3092 + $0x38] sm:$0xf]
        %v3108 = vld [vmem:[%s3092 + $0x3c] sm:$0xf]
        %s3109 = scalar_lea.vmem [#allocation7], 832
        %v3110 = vld [vmem:[%s3109] sm:$0xf]
        %v3111 = vld [vmem:[%s3109 + $0x4] sm:$0xf]
        %v3112 = vld [vmem:[%s3109 + $0x8] sm:$0xf]
        %v3113 = vld [vmem:[%s3109 + $0xc] sm:$0xf]
        %v3114 = vld [vmem:[%s3109 + $0x10] sm:$0xf]
        %v3115 = vld [vmem:[%s3109 + $0x14] sm:$0xf]
        %v3116 = vld [vmem:[%s3109 + $0x18] sm:$0xf]
        %v3117 = vld [vmem:[%s3109 + $0x1c] sm:$0xf]
        %v3118 = vld [vmem:[%s3109 + $0x20] sm:$0xf]
        %v3119 = vld [vmem:[%s3109 + $0x24] sm:$0xf]
        %v3120 = vld [vmem:[%s3109 + $0x28] sm:$0xf]
        %v3121 = vld [vmem:[%s3109 + $0x2c] sm:$0xf]
        %v3122 = vld [vmem:[%s3109 + $0x30] sm:$0xf]
        %v3123 = vld [vmem:[%s3109 + $0x34] sm:$0xf]
        %v3124 = vld [vmem:[%s3109 + $0x38] sm:$0xf]
        %v3125 = vld [vmem:[%s3109 + $0x3c] sm:$0xf]
        %s3126 = scalar_lea.vmem [#allocation7], 896
        %v3127 = vld [vmem:[%s3126] sm:$0xf]
        %v3128 = vld [vmem:[%s3126 + $0x4] sm:$0xf]
        %v3129 = vld [vmem:[%s3126 + $0x8] sm:$0xf]
        %v3130 = vld [vmem:[%s3126 + $0xc] sm:$0xf]
        %v3131 = vld [vmem:[%s3126 + $0x10] sm:$0xf]
        %v3132 = vld [vmem:[%s3126 + $0x14] sm:$0xf]
        %v3133 = vld [vmem:[%s3126 + $0x18] sm:$0xf]
        %v3134 = vld [vmem:[%s3126 + $0x1c] sm:$0xf]
        %v3135 = vld [vmem:[%s3126 + $0x20] sm:$0xf]
        %v3136 = vld [vmem:[%s3126 + $0x24] sm:$0xf]
        %v3137 = vld [vmem:[%s3126 + $0x28] sm:$0xf]
        %v3138 = vld [vmem:[%s3126 + $0x2c] sm:$0xf]
        %v3139 = vld [vmem:[%s3126 + $0x30] sm:$0xf]
        %v3140 = vld [vmem:[%s3126 + $0x34] sm:$0xf]
        %v3141 = vld [vmem:[%s3126 + $0x38] sm:$0xf]
        %v3142 = vld [vmem:[%s3126 + $0x3c] sm:$0xf]
        %s3143 = scalar_lea.vmem [#allocation7], 960
        %v3144 = vld [vmem:[%s3143] sm:$0xf]
        %v3145 = vld [vmem:[%s3143 + $0x4] sm:$0xf]
        %v3146 = vld [vmem:[%s3143 + $0x8] sm:$0xf]
        %v3147 = vld [vmem:[%s3143 + $0xc] sm:$0xf]
        %v3148 = vld [vmem:[%s3143 + $0x10] sm:$0xf]
        %v3149 = vld [vmem:[%s3143 + $0x14] sm:$0xf]
        %v3150 = vld [vmem:[%s3143 + $0x18] sm:$0xf]
        %v3151 = vld [vmem:[%s3143 + $0x1c] sm:$0xf]
        %v3152 = vld [vmem:[%s3143 + $0x20] sm:$0xf]
        %v3153 = vld [vmem:[%s3143 + $0x24] sm:$0xf]
        %v3154 = vld [vmem:[%s3143 + $0x28] sm:$0xf]
        %v3155 = vld [vmem:[%s3143 + $0x2c] sm:$0xf]
        %v3156 = vld [vmem:[%s3143 + $0x30] sm:$0xf]
        %v3157 = vld [vmem:[%s3143 + $0x34] sm:$0xf]
        %v3158 = vld [vmem:[%s3143 + $0x38] sm:$0xf]
        %v3159 = vld [vmem:[%s3143 + $0x3c] sm:$0xf]
        %s3160 = scalar_lea.vmem [#allocation7], 1024
        %v3161 = vld [vmem:[%s3160] sm:$0xf]
        %v3162 = vld [vmem:[%s3160 + $0x4] sm:$0xf]
        %v3163 = vld [vmem:[%s3160 + $0x8] sm:$0xf]
        %v3164 = vld [vmem:[%s3160 + $0xc] sm:$0xf]
        %v3165 = vld [vmem:[%s3160 + $0x10] sm:$0xf]
        %v3166 = vld [vmem:[%s3160 + $0x14] sm:$0xf]
        %v3167 = vld [vmem:[%s3160 + $0x18] sm:$0xf]
        %v3168 = vld [vmem:[%s3160 + $0x1c] sm:$0xf]
        %v3169 = vld [vmem:[%s3160 + $0x20] sm:$0xf]
        %v3170 = vld [vmem:[%s3160 + $0x24] sm:$0xf]
        %v3171 = vld [vmem:[%s3160 + $0x28] sm:$0xf]
        %v3172 = vld [vmem:[%s3160 + $0x2c] sm:$0xf]
        %v3173 = vld [vmem:[%s3160 + $0x30] sm:$0xf]
        %v3174 = vld [vmem:[%s3160 + $0x34] sm:$0xf]
        %v3175 = vld [vmem:[%s3160 + $0x38] sm:$0xf]
        %v3176 = vld [vmem:[%s3160 + $0x3c] sm:$0xf]
        %s3177 = scalar_lea.vmem [#allocation7], 1088
        %v3178 = vld [vmem:[%s3177] sm:$0xf]
        %v3179 = vld [vmem:[%s3177 + $0x4] sm:$0xf]
        %v3180 = vld [vmem:[%s3177 + $0x8] sm:$0xf]
        %v3181 = vld [vmem:[%s3177 + $0xc] sm:$0xf]
        %v3182 = vld [vmem:[%s3177 + $0x10] sm:$0xf]
        %v3183 = vld [vmem:[%s3177 + $0x14] sm:$0xf]
        %v3184 = vld [vmem:[%s3177 + $0x18] sm:$0xf]
        %v3185 = vld [vmem:[%s3177 + $0x1c] sm:$0xf]
        %v3186 = vld [vmem:[%s3177 + $0x20] sm:$0xf]
        %v3187 = vld [vmem:[%s3177 + $0x24] sm:$0xf]
        %v3188 = vld [vmem:[%s3177 + $0x28] sm:$0xf]
        %v3189 = vld [vmem:[%s3177 + $0x2c] sm:$0xf]
        %v3190 = vld [vmem:[%s3177 + $0x30] sm:$0xf]
        %v3191 = vld [vmem:[%s3177 + $0x34] sm:$0xf]
        %v3192 = vld [vmem:[%s3177 + $0x38] sm:$0xf]
        %v3193 = vld [vmem:[%s3177 + $0x3c] sm:$0xf]
        %s3194 = scalar_lea.vmem %s4, 2
        %v3195 = vld [vmem:[%s3194] sm:$0x1]
        %v3196 = vld [vmem:[%s327 + $0xc] sm:$0xc]
        %v3197 = vld [vmem:[%s327 + $0x10] sm:$0xf]
        %v3198 = vld [vmem:[%s327 + $0x14] sm:$0xf]
        %v3199 = vld [vmem:[%s327 + $0x18] sm:$0xf]
        %v3200 = vld [vmem:[%s327 + $0x1c] sm:$0xf]
        %v3201 = vld [vmem:[%s327 + $0x20] sm:$0xf]
        %v3202 = vld [vmem:[%s327 + $0x24] sm:$0xf]
        %v3203 = vld [vmem:[%s327 + $0x28] sm:$0xf]
        %v3204 = vld [vmem:[%s327 + $0x2c] sm:$0xf]
        %v3205 = vld [vmem:[%s327 + $0x30] sm:$0xf]
        %v3206 = vld [vmem:[%s327 + $0x34] sm:$0xf]
        %v3207 = vld [vmem:[%s327 + $0x38] sm:$0xf]
        %v3208 = vld [vmem:[%s327 + $0x3c] sm:$0xf]
        %v3209 = vld [vmem:[%s327 + $0x40] sm:$0xf]
        %v3210 = vld [vmem:[%s327 + $0x44] sm:$0xf]
        %v3211 = vld [vmem:[%s327 + $0x48] sm:$0xf]
        %v3212 = vld [vmem:[%s327 + $0x4c] sm:$0x3]
        %v3213 = vld [vmem:[%s327 + $0x4c] sm:$0xf]
        %v3230 = vunpack.c.l.b16 %v3197
        %v3231 = vunpack.c.l.b16 %v3198
        %v3232 = vunpack.c.l.b16 %v3199
        %v3233 = vunpack.c.l.b16 %v3200
        %v3234 = vunpack.c.l.b16 %v3201
        %v3235 = vunpack.c.l.b16 %v3202
        %v3236 = vunpack.c.l.b16 %v3203
        %v3237 = vunpack.c.l.b16 %v3204
        %v3238 = vunpack.c.l.b16 %v3205
        %v3239 = vunpack.c.l.b16 %v3206
        %v3240 = vunpack.c.l.b16 %v3207
        %v3241 = vunpack.c.l.b16 %v3208
        %v3242 = vunpack.c.l.b16 %v3209
        %v3243 = vunpack.c.l.b16 %v3210
        %v3244 = vunpack.c.l.b16 %v3211
        %v3245 = vunpack.c.l.b16 %v3213
        %v3246 = vpack.c.b16 %v3231, %v3230
        %v3247 = vpack.c.b16 %v3233, %v3232
        %v3248 = vpack.c.b16 %v3235, %v3234
        %v3249 = vpack.c.b16 %v3237, %v3236
        %v3250 = vpack.c.b16 %v3239, %v3238
        %v3251 = vpack.c.b16 %v3241, %v3240
        %v3252 = vpack.c.b16 %v3243, %v3242
        %v3253 = vpack.c.b16 %v3245, %v3244
        %v3278 = vunpack.c.l.b16 %v3059
        %v3279 = vunpack.c.l.b16 %v3060
        %v3280 = vunpack.c.l.b16 %v3061
        %v3281 = vunpack.c.l.b16 %v3062
        %v3282 = vunpack.c.l.b16 %v3063
        %v3283 = vunpack.c.l.b16 %v3064
        %v3284 = vunpack.c.l.b16 %v3065
        %v3285 = vunpack.c.l.b16 %v3066
        %v3286 = vunpack.c.l.b16 %v3067
        %v3287 = vunpack.c.l.b16 %v3068
        %v3288 = vunpack.c.l.b16 %v3069
        %v3289 = vunpack.c.l.b16 %v3070
        %v3290 = vunpack.c.l.b16 %v3071
        %v3291 = vunpack.c.l.b16 %v3072
        %v3292 = vunpack.c.l.b16 %v3073
        %v3293 = vunpack.c.l.b16 %v3074
        %v3294 = vpack.c.b16 %v3279, %v3278
        %v3295 = vpack.c.b16 %v3281, %v3280
        %v3296 = vpack.c.b16 %v3283, %v3282
        %v3297 = vpack.c.b16 %v3285, %v3284
        %v3298 = vpack.c.b16 %v3287, %v3286
        %v3299 = vpack.c.b16 %v3289, %v3288
        %v3300 = vpack.c.b16 %v3291, %v3290
        %v3301 = vpack.c.b16 %v3293, %v3292
        %3310 = vmatprep.subr.bf16.mxu0 0
        %3311 = vmatpush1.bf16.msra.mxu0 %v3301
        %3312 = vmatprep.subr.bf16.mxu0 0
        %3313 = vmatpush1.bf16.msra.mxu0 %v3300
        %3314 = vmatprep.subr.bf16.mxu0 0
        %3315 = vmatpush1.bf16.msra.mxu0 %v3299
        %3316 = vmatprep.subr.bf16.mxu0 0
        %3317 = vmatpush1.bf16.msra.mxu0 %v3298
        %3318 = vmatprep.subr.bf16.mxu0 0
        %3319 = vmatpush1.bf16.msra.mxu0 %v3297
        %3320 = vmatprep.subr.bf16.mxu0 0
        %3321 = vmatpush1.bf16.msra.mxu0 %v3296
        %3322 = vmatprep.subr.bf16.mxu0 0
        %3323 = vmatpush1.bf16.msra.mxu0 %v3295
        %3324 = vmatprep.subr.bf16.mxu0 0
        %3325 = vmatpush1.bf16.msra.mxu0 %v3294
        %3326 = vmatprep.subr.bf16.mxu0 0
        %3327 = vmatpush2.bf16.msra.mxu0 0
        %3328 = vmatprep.subr.bf16.mxu0 0
        %3329 = vmatpush2.bf16.msra.mxu0 0
        %3330 = vmatprep.subr.bf16.mxu0 0
        %3331 = vmatpush2.bf16.msra.mxu0 0
        %3332 = vmatprep.subr.bf16.mxu0 0
        %3333 = vmatpush2.bf16.msra.mxu0 0
        %3334 = vmatprep.subr.bf16.mxu0 0
        %3335 = vmatpush2.bf16.msra.mxu0 0
        %3336 = vmatprep.subr.bf16.mxu0 0
        %3337 = vmatpush2.bf16.msra.mxu0 0
        %3338 = vmatprep.subr.bf16.mxu0 0
        %3339 = vmatpush2.bf16.msra.mxu0 0
        %3340 = vmatprep.subr.bf16.mxu0 0
        %3341 = vmatpush2.bf16.msra.mxu0 0
        %3342 = vmatprep.mubr.bf16.mxu0 0
        %3343 = vmatmul.mubr.bf16.gmra.mxu0 %v3246
        %v3344 = vpop.f32.mrf.mxu0
        %v3345 = vadd.f32 0.0, %v3344
        %v3346 = vpop.f32.mrf.mxu0
        %v3347 = vpop.f32.mrf.mxu0
        %v3348 = vadd.f32 0.0, %v3347
        %v3349 = vpop.f32.mrf.mxu0
        %3350 = vmatprep.mubr.bf16.mxu0 0
        %3351 = vmatmul.mubr.bf16.gmra.mxu0 %v3247
        %v3352 = vpop.f32.mrf.mxu0
        %v3353 = vadd.f32 0.0, %v3352
        %v3354 = vpop.f32.mrf.mxu0
        %v3355 = vpop.f32.mrf.mxu0
        %v3356 = vadd.f32 0.0, %v3355
        %v3357 = vpop.f32.mrf.mxu0
        %3358 = vmatprep.mubr.bf16.mxu0 0
        %3359 = vmatmul.mubr.bf16.gmra.mxu0 %v3248
        %v3360 = vpop.f32.mrf.mxu0
        %v3361 = vadd.f32 0.0, %v3360
        %v3362 = vpop.f32.mrf.mxu0
        %v3363 = vpop.f32.mrf.mxu0
        %v3364 = vadd.f32 0.0, %v3363
        %v3365 = vpop.f32.mrf.mxu0
        %3366 = vmatprep.mubr.bf16.mxu0 0
        %3367 = vmatmul.mubr.bf16.gmra.mxu0 %v3249
        %v3368 = vpop.f32.mrf.mxu0
        %v3369 = vadd.f32 0.0, %v3368
        %v3370 = vpop.f32.mrf.mxu0
        %v3371 = vpop.f32.mrf.mxu0
        %v3372 = vadd.f32 0.0, %v3371
        %v3373 = vpop.f32.mrf.mxu0
        %3374 = vmatprep.mubr.bf16.mxu0 0
        %3375 = vmatmul.mubr.bf16.gmra.mxu0 %v3250
        %v3376 = vpop.f32.mrf.mxu0
        %v3377 = vadd.f32 0.0, %v3376
        %v3378 = vpop.f32.mrf.mxu0
        %v3379 = vpop.f32.mrf.mxu0
        %v3380 = vadd.f32 0.0, %v3379
        %v3381 = vpop.f32.mrf.mxu0
        %3382 = vmatprep.mubr.bf16.mxu0 0
        %3383 = vmatmul.mubr.bf16.gmra.mxu0 %v3251
        %v3384 = vpop.f32.mrf.mxu0
        %v3385 = vadd.f32 0.0, %v3384
        %v3386 = vpop.f32.mrf.mxu0
        %v3387 = vpop.f32.mrf.mxu0
        %v3388 = vadd.f32 0.0, %v3387
        %v3389 = vpop.f32.mrf.mxu0
        %3390 = vmatprep.mubr.bf16.mxu0 0
        %3391 = vmatmul.mubr.bf16.gmra.mxu0 %v3252
        %v3392 = vpop.f32.mrf.mxu0
        %v3393 = vadd.f32 0.0, %v3392
        %v3394 = vpop.f32.mrf.mxu0
        %v3395 = vpop.f32.mrf.mxu0
        %v3396 = vadd.f32 0.0, %v3395
        %v3397 = vpop.f32.mrf.mxu0
        %3398 = vmatprep.mubr.bf16.mxu0 0
        %3399 = vmatmul.mubr.bf16.gmra.mxu0 %v3253
        %v3400 = vpop.f32.mrf.mxu0
        %v3401 = vadd.f32 0.0, %v3400
        %v3402 = vpop.f32.mrf.mxu0
        %v3403 = vpop.f32.mrf.mxu0
        %v3404 = vadd.f32 0.0, %v3403
        %v3405 = vpop.f32.mrf.mxu0
        %3406 = vdwg.mxu0
        %v3409 = vunpack.c.l.b16 %v3196
        %v3410 = vunpack.c.l.b16 %v3212
        %v3411 = vpack.c.b16 %v3230, %v3409
        %v3412 = vpack.c.b16 %v3232, %v3231
        %v3413 = vpack.c.b16 %v3234, %v3233
        %v3414 = vpack.c.b16 %v3236, %v3235
        %v3415 = vpack.c.b16 %v3238, %v3237
        %v3416 = vpack.c.b16 %v3240, %v3239
        %v3417 = vpack.c.b16 %v3242, %v3241
        %v3418 = vpack.c.b16 %v3244, %v3243
        %v3419 = vpack.c.b16 %v3410, %v3410
        %vm3420 = vcmask 1045504
        %v3421 = vrot.slane %v3411, 2
        %v3422 = vrot.slane %v3412, 2
        %v3423 = vsel %vm3420, %v3421, %v3422
        %v3424 = vrot.slane %v3413, 2
        %v3425 = vsel %vm3420, %v3422, %v3424
        %v3426 = vrot.slane %v3414, 2
        %v3427 = vsel %vm3420, %v3424, %v3426
        %v3428 = vrot.slane %v3415, 2
        %v3429 = vsel %vm3420, %v3426, %v3428
        %v3430 = vrot.slane %v3416, 2
        %v3431 = vsel %vm3420, %v3428, %v3430
        %v3432 = vrot.slane %v3417, 2
        %v3433 = vsel %vm3420, %v3430, %v3432
        %v3434 = vrot.slane %v3418, 2
        %v3435 = vsel %vm3420, %v3432, %v3434
        %v3436 = vrot.slane %v3419, 2
        %v3437 = vsel %vm3420, %v3434, %v3436
        %v3462 = vunpack.c.l.b16 %v3042
        %v3463 = vunpack.c.l.b16 %v3043
        %v3464 = vunpack.c.l.b16 %v3044
        %v3465 = vunpack.c.l.b16 %v3045
        %v3466 = vunpack.c.l.b16 %v3046
        %v3467 = vunpack.c.l.b16 %v3047
        %v3468 = vunpack.c.l.b16 %v3048
        %v3469 = vunpack.c.l.b16 %v3049
        %v3470 = vunpack.c.l.b16 %v3050
        %v3471 = vunpack.c.l.b16 %v3051
        %v3472 = vunpack.c.l.b16 %v3052
        %v3473 = vunpack.c.l.b16 %v3053
        %v3474 = vunpack.c.l.b16 %v3054
        %v3475 = vunpack.c.l.b16 %v3055
        %v3476 = vunpack.c.l.b16 %v3056
        %v3477 = vunpack.c.l.b16 %v3057
        %v3478 = vpack.c.b16 %v3463, %v3462
        %v3479 = vpack.c.b16 %v3465, %v3464
        %v3480 = vpack.c.b16 %v3467, %v3466
        %v3481 = vpack.c.b16 %v3469, %v3468
        %v3482 = vpack.c.b16 %v3471, %v3470
        %v3483 = vpack.c.b16 %v3473, %v3472
        %v3484 = vpack.c.b16 %v3475, %v3474
        %v3485 = vpack.c.b16 %v3477, %v3476
        %3494 = vmatprep.subr.bf16.mxu0 0
        %3495 = vmatpush1.bf16.msra.mxu0 %v3485
        %3496 = vmatprep.subr.bf16.mxu0 0
        %3497 = vmatpush1.bf16.msra.mxu0 %v3484
        %3498 = vmatprep.subr.bf16.mxu0 0
        %3499 = vmatpush1.bf16.msra.mxu0 %v3483
        %3500 = vmatprep.subr.bf16.mxu0 0
        %3501 = vmatpush1.bf16.msra.mxu0 %v3482
        %3502 = vmatprep.subr.bf16.mxu0 0
        %3503 = vmatpush1.bf16.msra.mxu0 %v3481
        %3504 = vmatprep.subr.bf16.mxu0 0
        %3505 = vmatpush1.bf16.msra.mxu0 %v3480
        %3506 = vmatprep.subr.bf16.mxu0 0
        %3507 = vmatpush1.bf16.msra.mxu0 %v3479
        %3508 = vmatprep.subr.bf16.mxu0 0
        %3509 = vmatpush1.bf16.msra.mxu0 %v3478
        %3510 = vmatprep.subr.bf16.mxu0 0
        %3511 = vmatpush2.bf16.msra.mxu0 0
        %3512 = vmatprep.subr.bf16.mxu0 0
        %3513 = vmatpush2.bf16.msra.mxu0 0
        %3514 = vmatprep.subr.bf16.mxu0 0
        %3515 = vmatpush2.bf16.msra.mxu0 0
        %3516 = vmatprep.subr.bf16.mxu0 0
        %3517 = vmatpush2.bf16.msra.mxu0 0
        %3518 = vmatprep.subr.bf16.mxu0 0
        %3519 = vmatpush2.bf16.msra.mxu0 0
        %3520 = vmatprep.subr.bf16.mxu0 0
        %3521 = vmatpush2.bf16.msra.mxu0 0
        %3522 = vmatprep.subr.bf16.mxu0 0
        %3523 = vmatpush2.bf16.msra.mxu0 0
        %3524 = vmatprep.subr.bf16.mxu0 0
        %3525 = vmatpush2.bf16.msra.mxu0 0
        %3526 = vmatprep.mubr.bf16.mxu0 0
        %3527 = vmatmul.mubr.bf16.gmra.mxu0 %v3423
        %v3528 = vpop.f32.mrf.mxu0
        %v3529 = vadd.f32 %v3345, %v3528
        %v3530 = vpop.f32.mrf.mxu0
        %v3531 = vpop.f32.mrf.mxu0
        %v3532 = vadd.f32 %v3348, %v3531
        %v3533 = vpop.f32.mrf.mxu0
        %3534 = vmatprep.mubr.bf16.mxu0 0
        %3535 = vmatmul.mubr.bf16.gmra.mxu0 %v3425
        %v3536 = vpop.f32.mrf.mxu0
        %v3537 = vadd.f32 %v3353, %v3536
        %v3538 = vpop.f32.mrf.mxu0
        %v3539 = vpop.f32.mrf.mxu0
        %v3540 = vadd.f32 %v3356, %v3539
        %v3541 = vpop.f32.mrf.mxu0
        %3542 = vmatprep.mubr.bf16.mxu0 0
        %3543 = vmatmul.mubr.bf16.gmra.mxu0 %v3427
        %v3544 = vpop.f32.mrf.mxu0
        %v3545 = vadd.f32 %v3361, %v3544
        %v3546 = vpop.f32.mrf.mxu0
        %v3547 = vpop.f32.mrf.mxu0
        %v3548 = vadd.f32 %v3364, %v3547
        %v3549 = vpop.f32.mrf.mxu0
        %3550 = vmatprep.mubr.bf16.mxu0 0
        %3551 = vmatmul.mubr.bf16.gmra.mxu0 %v3429
        %v3552 = vpop.f32.mrf.mxu0
        %v3553 = vadd.f32 %v3369, %v3552
        %v3554 = vpop.f32.mrf.mxu0
        %v3555 = vpop.f32.mrf.mxu0
        %v3556 = vadd.f32 %v3372, %v3555
        %v3557 = vpop.f32.mrf.mxu0
        %3558 = vmatprep.mubr.bf16.mxu0 0
        %3559 = vmatmul.mubr.bf16.gmra.mxu0 %v3431
        %v3560 = vpop.f32.mrf.mxu0
        %v3561 = vadd.f32 %v3377, %v3560
        %v3562 = vpop.f32.mrf.mxu0
        %v3563 = vpop.f32.mrf.mxu0
        %v3564 = vadd.f32 %v3380, %v3563
        %v3565 = vpop.f32.mrf.mxu0
        %3566 = vmatprep.mubr.bf16.mxu0 0
        %3567 = vmatmul.mubr.bf16.gmra.mxu0 %v3433
        %v3568 = vpop.f32.mrf.mxu0
        %v3569 = vadd.f32 %v3385, %v3568
        %v3570 = vpop.f32.mrf.mxu0
        %v3571 = vpop.f32.mrf.mxu0
        %v3572 = vadd.f32 %v3388, %v3571
        %v3573 = vpop.f32.mrf.mxu0
        %3574 = vmatprep.mubr.bf16.mxu0 0
        %3575 = vmatmul.mubr.bf16.gmra.mxu0 %v3435
        %v3576 = vpop.f32.mrf.mxu0
        %v3577 = vadd.f32 %v3393, %v3576
        %v3578 = vpop.f32.mrf.mxu0
        %v3579 = vpop.f32.mrf.mxu0
        %v3580 = vadd.f32 %v3396, %v3579
        %v3581 = vpop.f32.mrf.mxu0
        %3582 = vmatprep.mubr.bf16.mxu0 0
        %3583 = vmatmul.mubr.bf16.gmra.mxu0 %v3437
        %v3584 = vpop.f32.mrf.mxu0
        %v3585 = vadd.f32 %v3401, %v3584
        %v3586 = vpop.f32.mrf.mxu0
        %v3587 = vpop.f32.mrf.mxu0
        %v3588 = vadd.f32 %v3404, %v3587
        %v3589 = vpop.f32.mrf.mxu0
        %3590 = vdwg.mxu0
        %v3591 = vld [vmem:[%s327 + $0x10] sm:$0xc]
        %v3592 = vld [vmem:[%s327 + $0x14] sm:$0xf]
        %v3593 = vld [vmem:[%s327 + $0x18] sm:$0xf]
        %v3594 = vld [vmem:[%s327 + $0x1c] sm:$0xf]
        %v3595 = vld [vmem:[%s327 + $0x20] sm:$0xf]
        %v3596 = vld [vmem:[%s327 + $0x24] sm:$0xf]
        %v3597 = vld [vmem:[%s327 + $0x28] sm:$0xf]
        %v3598 = vld [vmem:[%s327 + $0x2c] sm:$0xf]
        %v3599 = vld [vmem:[%s327 + $0x30] sm:$0xf]
        %v3600 = vld [vmem:[%s327 + $0x34] sm:$0xf]
        %v3601 = vld [vmem:[%s327 + $0x38] sm:$0xf]
        %v3602 = vld [vmem:[%s327 + $0x3c] sm:$0xf]
        %v3603 = vld [vmem:[%s327 + $0x40] sm:$0xf]
        %v3604 = vld [vmem:[%s327 + $0x44] sm:$0xf]
        %v3605 = vld [vmem:[%s327 + $0x48] sm:$0xf]
        %v3606 = vld [vmem:[%s327 + $0x4c] sm:$0xf]
        %v3607 = vld [vmem:[%s327 + $0x50] sm:$0x3]
        %v3625 = vunpack.c.l.b16 %v3591
        %v3626 = vunpack.c.l.b16 %v3592
        %v3627 = vunpack.c.l.b16 %v3593
        %v3628 = vunpack.c.l.b16 %v3594
        %v3629 = vunpack.c.l.b16 %v3595
        %v3630 = vunpack.c.l.b16 %v3596
        %v3631 = vunpack.c.l.b16 %v3597
        %v3632 = vunpack.c.l.b16 %v3598
        %v3633 = vunpack.c.l.b16 %v3599
        %v3634 = vunpack.c.l.b16 %v3600
        %v3635 = vunpack.c.l.b16 %v3601
        %v3636 = vunpack.c.l.b16 %v3602
        %v3637 = vunpack.c.l.b16 %v3603
        %v3638 = vunpack.c.l.b16 %v3604
        %v3639 = vunpack.c.l.b16 %v3605
        %v3640 = vunpack.c.l.b16 %v3606
        %v3641 = vunpack.c.l.b16 %v3607
        %v3642 = vpack.c.b16 %v3626, %v3625
        %v3643 = vpack.c.b16 %v3628, %v3627
        %v3644 = vpack.c.b16 %v3630, %v3629
        %v3645 = vpack.c.b16 %v3632, %v3631
        %v3646 = vpack.c.b16 %v3634, %v3633
        %v3647 = vpack.c.b16 %v3636, %v3635
        %v3648 = vpack.c.b16 %v3638, %v3637
        %v3649 = vpack.c.b16 %v3640, %v3639
        %v3650 = vpack.c.b16 %v3641, %v3641
        %v3651 = vrot.slane %v3642, 2
        %v3652 = vrot.slane %v3643, 2
        %v3653 = vsel %vm3420, %v3651, %v3652
        %v3654 = vrot.slane %v3644, 2
        %v3655 = vsel %vm3420, %v3652, %v3654
        %v3656 = vrot.slane %v3645, 2
        %v3657 = vsel %vm3420, %v3654, %v3656
        %v3658 = vrot.slane %v3646, 2
        %v3659 = vsel %vm3420, %v3656, %v3658
        %v3660 = vrot.slane %v3647, 2
        %v3661 = vsel %vm3420, %v3658, %v3660
        %v3662 = vrot.slane %v3648, 2
        %v3663 = vsel %vm3420, %v3660, %v3662
        %v3664 = vrot.slane %v3649, 2
        %v3665 = vsel %vm3420, %v3662, %v3664
        %v3666 = vrot.slane %v3650, 2
        %v3667 = vsel %vm3420, %v3664, %v3666
        %v3692 = vunpack.c.l.b16 %v3076
        %v3693 = vunpack.c.l.b16 %v3077
        %v3694 = vunpack.c.l.b16 %v3078
        %v3695 = vunpack.c.l.b16 %v3079
        %v3696 = vunpack.c.l.b16 %v3080
        %v3697 = vunpack.c.l.b16 %v3081
        %v3698 = vunpack.c.l.b16 %v3082
        %v3699 = vunpack.c.l.b16 %v3083
        %v3700 = vunpack.c.l.b16 %v3084
        %v3701 = vunpack.c.l.b16 %v3085
        %v3702 = vunpack.c.l.b16 %v3086
        %v3703 = vunpack.c.l.b16 %v3087
        %v3704 = vunpack.c.l.b16 %v3088
        %v3705 = vunpack.c.l.b16 %v3089
        %v3706 = vunpack.c.l.b16 %v3090
        %v3707 = vunpack.c.l.b16 %v3091
        %v3708 = vpack.c.b16 %v3693, %v3692
        %v3709 = vpack.c.b16 %v3695, %v3694
        %v3710 = vpack.c.b16 %v3697, %v3696
        %v3711 = vpack.c.b16 %v3699, %v3698
        %v3712 = vpack.c.b16 %v3701, %v3700
        %v3713 = vpack.c.b16 %v3703, %v3702
        %v3714 = vpack.c.b16 %v3705, %v3704
        %v3715 = vpack.c.b16 %v3707, %v3706
        %3724 = vmatprep.subr.bf16.mxu0 0
        %3725 = vmatpush1.bf16.msra.mxu0 %v3715
        %3726 = vmatprep.subr.bf16.mxu0 0
        %3727 = vmatpush1.bf16.msra.mxu0 %v3714
        %3728 = vmatprep.subr.bf16.mxu0 0
        %3729 = vmatpush1.bf16.msra.mxu0 %v3713
        %3730 = vmatprep.subr.bf16.mxu0 0
        %3731 = vmatpush1.bf16.msra.mxu0 %v3712
        %3732 = vmatprep.subr.bf16.mxu0 0
        %3733 = vmatpush1.bf16.msra.mxu0 %v3711
        %3734 = vmatprep.subr.bf16.mxu0 0
        %3735 = vmatpush1.bf16.msra.mxu0 %v3710
        %3736 = vmatprep.subr.bf16.mxu0 0
        %3737 = vmatpush1.bf16.msra.mxu0 %v3709
        %3738 = vmatprep.subr.bf16.mxu0 0
        %3739 = vmatpush1.bf16.msra.mxu0 %v3708
        %3740 = vmatprep.subr.bf16.mxu0 0
        %3741 = vmatpush2.bf16.msra.mxu0 0
        %3742 = vmatprep.subr.bf16.mxu0 0
        %3743 = vmatpush2.bf16.msra.mxu0 0
        %3744 = vmatprep.subr.bf16.mxu0 0
        %3745 = vmatpush2.bf16.msra.mxu0 0
        %3746 = vmatprep.subr.bf16.mxu0 0
        %3747 = vmatpush2.bf16.msra.mxu0 0
        %3748 = vmatprep.subr.bf16.mxu0 0
        %3749 = vmatpush2.bf16.msra.mxu0 0
        %3750 = vmatprep.subr.bf16.mxu0 0
        %3751 = vmatpush2.bf16.msra.mxu0 0
        %3752 = vmatprep.subr.bf16.mxu0 0
        %3753 = vmatpush2.bf16.msra.mxu0 0
        %3754 = vmatprep.subr.bf16.mxu0 0
        %3755 = vmatpush2.bf16.msra.mxu0 0
        %3756 = vmatprep.mubr.bf16.mxu0 0
        %3757 = vmatmul.mubr.bf16.gmra.mxu0 %v3653
        %v3758 = vpop.f32.mrf.mxu0
        %v3759 = vadd.f32 0.0, %v3758
        %v3760 = vpop.f32.mrf.mxu0
        %v3761 = vpop.f32.mrf.mxu0
        %v3762 = vadd.f32 0.0, %v3761
        %v3763 = vpop.f32.mrf.mxu0
        %3764 = vmatprep.mubr.bf16.mxu0 0
        %3765 = vmatmul.mubr.bf16.gmra.mxu0 %v3655
        %v3766 = vpop.f32.mrf.mxu0
        %v3767 = vadd.f32 0.0, %v3766
        %v3768 = vpop.f32.mrf.mxu0
        %v3769 = vpop.f32.mrf.mxu0
        %v3770 = vadd.f32 0.0, %v3769
        %v3771 = vpop.f32.mrf.mxu0
        %3772 = vmatprep.mubr.bf16.mxu0 0
        %3773 = vmatmul.mubr.bf16.gmra.mxu0 %v3657
        %v3774 = vpop.f32.mrf.mxu0
        %v3775 = vadd.f32 0.0, %v3774
        %v3776 = vpop.f32.mrf.mxu0
        %v3777 = vpop.f32.mrf.mxu0
        %v3778 = vadd.f32 0.0, %v3777
        %v3779 = vpop.f32.mrf.mxu0
        %3780 = vmatprep.mubr.bf16.mxu0 0
        %3781 = vmatmul.mubr.bf16.gmra.mxu0 %v3659
        %v3782 = vpop.f32.mrf.mxu0
        %v3783 = vadd.f32 0.0, %v3782
        %v3784 = vpop.f32.mrf.mxu0
        %v3785 = vpop.f32.mrf.mxu0
        %v3786 = vadd.f32 0.0, %v3785
        %v3787 = vpop.f32.mrf.mxu0
        %3788 = vmatprep.mubr.bf16.mxu0 0
        %3789 = vmatmul.mubr.bf16.gmra.mxu0 %v3661
        %v3790 = vpop.f32.mrf.mxu0
        %v3791 = vadd.f32 0.0, %v3790
        %v3792 = vpop.f32.mrf.mxu0
        %v3793 = vpop.f32.mrf.mxu0
        %v3794 = vadd.f32 0.0, %v3793
        %v3795 = vpop.f32.mrf.mxu0
        %3796 = vmatprep.mubr.bf16.mxu0 0
        %3797 = vmatmul.mubr.bf16.gmra.mxu0 %v3663
        %v3798 = vpop.f32.mrf.mxu0
        %v3799 = vadd.f32 0.0, %v3798
        %v3800 = vpop.f32.mrf.mxu0
        %v3801 = vpop.f32.mrf.mxu0
        %v3802 = vadd.f32 0.0, %v3801
        %v3803 = vpop.f32.mrf.mxu0
        %3804 = vmatprep.mubr.bf16.mxu0 0
        %3805 = vmatmul.mubr.bf16.gmra.mxu0 %v3665
        %v3806 = vpop.f32.mrf.mxu0
        %v3807 = vadd.f32 0.0, %v3806
        %v3808 = vpop.f32.mrf.mxu0
        %v3809 = vpop.f32.mrf.mxu0
        %v3810 = vadd.f32 0.0, %v3809
        %v3811 = vpop.f32.mrf.mxu0
        %3812 = vmatprep.mubr.bf16.mxu0 0
        %3813 = vmatmul.mubr.bf16.gmra.mxu0 %v3667
        %v3814 = vpop.f32.mrf.mxu0
        %v3815 = vadd.f32 0.0, %v3814
        %v3816 = vpop.f32.mrf.mxu0
        %v3817 = vpop.f32.mrf.mxu0
        %v3818 = vadd.f32 0.0, %v3817
        %v3819 = vpop.f32.mrf.mxu0
        %3820 = vdwg.mxu0
        %v3821 = vadd.f32 %v3529, %v3759
        %v3822 = vadd.f32 %v3532, %v3762
        %v3823 = vadd.f32 %v3537, %v3767
        %v3824 = vadd.f32 %v3540, %v3770
        %v3825 = vadd.f32 %v3545, %v3775
        %v3826 = vadd.f32 %v3548, %v3778
        %v3827 = vadd.f32 %v3553, %v3783
        %v3828 = vadd.f32 %v3556, %v3786
        %v3829 = vadd.f32 %v3561, %v3791
        %v3830 = vadd.f32 %v3564, %v3794
        %v3831 = vadd.f32 %v3569, %v3799
        %v3832 = vadd.f32 %v3572, %v3802
        %v3833 = vadd.f32 %v3577, %v3807
        %v3834 = vadd.f32 %v3580, %v3810
        %v3835 = vadd.f32 %v3585, %v3815
        %v3836 = vadd.f32 %v3588, %v3818
        %v3837 = vld [vmem:[%s327 + $0x4c] sm:$0xc]
        %v3838 = vld [vmem:[%s327 + $0x8c] sm:$0x3]
        %v3841 = vunpack.c.l.b16 %v3837
        %v3842 = vunpack.c.l.b16 %v3838
        %v3843 = vpack.c.b16 %v389, %v3841
        %v3844 = vpack.c.b16 %v3842, %v3842
        %v3845 = vrot.slane %v3843, 2
        %v3846 = vrot.slane %v1560, 2
        %v3847 = vsel %vm3420, %v3845, %v3846
        %v3848 = vrot.slane %v1561, 2
        %v3849 = vsel %vm3420, %v3846, %v3848
        %v3850 = vrot.slane %v1562, 2
        %v3851 = vsel %vm3420, %v3848, %v3850
        %v3852 = vrot.slane %v1563, 2
        %v3853 = vsel %vm3420, %v3850, %v3852
        %v3854 = vrot.slane %v1564, 2
        %v3855 = vsel %vm3420, %v3852, %v3854
        %v3856 = vrot.slane %v1565, 2
        %v3857 = vsel %vm3420, %v3854, %v3856
        %v3858 = vrot.slane %v1566, 2
        %v3859 = vsel %vm3420, %v3856, %v3858
        %v3860 = vrot.slane %v3844, 2
        %v3861 = vsel %vm3420, %v3858, %v3860
        %v3886 = vunpack.c.l.b16 %v3093
        %v3887 = vunpack.c.l.b16 %v3094
        %v3888 = vunpack.c.l.b16 %v3095
        %v3889 = vunpack.c.l.b16 %v3096
        %v3890 = vunpack.c.l.b16 %v3097
        %v3891 = vunpack.c.l.b16 %v3098
        %v3892 = vunpack.c.l.b16 %v3099
        %v3893 = vunpack.c.l.b16 %v3100
        %v3894 = vunpack.c.l.b16 %v3101
        %v3895 = vunpack.c.l.b16 %v3102
        %v3896 = vunpack.c.l.b16 %v3103
        %v3897 = vunpack.c.l.b16 %v3104
        %v3898 = vunpack.c.l.b16 %v3105
        %v3899 = vunpack.c.l.b16 %v3106
        %v3900 = vunpack.c.l.b16 %v3107
        %v3901 = vunpack.c.l.b16 %v3108
        %v3902 = vpack.c.b16 %v3887, %v3886
        %v3903 = vpack.c.b16 %v3889, %v3888
        %v3904 = vpack.c.b16 %v3891, %v3890
        %v3905 = vpack.c.b16 %v3893, %v3892
        %v3906 = vpack.c.b16 %v3895, %v3894
        %v3907 = vpack.c.b16 %v3897, %v3896
        %v3908 = vpack.c.b16 %v3899, %v3898
        %v3909 = vpack.c.b16 %v3901, %v3900
        %3918 = vmatprep.subr.bf16.mxu0 0
        %3919 = vmatpush1.bf16.msra.mxu0 %v3909
        %3920 = vmatprep.subr.bf16.mxu0 0
        %3921 = vmatpush1.bf16.msra.mxu0 %v3908
        %3922 = vmatprep.subr.bf16.mxu0 0
        %3923 = vmatpush1.bf16.msra.mxu0 %v3907
        %3924 = vmatprep.subr.bf16.mxu0 0
        %3925 = vmatpush1.bf16.msra.mxu0 %v3906
        %3926 = vmatprep.subr.bf16.mxu0 0
        %3927 = vmatpush1.bf16.msra.mxu0 %v3905
        %3928 = vmatprep.subr.bf16.mxu0 0
        %3929 = vmatpush1.bf16.msra.mxu0 %v3904
        %3930 = vmatprep.subr.bf16.mxu0 0
        %3931 = vmatpush1.bf16.msra.mxu0 %v3903
        %3932 = vmatprep.subr.bf16.mxu0 0
        %3933 = vmatpush1.bf16.msra.mxu0 %v3902
        %3934 = vmatprep.subr.bf16.mxu0 0
        %3935 = vmatpush2.bf16.msra.mxu0 0
        %3936 = vmatprep.subr.bf16.mxu0 0
        %3937 = vmatpush2.bf16.msra.mxu0 0
        %3938 = vmatprep.subr.bf16.mxu0 0
        %3939 = vmatpush2.bf16.msra.mxu0 0
        %3940 = vmatprep.subr.bf16.mxu0 0
        %3941 = vmatpush2.bf16.msra.mxu0 0
        %3942 = vmatprep.subr.bf16.mxu0 0
        %3943 = vmatpush2.bf16.msra.mxu0 0
        %3944 = vmatprep.subr.bf16.mxu0 0
        %3945 = vmatpush2.bf16.msra.mxu0 0
        %3946 = vmatprep.subr.bf16.mxu0 0
        %3947 = vmatpush2.bf16.msra.mxu0 0
        %3948 = vmatprep.subr.bf16.mxu0 0
        %3949 = vmatpush2.bf16.msra.mxu0 0
        %3950 = vmatprep.mubr.bf16.mxu0 0
        %3951 = vmatmul.mubr.bf16.gmra.mxu0 %v3847
        %v3952 = vpop.f32.mrf.mxu0
        %v3953 = vadd.f32 0.0, %v3952
        %v3954 = vpop.f32.mrf.mxu0
        %v3955 = vpop.f32.mrf.mxu0
        %v3956 = vadd.f32 0.0, %v3955
        %v3957 = vpop.f32.mrf.mxu0
        %3958 = vmatprep.mubr.bf16.mxu0 0
        %3959 = vmatmul.mubr.bf16.gmra.mxu0 %v3849
        %v3960 = vpop.f32.mrf.mxu0
        %v3961 = vadd.f32 0.0, %v3960
        %v3962 = vpop.f32.mrf.mxu0
        %v3963 = vpop.f32.mrf.mxu0
        %v3964 = vadd.f32 0.0, %v3963
        %v3965 = vpop.f32.mrf.mxu0
        %3966 = vmatprep.mubr.bf16.mxu0 0
        %3967 = vmatmul.mubr.bf16.gmra.mxu0 %v3851
        %v3968 = vpop.f32.mrf.mxu0
        %v3969 = vadd.f32 0.0, %v3968
        %v3970 = vpop.f32.mrf.mxu0
        %v3971 = vpop.f32.mrf.mxu0
        %v3972 = vadd.f32 0.0, %v3971
        %v3973 = vpop.f32.mrf.mxu0
        %3974 = vmatprep.mubr.bf16.mxu0 0
        %3975 = vmatmul.mubr.bf16.gmra.mxu0 %v3853
        %v3976 = vpop.f32.mrf.mxu0
        %v3977 = vadd.f32 0.0, %v3976
        %v3978 = vpop.f32.mrf.mxu0
        %v3979 = vpop.f32.mrf.mxu0
        %v3980 = vadd.f32 0.0, %v3979
        %v3981 = vpop.f32.mrf.mxu0
        %3982 = vmatprep.mubr.bf16.mxu0 0
        %3983 = vmatmul.mubr.bf16.gmra.mxu0 %v3855
        %v3984 = vpop.f32.mrf.mxu0
        %v3985 = vadd.f32 0.0, %v3984
        %v3986 = vpop.f32.mrf.mxu0
        %v3987 = vpop.f32.mrf.mxu0
        %v3988 = vadd.f32 0.0, %v3987
        %v3989 = vpop.f32.mrf.mxu0
        %3990 = vmatprep.mubr.bf16.mxu0 0
        %3991 = vmatmul.mubr.bf16.gmra.mxu0 %v3857
        %v3992 = vpop.f32.mrf.mxu0
        %v3993 = vadd.f32 0.0, %v3992
        %v3994 = vpop.f32.mrf.mxu0
        %v3995 = vpop.f32.mrf.mxu0
        %v3996 = vadd.f32 0.0, %v3995
        %v3997 = vpop.f32.mrf.mxu0
        %3998 = vmatprep.mubr.bf16.mxu0 0
        %3999 = vmatmul.mubr.bf16.gmra.mxu0 %v3859
        %v4000 = vpop.f32.mrf.mxu0
        %v4001 = vadd.f32 0.0, %v4000
        %v4002 = vpop.f32.mrf.mxu0
        %v4003 = vpop.f32.mrf.mxu0
        %v4004 = vadd.f32 0.0, %v4003
        %v4005 = vpop.f32.mrf.mxu0
        %4006 = vmatprep.mubr.bf16.mxu0 0
        %4007 = vmatmul.mubr.bf16.gmra.mxu0 %v3861
        %v4008 = vpop.f32.mrf.mxu0
        %v4009 = vadd.f32 0.0, %v4008
        %v4010 = vpop.f32.mrf.mxu0
        %v4011 = vpop.f32.mrf.mxu0
        %v4012 = vadd.f32 0.0, %v4011
        %v4013 = vpop.f32.mrf.mxu0
        %4014 = vdwg.mxu0
        %v4015 = vadd.f32 %v3821, %v3953
        %v4016 = vadd.f32 %v3822, %v3956
        %v4017 = vadd.f32 %v3823, %v3961
        %v4018 = vadd.f32 %v3824, %v3964
        %v4019 = vadd.f32 %v3825, %v3969
        %v4020 = vadd.f32 %v3826, %v3972
        %v4021 = vadd.f32 %v3827, %v3977
        %v4022 = vadd.f32 %v3828, %v3980
        %v4023 = vadd.f32 %v3829, %v3985
        %v4024 = vadd.f32 %v3830, %v3988
        %v4025 = vadd.f32 %v3831, %v3993
        %v4026 = vadd.f32 %v3832, %v3996
        %v4027 = vadd.f32 %v3833, %v4001
        %v4028 = vadd.f32 %v3834, %v4004
        %v4029 = vadd.f32 %v3835, %v4009
        %v4030 = vadd.f32 %v3836, %v4012
        %v4047 = vunpack.c.l.b16 %v3110
        %v4048 = vunpack.c.l.b16 %v3111
        %v4049 = vunpack.c.l.b16 %v3112
        %v4050 = vunpack.c.l.b16 %v3113
        %v4051 = vunpack.c.l.b16 %v3114
        %v4052 = vunpack.c.l.b16 %v3115
        %v4053 = vunpack.c.l.b16 %v3116
        %v4054 = vunpack.c.l.b16 %v3117
        %v4055 = vunpack.c.l.b16 %v3118
        %v4056 = vunpack.c.l.b16 %v3119
        %v4057 = vunpack.c.l.b16 %v3120
        %v4058 = vunpack.c.l.b16 %v3121
        %v4059 = vunpack.c.l.b16 %v3122
        %v4060 = vunpack.c.l.b16 %v3123
        %v4061 = vunpack.c.l.b16 %v3124
        %v4062 = vunpack.c.l.b16 %v3125
        %v4063 = vpack.c.b16 %v4048, %v4047
        %v4064 = vpack.c.b16 %v4050, %v4049
        %v4065 = vpack.c.b16 %v4052, %v4051
        %v4066 = vpack.c.b16 %v4054, %v4053
        %v4067 = vpack.c.b16 %v4056, %v4055
        %v4068 = vpack.c.b16 %v4058, %v4057
        %v4069 = vpack.c.b16 %v4060, %v4059
        %v4070 = vpack.c.b16 %v4062, %v4061
        %4079 = vmatprep.subr.bf16.mxu0 0
        %4080 = vmatpush1.bf16.msra.mxu0 %v4070
        %4081 = vmatprep.subr.bf16.mxu0 0
        %4082 = vmatpush1.bf16.msra.mxu0 %v4069
        %4083 = vmatprep.subr.bf16.mxu0 0
        %4084 = vmatpush1.bf16.msra.mxu0 %v4068
        %4085 = vmatprep.subr.bf16.mxu0 0
        %4086 = vmatpush1.bf16.msra.mxu0 %v4067
        %4087 = vmatprep.subr.bf16.mxu0 0
        %4088 = vmatpush1.bf16.msra.mxu0 %v4066
        %4089 = vmatprep.subr.bf16.mxu0 0
        %4090 = vmatpush1.bf16.msra.mxu0 %v4065
        %4091 = vmatprep.subr.bf16.mxu0 0
        %4092 = vmatpush1.bf16.msra.mxu0 %v4064
        %4093 = vmatprep.subr.bf16.mxu0 0
        %4094 = vmatpush1.bf16.msra.mxu0 %v4063
        %4095 = vmatprep.subr.bf16.mxu0 0
        %4096 = vmatpush2.bf16.msra.mxu0 0
        %4097 = vmatprep.subr.bf16.mxu0 0
        %4098 = vmatpush2.bf16.msra.mxu0 0
        %4099 = vmatprep.subr.bf16.mxu0 0
        %4100 = vmatpush2.bf16.msra.mxu0 0
        %4101 = vmatprep.subr.bf16.mxu0 0
        %4102 = vmatpush2.bf16.msra.mxu0 0
        %4103 = vmatprep.subr.bf16.mxu0 0
        %4104 = vmatpush2.bf16.msra.mxu0 0
        %4105 = vmatprep.subr.bf16.mxu0 0
        %4106 = vmatpush2.bf16.msra.mxu0 0
        %4107 = vmatprep.subr.bf16.mxu0 0
        %4108 = vmatpush2.bf16.msra.mxu0 0
        %4109 = vmatprep.subr.bf16.mxu0 0
        %4110 = vmatpush2.bf16.msra.mxu0 0
        %4111 = vmatprep.mubr.bf16.mxu0 0
        %4112 = vmatmul.mubr.bf16.gmra.mxu0 %v405
        %v4113 = vpop.f32.mrf.mxu0
        %v4114 = vadd.f32 0.0, %v4113
        %v4115 = vpop.f32.mrf.mxu0
        %v4116 = vpop.f32.mrf.mxu0
        %v4117 = vadd.f32 0.0, %v4116
        %v4118 = vpop.f32.mrf.mxu0
        %4119 = vmatprep.mubr.bf16.mxu0 0
        %4120 = vmatmul.mubr.bf16.gmra.mxu0 %v406
        %v4121 = vpop.f32.mrf.mxu0
        %v4122 = vadd.f32 0.0, %v4121
        %v4123 = vpop.f32.mrf.mxu0
        %v4124 = vpop.f32.mrf.mxu0
        %v4125 = vadd.f32 0.0, %v4124
        %v4126 = vpop.f32.mrf.mxu0
        %4127 = vmatprep.mubr.bf16.mxu0 0
        %4128 = vmatmul.mubr.bf16.gmra.mxu0 %v407
        %v4129 = vpop.f32.mrf.mxu0
        %v4130 = vadd.f32 0.0, %v4129
        %v4131 = vpop.f32.mrf.mxu0
        %v4132 = vpop.f32.mrf.mxu0
        %v4133 = vadd.f32 0.0, %v4132
        %v4134 = vpop.f32.mrf.mxu0
        %4135 = vmatprep.mubr.bf16.mxu0 0
        %4136 = vmatmul.mubr.bf16.gmra.mxu0 %v408
        %v4137 = vpop.f32.mrf.mxu0
        %v4138 = vadd.f32 0.0, %v4137
        %v4139 = vpop.f32.mrf.mxu0
        %v4140 = vpop.f32.mrf.mxu0
        %v4141 = vadd.f32 0.0, %v4140
        %v4142 = vpop.f32.mrf.mxu0
        %4143 = vmatprep.mubr.bf16.mxu0 0
        %4144 = vmatmul.mubr.bf16.gmra.mxu0 %v409
        %v4145 = vpop.f32.mrf.mxu0
        %v4146 = vadd.f32 0.0, %v4145
        %v4147 = vpop.f32.mrf.mxu0
        %v4148 = vpop.f32.mrf.mxu0
        %v4149 = vadd.f32 0.0, %v4148
        %v4150 = vpop.f32.mrf.mxu0
        %4151 = vmatprep.mubr.bf16.mxu0 0
        %4152 = vmatmul.mubr.bf16.gmra.mxu0 %v410
        %v4153 = vpop.f32.mrf.mxu0
        %v4154 = vadd.f32 0.0, %v4153
        %v4155 = vpop.f32.mrf.mxu0
        %v4156 = vpop.f32.mrf.mxu0
        %v4157 = vadd.f32 0.0, %v4156
        %v4158 = vpop.f32.mrf.mxu0
        %4159 = vmatprep.mubr.bf16.mxu0 0
        %4160 = vmatmul.mubr.bf16.gmra.mxu0 %v411
        %v4161 = vpop.f32.mrf.mxu0
        %v4162 = vadd.f32 0.0, %v4161
        %v4163 = vpop.f32.mrf.mxu0
        %v4164 = vpop.f32.mrf.mxu0
        %v4165 = vadd.f32 0.0, %v4164
        %v4166 = vpop.f32.mrf.mxu0
        %4167 = vmatprep.mubr.bf16.mxu0 0
        %4168 = vmatmul.mubr.bf16.gmra.mxu0 %v412
        %v4169 = vpop.f32.mrf.mxu0
        %v4170 = vadd.f32 0.0, %v4169
        %v4171 = vpop.f32.mrf.mxu0
        %v4172 = vpop.f32.mrf.mxu0
        %v4173 = vadd.f32 0.0, %v4172
        %v4174 = vpop.f32.mrf.mxu0
        %4175 = vdwg.mxu0
        %v4176 = vadd.f32 %v4015, %v4114
        %v4177 = vadd.f32 %v4016, %v4117
        %v4178 = vadd.f32 %v4017, %v4122
        %v4179 = vadd.f32 %v4018, %v4125
        %v4180 = vadd.f32 %v4019, %v4130
        %v4181 = vadd.f32 %v4020, %v4133
        %v4182 = vadd.f32 %v4021, %v4138
        %v4183 = vadd.f32 %v4022, %v4141
        %v4184 = vadd.f32 %v4023, %v4146
        %v4185 = vadd.f32 %v4024, %v4149
        %v4186 = vadd.f32 %v4025, %v4154
        %v4187 = vadd.f32 %v4026, %v4157
        %v4188 = vadd.f32 %v4027, %v4162
        %v4189 = vadd.f32 %v4028, %v4165
        %v4190 = vadd.f32 %v4029, %v4170
        %v4191 = vadd.f32 %v4030, %v4173
        %v4192 = vld [vmem:[%s327 + $0x50] sm:$0xc]
        %v4193 = vld [vmem:[%s327 + $0x90] sm:$0x3]
        %v4196 = vunpack.c.l.b16 %v4192
        %v4197 = vunpack.c.l.b16 %v4193
        %v4198 = vpack.c.b16 %v1950, %v4196
        %v4199 = vpack.c.b16 %v4197, %v4197
        %v4200 = vrot.slane %v4198, 2
        %v4201 = vrot.slane %v1967, 2
        %v4202 = vsel %vm3420, %v4200, %v4201
        %v4203 = vrot.slane %v1968, 2
        %v4204 = vsel %vm3420, %v4201, %v4203
        %v4205 = vrot.slane %v1969, 2
        %v4206 = vsel %vm3420, %v4203, %v4205
        %v4207 = vrot.slane %v1970, 2
        %v4208 = vsel %vm3420, %v4205, %v4207
        %v4209 = vrot.slane %v1971, 2
        %v4210 = vsel %vm3420, %v4207, %v4209
        %v4211 = vrot.slane %v1972, 2
        %v4212 = vsel %vm3420, %v4209, %v4211
        %v4213 = vrot.slane %v1973, 2
        %v4214 = vsel %vm3420, %v4211, %v4213
        %v4215 = vrot.slane %v4199, 2
        %v4216 = vsel %vm3420, %v4213, %v4215
        %v4241 = vunpack.c.l.b16 %v3127
        %v4242 = vunpack.c.l.b16 %v3128
        %v4243 = vunpack.c.l.b16 %v3129
        %v4244 = vunpack.c.l.b16 %v3130
        %v4245 = vunpack.c.l.b16 %v3131
        %v4246 = vunpack.c.l.b16 %v3132
        %v4247 = vunpack.c.l.b16 %v3133
        %v4248 = vunpack.c.l.b16 %v3134
        %v4249 = vunpack.c.l.b16 %v3135
        %v4250 = vunpack.c.l.b16 %v3136
        %v4251 = vunpack.c.l.b16 %v3137
        %v4252 = vunpack.c.l.b16 %v3138
        %v4253 = vunpack.c.l.b16 %v3139
        %v4254 = vunpack.c.l.b16 %v3140
        %v4255 = vunpack.c.l.b16 %v3141
        %v4256 = vunpack.c.l.b16 %v3142
        %v4257 = vpack.c.b16 %v4242, %v4241
        %v4258 = vpack.c.b16 %v4244, %v4243
        %v4259 = vpack.c.b16 %v4246, %v4245
        %v4260 = vpack.c.b16 %v4248, %v4247
        %v4261 = vpack.c.b16 %v4250, %v4249
        %v4262 = vpack.c.b16 %v4252, %v4251
        %v4263 = vpack.c.b16 %v4254, %v4253
        %v4264 = vpack.c.b16 %v4256, %v4255
        %4273 = vmatprep.subr.bf16.mxu0 0
        %4274 = vmatpush1.bf16.msra.mxu0 %v4264
        %4275 = vmatprep.subr.bf16.mxu0 0
        %4276 = vmatpush1.bf16.msra.mxu0 %v4263
        %4277 = vmatprep.subr.bf16.mxu0 0
        %4278 = vmatpush1.bf16.msra.mxu0 %v4262
        %4279 = vmatprep.subr.bf16.mxu0 0
        %4280 = vmatpush1.bf16.msra.mxu0 %v4261
        %4281 = vmatprep.subr.bf16.mxu0 0
        %4282 = vmatpush1.bf16.msra.mxu0 %v4260
        %4283 = vmatprep.subr.bf16.mxu0 0
        %4284 = vmatpush1.bf16.msra.mxu0 %v4259
        %4285 = vmatprep.subr.bf16.mxu0 0
        %4286 = vmatpush1.bf16.msra.mxu0 %v4258
        %4287 = vmatprep.subr.bf16.mxu0 0
        %4288 = vmatpush1.bf16.msra.mxu0 %v4257
        %4289 = vmatprep.subr.bf16.mxu0 0
        %4290 = vmatpush2.bf16.msra.mxu0 0
        %4291 = vmatprep.subr.bf16.mxu0 0
        %4292 = vmatpush2.bf16.msra.mxu0 0
        %4293 = vmatprep.subr.bf16.mxu0 0
        %4294 = vmatpush2.bf16.msra.mxu0 0
        %4295 = vmatprep.subr.bf16.mxu0 0
        %4296 = vmatpush2.bf16.msra.mxu0 0
        %4297 = vmatprep.subr.bf16.mxu0 0
        %4298 = vmatpush2.bf16.msra.mxu0 0
        %4299 = vmatprep.subr.bf16.mxu0 0
        %4300 = vmatpush2.bf16.msra.mxu0 0
        %4301 = vmatprep.subr.bf16.mxu0 0
        %4302 = vmatpush2.bf16.msra.mxu0 0
        %4303 = vmatprep.subr.bf16.mxu0 0
        %4304 = vmatpush2.bf16.msra.mxu0 0
        %4305 = vmatprep.mubr.bf16.mxu0 0
        %4306 = vmatmul.mubr.bf16.gmra.mxu0 %v4202
        %v4307 = vpop.f32.mrf.mxu0
        %v4308 = vadd.f32 0.0, %v4307
        %v4309 = vpop.f32.mrf.mxu0
        %v4310 = vpop.f32.mrf.mxu0
        %v4311 = vadd.f32 0.0, %v4310
        %v4312 = vpop.f32.mrf.mxu0
        %4313 = vmatprep.mubr.bf16.mxu0 0
        %4314 = vmatmul.mubr.bf16.gmra.mxu0 %v4204
        %v4315 = vpop.f32.mrf.mxu0
        %v4316 = vadd.f32 0.0, %v4315
        %v4317 = vpop.f32.mrf.mxu0
        %v4318 = vpop.f32.mrf.mxu0
        %v4319 = vadd.f32 0.0, %v4318
        %v4320 = vpop.f32.mrf.mxu0
        %4321 = vmatprep.mubr.bf16.mxu0 0
        %4322 = vmatmul.mubr.bf16.gmra.mxu0 %v4206
        %v4323 = vpop.f32.mrf.mxu0
        %v4324 = vadd.f32 0.0, %v4323
        %v4325 = vpop.f32.mrf.mxu0
        %v4326 = vpop.f32.mrf.mxu0
        %v4327 = vadd.f32 0.0, %v4326
        %v4328 = vpop.f32.mrf.mxu0
        %4329 = vmatprep.mubr.bf16.mxu0 0
        %4330 = vmatmul.mubr.bf16.gmra.mxu0 %v4208
        %v4331 = vpop.f32.mrf.mxu0
        %v4332 = vadd.f32 0.0, %v4331
        %v4333 = vpop.f32.mrf.mxu0
        %v4334 = vpop.f32.mrf.mxu0
        %v4335 = vadd.f32 0.0, %v4334
        %v4336 = vpop.f32.mrf.mxu0
        %4337 = vmatprep.mubr.bf16.mxu0 0
        %4338 = vmatmul.mubr.bf16.gmra.mxu0 %v4210
        %v4339 = vpop.f32.mrf.mxu0
        %v4340 = vadd.f32 0.0, %v4339
        %v4341 = vpop.f32.mrf.mxu0
        %v4342 = vpop.f32.mrf.mxu0
        %v4343 = vadd.f32 0.0, %v4342
        %v4344 = vpop.f32.mrf.mxu0
        %4345 = vmatprep.mubr.bf16.mxu0 0
        %4346 = vmatmul.mubr.bf16.gmra.mxu0 %v4212
        %v4347 = vpop.f32.mrf.mxu0
        %v4348 = vadd.f32 0.0, %v4347
        %v4349 = vpop.f32.mrf.mxu0
        %v4350 = vpop.f32.mrf.mxu0
        %v4351 = vadd.f32 0.0, %v4350
        %v4352 = vpop.f32.mrf.mxu0
        %4353 = vmatprep.mubr.bf16.mxu0 0
        %4354 = vmatmul.mubr.bf16.gmra.mxu0 %v4214
        %v4355 = vpop.f32.mrf.mxu0
        %v4356 = vadd.f32 0.0, %v4355
        %v4357 = vpop.f32.mrf.mxu0
        %v4358 = vpop.f32.mrf.mxu0
        %v4359 = vadd.f32 0.0, %v4358
        %v4360 = vpop.f32.mrf.mxu0
        %4361 = vmatprep.mubr.bf16.mxu0 0
        %4362 = vmatmul.mubr.bf16.gmra.mxu0 %v4216
        %v4363 = vpop.f32.mrf.mxu0
        %v4364 = vadd.f32 0.0, %v4363
        %v4365 = vpop.f32.mrf.mxu0
        %v4366 = vpop.f32.mrf.mxu0
        %v4367 = vadd.f32 0.0, %v4366
        %v4368 = vpop.f32.mrf.mxu0
        %4369 = vdwg.mxu0
        %v4370 = vadd.f32 %v4176, %v4308
        %v4371 = vadd.f32 %v4177, %v4311
        %v4372 = vadd.f32 %v4178, %v4316
        %v4373 = vadd.f32 %v4179, %v4319
        %v4374 = vadd.f32 %v4180, %v4324
        %v4375 = vadd.f32 %v4181, %v4327
        %v4376 = vadd.f32 %v4182, %v4332
        %v4377 = vadd.f32 %v4183, %v4335
        %v4378 = vadd.f32 %v4184, %v4340
        %v4379 = vadd.f32 %v4185, %v4343
        %v4380 = vadd.f32 %v4186, %v4348
        %v4381 = vadd.f32 %v4187, %v4351
        %v4382 = vadd.f32 %v4188, %v4356
        %v4383 = vadd.f32 %v4189, %v4359
        %v4384 = vadd.f32 %v4190, %v4364
        %v4385 = vadd.f32 %v4191, %v4367
        %v4386 = vld [vmem:[%s327 + $0x8c] sm:$0xc]
        %v4387 = vld [vmem:[%s327 + $0x90] sm:$0xf]
        %v4388 = vld [vmem:[%s327 + $0x94] sm:$0xf]
        %v4389 = vld [vmem:[%s327 + $0x98] sm:$0xf]
        %v4390 = vld [vmem:[%s327 + $0x9c] sm:$0xf]
        %v4391 = vld [vmem:[%s327 + $0xa0] sm:$0xf]
        %v4392 = vld [vmem:[%s327 + $0xa4] sm:$0xf]
        %v4393 = vld [vmem:[%s327 + $0xa8] sm:$0xf]
        %v4394 = vld [vmem:[%s327 + $0xac] sm:$0xf]
        %v4395 = vld [vmem:[%s327 + $0xb0] sm:$0xf]
        %v4396 = vld [vmem:[%s327 + $0xb4] sm:$0xf]
        %v4397 = vld [vmem:[%s327 + $0xb8] sm:$0xf]
        %v4398 = vld [vmem:[%s327 + $0xbc] sm:$0xf]
        %v4399 = vld [vmem:[%s327 + $0xc0] sm:$0xf]
        %v4400 = vld [vmem:[%s327 + $0xc4] sm:$0xf]
        %v4401 = vld [vmem:[%s327 + $0xc8] sm:$0xf]
        %v4402 = vld [vmem:[%s327 + $0xcc] sm:$0x3]
        %v4420 = vunpack.c.l.b16 %v4386
        %v4421 = vunpack.c.l.b16 %v4387
        %v4422 = vunpack.c.l.b16 %v4388
        %v4423 = vunpack.c.l.b16 %v4389
        %v4424 = vunpack.c.l.b16 %v4390
        %v4425 = vunpack.c.l.b16 %v4391
        %v4426 = vunpack.c.l.b16 %v4392
        %v4427 = vunpack.c.l.b16 %v4393
        %v4428 = vunpack.c.l.b16 %v4394
        %v4429 = vunpack.c.l.b16 %v4395
        %v4430 = vunpack.c.l.b16 %v4396
        %v4431 = vunpack.c.l.b16 %v4397
        %v4432 = vunpack.c.l.b16 %v4398
        %v4433 = vunpack.c.l.b16 %v4399
        %v4434 = vunpack.c.l.b16 %v4400
        %v4435 = vunpack.c.l.b16 %v4401
        %v4436 = vunpack.c.l.b16 %v4402
        %v4437 = vpack.c.b16 %v4421, %v4420
        %v4438 = vpack.c.b16 %v4423, %v4422
        %v4439 = vpack.c.b16 %v4425, %v4424
        %v4440 = vpack.c.b16 %v4427, %v4426
        %v4441 = vpack.c.b16 %v4429, %v4428
        %v4442 = vpack.c.b16 %v4431, %v4430
        %v4443 = vpack.c.b16 %v4433, %v4432
        %v4444 = vpack.c.b16 %v4435, %v4434
        %v4445 = vpack.c.b16 %v4436, %v4436
        %v4446 = vrot.slane %v4437, 2
        %v4447 = vrot.slane %v4438, 2
        %v4448 = vsel %vm3420, %v4446, %v4447
        %v4449 = vrot.slane %v4439, 2
        %v4450 = vsel %vm3420, %v4447, %v4449
        %v4451 = vrot.slane %v4440, 2
        %v4452 = vsel %vm3420, %v4449, %v4451
        %v4453 = vrot.slane %v4441, 2
        %v4454 = vsel %vm3420, %v4451, %v4453
        %v4455 = vrot.slane %v4442, 2
        %v4456 = vsel %vm3420, %v4453, %v4455
        %v4457 = vrot.slane %v4443, 2
        %v4458 = vsel %vm3420, %v4455, %v4457
        %v4459 = vrot.slane %v4444, 2
        %v4460 = vsel %vm3420, %v4457, %v4459
        %v4461 = vrot.slane %v4445, 2
        %v4462 = vsel %vm3420, %v4459, %v4461
        %v4487 = vunpack.c.l.b16 %v3144
        %v4488 = vunpack.c.l.b16 %v3145
        %v4489 = vunpack.c.l.b16 %v3146
        %v4490 = vunpack.c.l.b16 %v3147
        %v4491 = vunpack.c.l.b16 %v3148
        %v4492 = vunpack.c.l.b16 %v3149
        %v4493 = vunpack.c.l.b16 %v3150
        %v4494 = vunpack.c.l.b16 %v3151
        %v4495 = vunpack.c.l.b16 %v3152
        %v4496 = vunpack.c.l.b16 %v3153
        %v4497 = vunpack.c.l.b16 %v3154
        %v4498 = vunpack.c.l.b16 %v3155
        %v4499 = vunpack.c.l.b16 %v3156
        %v4500 = vunpack.c.l.b16 %v3157
        %v4501 = vunpack.c.l.b16 %v3158
        %v4502 = vunpack.c.l.b16 %v3159
        %v4503 = vpack.c.b16 %v4488, %v4487
        %v4504 = vpack.c.b16 %v4490, %v4489
        %v4505 = vpack.c.b16 %v4492, %v4491
        %v4506 = vpack.c.b16 %v4494, %v4493
        %v4507 = vpack.c.b16 %v4496, %v4495
        %v4508 = vpack.c.b16 %v4498, %v4497
        %v4509 = vpack.c.b16 %v4500, %v4499
        %v4510 = vpack.c.b16 %v4502, %v4501
        %4519 = vmatprep.subr.bf16.mxu0 0
        %4520 = vmatpush1.bf16.msra.mxu0 %v4510
        %4521 = vmatprep.subr.bf16.mxu0 0
        %4522 = vmatpush1.bf16.msra.mxu0 %v4509
        %4523 = vmatprep.subr.bf16.mxu0 0
        %4524 = vmatpush1.bf16.msra.mxu0 %v4508
        %4525 = vmatprep.subr.bf16.mxu0 0
        %4526 = vmatpush1.bf16.msra.mxu0 %v4507
        %4527 = vmatprep.subr.bf16.mxu0 0
        %4528 = vmatpush1.bf16.msra.mxu0 %v4506
        %4529 = vmatprep.subr.bf16.mxu0 0
        %4530 = vmatpush1.bf16.msra.mxu0 %v4505
        %4531 = vmatprep.subr.bf16.mxu0 0
        %4532 = vmatpush1.bf16.msra.mxu0 %v4504
        %4533 = vmatprep.subr.bf16.mxu0 0
        %4534 = vmatpush1.bf16.msra.mxu0 %v4503
        %4535 = vmatprep.subr.bf16.mxu0 0
        %4536 = vmatpush2.bf16.msra.mxu0 0
        %4537 = vmatprep.subr.bf16.mxu0 0
        %4538 = vmatpush2.bf16.msra.mxu0 0
        %4539 = vmatprep.subr.bf16.mxu0 0
        %4540 = vmatpush2.bf16.msra.mxu0 0
        %4541 = vmatprep.subr.bf16.mxu0 0
        %4542 = vmatpush2.bf16.msra.mxu0 0
        %4543 = vmatprep.subr.bf16.mxu0 0
        %4544 = vmatpush2.bf16.msra.mxu0 0
        %4545 = vmatprep.subr.bf16.mxu0 0
        %4546 = vmatpush2.bf16.msra.mxu0 0
        %4547 = vmatprep.subr.bf16.mxu0 0
        %4548 = vmatpush2.bf16.msra.mxu0 0
        %4549 = vmatprep.subr.bf16.mxu0 0
        %4550 = vmatpush2.bf16.msra.mxu0 0
        %4551 = vmatprep.mubr.bf16.mxu0 0
        %4552 = vmatmul.mubr.bf16.gmra.mxu0 %v4448
        %v4553 = vpop.f32.mrf.mxu0
        %v4554 = vadd.f32 0.0, %v4553
        %v4555 = vpop.f32.mrf.mxu0
        %v4556 = vpop.f32.mrf.mxu0
        %v4557 = vadd.f32 0.0, %v4556
        %v4558 = vpop.f32.mrf.mxu0
        %4559 = vmatprep.mubr.bf16.mxu0 0
        %4560 = vmatmul.mubr.bf16.gmra.mxu0 %v4450
        %v4561 = vpop.f32.mrf.mxu0
        %v4562 = vadd.f32 0.0, %v4561
        %v4563 = vpop.f32.mrf.mxu0
        %v4564 = vpop.f32.mrf.mxu0
        %v4565 = vadd.f32 0.0, %v4564
        %v4566 = vpop.f32.mrf.mxu0
        %4567 = vmatprep.mubr.bf16.mxu0 0
        %4568 = vmatmul.mubr.bf16.gmra.mxu0 %v4452
        %v4569 = vpop.f32.mrf.mxu0
        %v4570 = vadd.f32 0.0, %v4569
        %v4571 = vpop.f32.mrf.mxu0
        %v4572 = vpop.f32.mrf.mxu0
        %v4573 = vadd.f32 0.0, %v4572
        %v4574 = vpop.f32.mrf.mxu0
        %4575 = vmatprep.mubr.bf16.mxu0 0
        %4576 = vmatmul.mubr.bf16.gmra.mxu0 %v4454
        %v4577 = vpop.f32.mrf.mxu0
        %v4578 = vadd.f32 0.0, %v4577
        %v4579 = vpop.f32.mrf.mxu0
        %v4580 = vpop.f32.mrf.mxu0
        %v4581 = vadd.f32 0.0, %v4580
        %v4582 = vpop.f32.mrf.mxu0
        %4583 = vmatprep.mubr.bf16.mxu0 0
        %4584 = vmatmul.mubr.bf16.gmra.mxu0 %v4456
        %v4585 = vpop.f32.mrf.mxu0
        %v4586 = vadd.f32 0.0, %v4585
        %v4587 = vpop.f32.mrf.mxu0
        %v4588 = vpop.f32.mrf.mxu0
        %v4589 = vadd.f32 0.0, %v4588
        %v4590 = vpop.f32.mrf.mxu0
        %4591 = vmatprep.mubr.bf16.mxu0 0
        %4592 = vmatmul.mubr.bf16.gmra.mxu0 %v4458
        %v4593 = vpop.f32.mrf.mxu0
        %v4594 = vadd.f32 0.0, %v4593
        %v4595 = vpop.f32.mrf.mxu0
        %v4596 = vpop.f32.mrf.mxu0
        %v4597 = vadd.f32 0.0, %v4596
        %v4598 = vpop.f32.mrf.mxu0
        %4599 = vmatprep.mubr.bf16.mxu0 0
        %4600 = vmatmul.mubr.bf16.gmra.mxu0 %v4460
        %v4601 = vpop.f32.mrf.mxu0
        %v4602 = vadd.f32 0.0, %v4601
        %v4603 = vpop.f32.mrf.mxu0
        %v4604 = vpop.f32.mrf.mxu0
        %v4605 = vadd.f32 0.0, %v4604
        %v4606 = vpop.f32.mrf.mxu0
        %4607 = vmatprep.mubr.bf16.mxu0 0
        %4608 = vmatmul.mubr.bf16.gmra.mxu0 %v4462
        %v4609 = vpop.f32.mrf.mxu0
        %v4610 = vadd.f32 0.0, %v4609
        %v4611 = vpop.f32.mrf.mxu0
        %v4612 = vpop.f32.mrf.mxu0
        %v4613 = vadd.f32 0.0, %v4612
        %v4614 = vpop.f32.mrf.mxu0
        %4615 = vdwg.mxu0
        %v4616 = vadd.f32 %v4370, %v4554
        %v4617 = vadd.f32 %v4371, %v4557
        %v4618 = vadd.f32 %v4372, %v4562
        %v4619 = vadd.f32 %v4373, %v4565
        %v4620 = vadd.f32 %v4374, %v4570
        %v4621 = vadd.f32 %v4375, %v4573
        %v4622 = vadd.f32 %v4376, %v4578
        %v4623 = vadd.f32 %v4377, %v4581
        %v4624 = vadd.f32 %v4378, %v4586
        %v4625 = vadd.f32 %v4379, %v4589
        %v4626 = vadd.f32 %v4380, %v4594
        %v4627 = vadd.f32 %v4381, %v4597
        %v4628 = vadd.f32 %v4382, %v4602
        %v4629 = vadd.f32 %v4383, %v4605
        %v4630 = vadd.f32 %v4384, %v4610
        %v4631 = vadd.f32 %v4385, %v4613
        %v4632 = vld [vmem:[%s327 + $0xcc] sm:$0xf]
        %v4634 = vunpack.c.l.b16 %v4632
        %v4635 = vpack.c.b16 %v4422, %v4421
        %v4636 = vpack.c.b16 %v4424, %v4423
        %v4637 = vpack.c.b16 %v4426, %v4425
        %v4638 = vpack.c.b16 %v4428, %v4427
        %v4639 = vpack.c.b16 %v4430, %v4429
        %v4640 = vpack.c.b16 %v4432, %v4431
        %v4641 = vpack.c.b16 %v4434, %v4433
        %v4642 = vpack.c.b16 %v4634, %v4435
        %v4667 = vunpack.c.l.b16 %v3161
        %v4668 = vunpack.c.l.b16 %v3162
        %v4669 = vunpack.c.l.b16 %v3163
        %v4670 = vunpack.c.l.b16 %v3164
        %v4671 = vunpack.c.l.b16 %v3165
        %v4672 = vunpack.c.l.b16 %v3166
        %v4673 = vunpack.c.l.b16 %v3167
        %v4674 = vunpack.c.l.b16 %v3168
        %v4675 = vunpack.c.l.b16 %v3169
        %v4676 = vunpack.c.l.b16 %v3170
        %v4677 = vunpack.c.l.b16 %v3171
        %v4678 = vunpack.c.l.b16 %v3172
        %v4679 = vunpack.c.l.b16 %v3173
        %v4680 = vunpack.c.l.b16 %v3174
        %v4681 = vunpack.c.l.b16 %v3175
        %v4682 = vunpack.c.l.b16 %v3176
        %v4683 = vpack.c.b16 %v4668, %v4667
        %v4684 = vpack.c.b16 %v4670, %v4669
        %v4685 = vpack.c.b16 %v4672, %v4671
        %v4686 = vpack.c.b16 %v4674, %v4673
        %v4687 = vpack.c.b16 %v4676, %v4675
        %v4688 = vpack.c.b16 %v4678, %v4677
        %v4689 = vpack.c.b16 %v4680, %v4679
        %v4690 = vpack.c.b16 %v4682, %v4681
        %4699 = vmatprep.subr.bf16.mxu0 0
        %4700 = vmatpush1.bf16.msra.mxu0 %v4690
        %4701 = vmatprep.subr.bf16.mxu0 0
        %4702 = vmatpush1.bf16.msra.mxu0 %v4689
        %4703 = vmatprep.subr.bf16.mxu0 0
        %4704 = vmatpush1.bf16.msra.mxu0 %v4688
        %4705 = vmatprep.subr.bf16.mxu0 0
        %4706 = vmatpush1.bf16.msra.mxu0 %v4687
        %4707 = vmatprep.subr.bf16.mxu0 0
        %4708 = vmatpush1.bf16.msra.mxu0 %v4686
        %4709 = vmatprep.subr.bf16.mxu0 0
        %4710 = vmatpush1.bf16.msra.mxu0 %v4685
        %4711 = vmatprep.subr.bf16.mxu0 0
        %4712 = vmatpush1.bf16.msra.mxu0 %v4684
        %4713 = vmatprep.subr.bf16.mxu0 0
        %4714 = vmatpush1.bf16.msra.mxu0 %v4683
        %4715 = vmatprep.subr.bf16.mxu0 0
        %4716 = vmatpush2.bf16.msra.mxu0 0
        %4717 = vmatprep.subr.bf16.mxu0 0
        %4718 = vmatpush2.bf16.msra.mxu0 0
        %4719 = vmatprep.subr.bf16.mxu0 0
        %4720 = vmatpush2.bf16.msra.mxu0 0
        %4721 = vmatprep.subr.bf16.mxu0 0
        %4722 = vmatpush2.bf16.msra.mxu0 0
        %4723 = vmatprep.subr.bf16.mxu0 0
        %4724 = vmatpush2.bf16.msra.mxu0 0
        %4725 = vmatprep.subr.bf16.mxu0 0
        %4726 = vmatpush2.bf16.msra.mxu0 0
        %4727 = vmatprep.subr.bf16.mxu0 0
        %4728 = vmatpush2.bf16.msra.mxu0 0
        %4729 = vmatprep.subr.bf16.mxu0 0
        %4730 = vmatpush2.bf16.msra.mxu0 0
        %4731 = vmatprep.mubr.bf16.mxu0 0
        %4732 = vmatmul.mubr.bf16.gmra.mxu0 %v4635
        %v4733 = vpop.f32.mrf.mxu0
        %v4734 = vadd.f32 0.0, %v4733
        %v4735 = vpop.f32.mrf.mxu0
        %v4736 = vpop.f32.mrf.mxu0
        %v4737 = vadd.f32 0.0, %v4736
        %v4738 = vpop.f32.mrf.mxu0
        %4739 = vmatprep.mubr.bf16.mxu0 0
        %4740 = vmatmul.mubr.bf16.gmra.mxu0 %v4636
        %v4741 = vpop.f32.mrf.mxu0
        %v4742 = vadd.f32 0.0, %v4741
        %v4743 = vpop.f32.mrf.mxu0
        %v4744 = vpop.f32.mrf.mxu0
        %v4745 = vadd.f32 0.0, %v4744
        %v4746 = vpop.f32.mrf.mxu0
        %4747 = vmatprep.mubr.bf16.mxu0 0
        %4748 = vmatmul.mubr.bf16.gmra.mxu0 %v4637
        %v4749 = vpop.f32.mrf.mxu0
        %v4750 = vadd.f32 0.0, %v4749
        %v4751 = vpop.f32.mrf.mxu0
        %v4752 = vpop.f32.mrf.mxu0
        %v4753 = vadd.f32 0.0, %v4752
        %v4754 = vpop.f32.mrf.mxu0
        %4755 = vmatprep.mubr.bf16.mxu0 0
        %4756 = vmatmul.mubr.bf16.gmra.mxu0 %v4638
        %v4757 = vpop.f32.mrf.mxu0
        %v4758 = vadd.f32 0.0, %v4757
        %v4759 = vpop.f32.mrf.mxu0
        %v4760 = vpop.f32.mrf.mxu0
        %v4761 = vadd.f32 0.0, %v4760
        %v4762 = vpop.f32.mrf.mxu0
        %4763 = vmatprep.mubr.bf16.mxu0 0
        %4764 = vmatmul.mubr.bf16.gmra.mxu0 %v4639
        %v4765 = vpop.f32.mrf.mxu0
        %v4766 = vadd.f32 0.0, %v4765
        %v4767 = vpop.f32.mrf.mxu0
        %v4768 = vpop.f32.mrf.mxu0
        %v4769 = vadd.f32 0.0, %v4768
        %v4770 = vpop.f32.mrf.mxu0
        %4771 = vmatprep.mubr.bf16.mxu0 0
        %4772 = vmatmul.mubr.bf16.gmra.mxu0 %v4640
        %v4773 = vpop.f32.mrf.mxu0
        %v4774 = vadd.f32 0.0, %v4773
        %v4775 = vpop.f32.mrf.mxu0
        %v4776 = vpop.f32.mrf.mxu0
        %v4777 = vadd.f32 0.0, %v4776
        %v4778 = vpop.f32.mrf.mxu0
        %4779 = vmatprep.mubr.bf16.mxu0 0
        %4780 = vmatmul.mubr.bf16.gmra.mxu0 %v4641
        %v4781 = vpop.f32.mrf.mxu0
        %v4782 = vadd.f32 0.0, %v4781
        %v4783 = vpop.f32.mrf.mxu0
        %v4784 = vpop.f32.mrf.mxu0
        %v4785 = vadd.f32 0.0, %v4784
        %v4786 = vpop.f32.mrf.mxu0
        %4787 = vmatprep.mubr.bf16.mxu0 0
        %4788 = vmatmul.mubr.bf16.gmra.mxu0 %v4642
        %v4789 = vpop.f32.mrf.mxu0
        %v4790 = vadd.f32 0.0, %v4789
        %v4791 = vpop.f32.mrf.mxu0
        %v4792 = vpop.f32.mrf.mxu0
        %v4793 = vadd.f32 0.0, %v4792
        %v4794 = vpop.f32.mrf.mxu0
        %4795 = vdwg.mxu0
        %v4796 = vadd.f32 %v4616, %v4734
        %v4797 = vadd.f32 %v4617, %v4737
        %v4798 = vadd.f32 %v4618, %v4742
        %v4799 = vadd.f32 %v4619, %v4745
        %v4800 = vadd.f32 %v4620, %v4750
        %v4801 = vadd.f32 %v4621, %v4753
        %v4802 = vadd.f32 %v4622, %v4758
        %v4803 = vadd.f32 %v4623, %v4761
        %v4804 = vadd.f32 %v4624, %v4766
        %v4805 = vadd.f32 %v4625, %v4769
        %v4806 = vadd.f32 %v4626, %v4774
        %v4807 = vadd.f32 %v4627, %v4777
        %v4808 = vadd.f32 %v4628, %v4782
        %v4809 = vadd.f32 %v4629, %v4785
        %v4810 = vadd.f32 %v4630, %v4790
        %v4811 = vadd.f32 %v4631, %v4793
        %v4812 = vld [vmem:[%s327 + $0x90] sm:$0xc]
        %v4813 = vld [vmem:[%s327 + $0x94] sm:$0xf]
        %v4814 = vld [vmem:[%s327 + $0x98] sm:$0xf]
        %v4815 = vld [vmem:[%s327 + $0x9c] sm:$0xf]
        %v4816 = vld [vmem:[%s327 + $0xa0] sm:$0xf]
        %v4817 = vld [vmem:[%s327 + $0xa4] sm:$0xf]
        %v4818 = vld [vmem:[%s327 + $0xa8] sm:$0xf]
        %v4819 = vld [vmem:[%s327 + $0xac] sm:$0xf]
        %v4820 = vld [vmem:[%s327 + $0xb0] sm:$0xf]
        %v4821 = vld [vmem:[%s327 + $0xb4] sm:$0xf]
        %v4822 = vld [vmem:[%s327 + $0xb8] sm:$0xf]
        %v4823 = vld [vmem:[%s327 + $0xbc] sm:$0xf]
        %v4824 = vld [vmem:[%s327 + $0xc0] sm:$0xf]
        %v4825 = vld [vmem:[%s327 + $0xc4] sm:$0xf]
        %v4826 = vld [vmem:[%s327 + $0xc8] sm:$0xf]
        %v4827 = vld [vmem:[%s327 + $0xcc] sm:$0xf]
        %v4828 = vld [vmem:[%s327 + $0xd0] sm:$0x3]
        %v4846 = vunpack.c.l.b16 %v4812
        %v4847 = vunpack.c.l.b16 %v4813
        %v4848 = vunpack.c.l.b16 %v4814
        %v4849 = vunpack.c.l.b16 %v4815
        %v4850 = vunpack.c.l.b16 %v4816
        %v4851 = vunpack.c.l.b16 %v4817
        %v4852 = vunpack.c.l.b16 %v4818
        %v4853 = vunpack.c.l.b16 %v4819
        %v4854 = vunpack.c.l.b16 %v4820
        %v4855 = vunpack.c.l.b16 %v4821
        %v4856 = vunpack.c.l.b16 %v4822
        %v4857 = vunpack.c.l.b16 %v4823
        %v4858 = vunpack.c.l.b16 %v4824
        %v4859 = vunpack.c.l.b16 %v4825
        %v4860 = vunpack.c.l.b16 %v4826
        %v4861 = vunpack.c.l.b16 %v4827
        %v4862 = vunpack.c.l.b16 %v4828
        %v4863 = vpack.c.b16 %v4847, %v4846
        %v4864 = vpack.c.b16 %v4849, %v4848
        %v4865 = vpack.c.b16 %v4851, %v4850
        %v4866 = vpack.c.b16 %v4853, %v4852
        %v4867 = vpack.c.b16 %v4855, %v4854
        %v4868 = vpack.c.b16 %v4857, %v4856
        %v4869 = vpack.c.b16 %v4859, %v4858
        %v4870 = vpack.c.b16 %v4861, %v4860
        %v4871 = vpack.c.b16 %v4862, %v4862
        %v4872 = vrot.slane %v4863, 2
        %v4873 = vrot.slane %v4864, 2
        %v4874 = vsel %vm3420, %v4872, %v4873
        %v4875 = vrot.slane %v4865, 2
        %v4876 = vsel %vm3420, %v4873, %v4875
        %v4877 = vrot.slane %v4866, 2
        %v4878 = vsel %vm3420, %v4875, %v4877
        %v4879 = vrot.slane %v4867, 2
        %v4880 = vsel %vm3420, %v4877, %v4879
        %v4881 = vrot.slane %v4868, 2
        %v4882 = vsel %vm3420, %v4879, %v4881
        %v4883 = vrot.slane %v4869, 2
        %v4884 = vsel %vm3420, %v4881, %v4883
        %v4885 = vrot.slane %v4870, 2
        %v4886 = vsel %vm3420, %v4883, %v4885
        %v4887 = vrot.slane %v4871, 2
        %v4888 = vsel %vm3420, %v4885, %v4887
        %v4913 = vunpack.c.l.b16 %v3178
        %v4914 = vunpack.c.l.b16 %v3179
        %v4915 = vunpack.c.l.b16 %v3180
        %v4916 = vunpack.c.l.b16 %v3181
        %v4917 = vunpack.c.l.b16 %v3182
        %v4918 = vunpack.c.l.b16 %v3183
        %v4919 = vunpack.c.l.b16 %v3184
        %v4920 = vunpack.c.l.b16 %v3185
        %v4921 = vunpack.c.l.b16 %v3186
        %v4922 = vunpack.c.l.b16 %v3187
        %v4923 = vunpack.c.l.b16 %v3188
        %v4924 = vunpack.c.l.b16 %v3189
        %v4925 = vunpack.c.l.b16 %v3190
        %v4926 = vunpack.c.l.b16 %v3191
        %v4927 = vunpack.c.l.b16 %v3192
        %v4928 = vunpack.c.l.b16 %v3193
        %v4929 = vpack.c.b16 %v4914, %v4913
        %v4930 = vpack.c.b16 %v4916, %v4915
        %v4931 = vpack.c.b16 %v4918, %v4917
        %v4932 = vpack.c.b16 %v4920, %v4919
        %v4933 = vpack.c.b16 %v4922, %v4921
        %v4934 = vpack.c.b16 %v4924, %v4923
        %v4935 = vpack.c.b16 %v4926, %v4925
        %v4936 = vpack.c.b16 %v4928, %v4927
        %4945 = vmatprep.subr.bf16.mxu0 0
        %4946 = vmatpush1.bf16.msra.mxu0 %v4936
        %4947 = vmatprep.subr.bf16.mxu0 0
        %4948 = vmatpush1.bf16.msra.mxu0 %v4935
        %4949 = vmatprep.subr.bf16.mxu0 0
        %4950 = vmatpush1.bf16.msra.mxu0 %v4934
        %4951 = vmatprep.subr.bf16.mxu0 0
        %4952 = vmatpush1.bf16.msra.mxu0 %v4933
        %4953 = vmatprep.subr.bf16.mxu0 0
        %4954 = vmatpush1.bf16.msra.mxu0 %v4932
        %4955 = vmatprep.subr.bf16.mxu0 0
        %4956 = vmatpush1.bf16.msra.mxu0 %v4931
        %4957 = vmatprep.subr.bf16.mxu0 0
        %4958 = vmatpush1.bf16.msra.mxu0 %v4930
        %4959 = vmatprep.subr.bf16.mxu0 0
        %4960 = vmatpush1.bf16.msra.mxu0 %v4929
        %4961 = vmatprep.subr.bf16.mxu0 0
        %4962 = vmatpush2.bf16.msra.mxu0 0
        %4963 = vmatprep.subr.bf16.mxu0 0
        %4964 = vmatpush2.bf16.msra.mxu0 0
        %4965 = vmatprep.subr.bf16.mxu0 0
        %4966 = vmatpush2.bf16.msra.mxu0 0
        %4967 = vmatprep.subr.bf16.mxu0 0
        %4968 = vmatpush2.bf16.msra.mxu0 0
        %4969 = vmatprep.subr.bf16.mxu0 0
        %4970 = vmatpush2.bf16.msra.mxu0 0
        %4971 = vmatprep.subr.bf16.mxu0 0
        %4972 = vmatpush2.bf16.msra.mxu0 0
        %4973 = vmatprep.subr.bf16.mxu0 0
        %4974 = vmatpush2.bf16.msra.mxu0 0
        %4975 = vmatprep.subr.bf16.mxu0 0
        %4976 = vmatpush2.bf16.msra.mxu0 0
        %4977 = vmatprep.mubr.bf16.mxu0 0
        %4978 = vmatmul.mubr.bf16.gmra.mxu0 %v4874
        %v4979 = vpop.f32.mrf.mxu0
        %v4980 = vadd.f32 0.0, %v4979
        %v4981 = vpop.f32.mrf.mxu0
        %v4982 = vpop.f32.mrf.mxu0
        %v4983 = vadd.f32 0.0, %v4982
        %v4984 = vpop.f32.mrf.mxu0
        %4985 = vmatprep.mubr.bf16.mxu0 0
        %4986 = vmatmul.mubr.bf16.gmra.mxu0 %v4876
        %v4987 = vpop.f32.mrf.mxu0
        %v4988 = vadd.f32 0.0, %v4987
        %v4989 = vpop.f32.mrf.mxu0
        %v4990 = vpop.f32.mrf.mxu0
        %v4991 = vadd.f32 0.0, %v4990
        %v4992 = vpop.f32.mrf.mxu0
        %4993 = vmatprep.mubr.bf16.mxu0 0
        %4994 = vmatmul.mubr.bf16.gmra.mxu0 %v4878
        %v4995 = vpop.f32.mrf.mxu0
        %v4996 = vadd.f32 0.0, %v4995
        %v4997 = vpop.f32.mrf.mxu0
        %v4998 = vpop.f32.mrf.mxu0
        %v4999 = vadd.f32 0.0, %v4998
        %v5000 = vpop.f32.mrf.mxu0
        %5001 = vmatprep.mubr.bf16.mxu0 0
        %5002 = vmatmul.mubr.bf16.gmra.mxu0 %v4880
        %v5003 = vpop.f32.mrf.mxu0
        %v5004 = vadd.f32 0.0, %v5003
        %v5005 = vpop.f32.mrf.mxu0
        %v5006 = vpop.f32.mrf.mxu0
        %v5007 = vadd.f32 0.0, %v5006
        %v5008 = vpop.f32.mrf.mxu0
        %5009 = vmatprep.mubr.bf16.mxu0 0
        %5010 = vmatmul.mubr.bf16.gmra.mxu0 %v4882
        %v5011 = vpop.f32.mrf.mxu0
        %v5012 = vadd.f32 0.0, %v5011
        %v5013 = vpop.f32.mrf.mxu0
        %v5014 = vpop.f32.mrf.mxu0
        %v5015 = vadd.f32 0.0, %v5014
        %v5016 = vpop.f32.mrf.mxu0
        %5017 = vmatprep.mubr.bf16.mxu0 0
        %5018 = vmatmul.mubr.bf16.gmra.mxu0 %v4884
        %v5019 = vpop.f32.mrf.mxu0
        %v5020 = vadd.f32 0.0, %v5019
        %v5021 = vpop.f32.mrf.mxu0
        %v5022 = vpop.f32.mrf.mxu0
        %v5023 = vadd.f32 0.0, %v5022
        %v5024 = vpop.f32.mrf.mxu0
        %5025 = vmatprep.mubr.bf16.mxu0 0
        %5026 = vmatmul.mubr.bf16.gmra.mxu0 %v4886
        %v5027 = vpop.f32.mrf.mxu0
        %v5028 = vadd.f32 0.0, %v5027
        %v5029 = vpop.f32.mrf.mxu0
        %v5030 = vpop.f32.mrf.mxu0
        %v5031 = vadd.f32 0.0, %v5030
        %v5032 = vpop.f32.mrf.mxu0
        %5033 = vmatprep.mubr.bf16.mxu0 0
        %5034 = vmatmul.mubr.bf16.gmra.mxu0 %v4888
        %v5035 = vpop.f32.mrf.mxu0
        %v5036 = vadd.f32 0.0, %v5035
        %v5037 = vpop.f32.mrf.mxu0
        %v5038 = vpop.f32.mrf.mxu0
        %v5039 = vadd.f32 0.0, %v5038
        %v5040 = vpop.f32.mrf.mxu0
        %5041 = vdwg.mxu0
        %v5042 = vadd.f32 %v4796, %v4980
        %v5043 = vadd.f32 %v4797, %v4983
        %v5044 = vadd.f32 %v4798, %v4988
        %v5045 = vadd.f32 %v4799, %v4991
        %v5046 = vadd.f32 %v4800, %v4996
        %v5047 = vadd.f32 %v4801, %v4999
        %v5048 = vadd.f32 %v4802, %v5004
        %v5049 = vadd.f32 %v4803, %v5007
        %v5050 = vadd.f32 %v4804, %v5012
        %v5051 = vadd.f32 %v4805, %v5015
        %v5052 = vadd.f32 %v4806, %v5020
        %v5053 = vadd.f32 %v4807, %v5023
        %v5054 = vadd.f32 %v4808, %v5028
        %v5055 = vadd.f32 %v4809, %v5031
        %v5056 = vadd.f32 %v4810, %v5036
        %v5057 = vadd.f32 %v4811, %v5039
        %v5059 = vlaneseq
        %v5060 = vshrl.u32 %v5059, 7
        %v5061 = vsub.s32 0, %v5060
        %v5062 = vrot.slane %v3195, %v5061
        %v5064 = vadd.f32 %v5042, %v5062
        %v5065 = vadd.f32 %v5043, %v5062
        %v5066 = vadd.f32 %v5044, %v5062
        %v5067 = vadd.f32 %v5045, %v5062
        %v5068 = vadd.f32 %v5046, %v5062
        %v5069 = vadd.f32 %v5047, %v5062
        %v5070 = vadd.f32 %v5048, %v5062
        %v5071 = vadd.f32 %v5049, %v5062
        %v5072 = vadd.f32 %v5050, %v5062
        %v5073 = vadd.f32 %v5051, %v5062
        %v5074 = vadd.f32 %v5052, %v5062
        %v5075 = vadd.f32 %v5053, %v5062
        %v5076 = vadd.f32 %v5054, %v5062
        %v5077 = vadd.f32 %v5055, %v5062
        %v5078 = vadd.f32 %v5056, %v5062
        %v5079 = vadd.f32 %v5057, %v5062
        %v5080 = vmax.f32 %v5064, 0.0
        %v5081 = vmax.f32 %v5065, 0.0
        %v5082 = vmax.f32 %v5066, 0.0
        %v5083 = vmax.f32 %v5067, 0.0
        %v5084 = vmax.f32 %v5068, 0.0
        %v5085 = vmax.f32 %v5069, 0.0
        %v5086 = vmax.f32 %v5070, 0.0
        %v5087 = vmax.f32 %v5071, 0.0
        %v5088 = vmax.f32 %v5072, 0.0
        %v5089 = vmax.f32 %v5073, 0.0
        %v5090 = vmax.f32 %v5074, 0.0
        %v5091 = vmax.f32 %v5075, 0.0
        %v5092 = vmax.f32 %v5076, 0.0
        %v5093 = vmax.f32 %v5077, 0.0
        %v5094 = vmax.f32 %v5078, 0.0
        %v5095 = vmax.f32 %v5079, 0.0
        %v5096 = vpack.c.bf16 %v5081, %v5080
        %v5097 = vpack.c.bf16 %v5083, %v5082
        %v5098 = vpack.c.bf16 %v5085, %v5084
        %v5099 = vpack.c.bf16 %v5087, %v5086
        %v5100 = vpack.c.bf16 %v5089, %v5088
        %v5101 = vpack.c.bf16 %v5091, %v5090
        %v5102 = vpack.c.bf16 %v5093, %v5092
        %v5103 = vpack.c.bf16 %v5095, %v5094
        %s5104 = scalar_lea.vmem [#allocation9], 128
        %v5105 = vld [vmem:[%s5104] sm:$0xf]
        %v5106 = vld [vmem:[%s5104 + $0x4] sm:$0xf]
        %v5107 = vld [vmem:[%s5104 + $0x8] sm:$0xf]
        %v5108 = vld [vmem:[%s5104 + $0xc] sm:$0xf]
        %v5109 = vld [vmem:[%s5104 + $0x10] sm:$0xf]
        %v5110 = vld [vmem:[%s5104 + $0x14] sm:$0xf]
        %v5111 = vld [vmem:[%s5104 + $0x18] sm:$0xf]
        %v5112 = vld [vmem:[%s5104 + $0x1c] sm:$0xf]
        %v5113 = vld [vmem:[%s5104 + $0x20] sm:$0xf]
        %v5114 = vld [vmem:[%s5104 + $0x24] sm:$0xf]
        %v5115 = vld [vmem:[%s5104 + $0x28] sm:$0xf]
        %v5116 = vld [vmem:[%s5104 + $0x2c] sm:$0xf]
        %v5117 = vld [vmem:[%s5104 + $0x30] sm:$0xf]
        %v5118 = vld [vmem:[%s5104 + $0x34] sm:$0xf]
        %v5119 = vld [vmem:[%s5104 + $0x38] sm:$0xf]
        %v5120 = vld [vmem:[%s5104 + $0x3c] sm:$0xf]
        %v5137 = vunpack.c.l.b16 %v5105
        %v5138 = vunpack.c.l.b16 %v5106
        %v5139 = vunpack.c.l.b16 %v5107
        %v5140 = vunpack.c.l.b16 %v5108
        %v5141 = vunpack.c.l.b16 %v5109
        %v5142 = vunpack.c.l.b16 %v5110
        %v5143 = vunpack.c.l.b16 %v5111
        %v5144 = vunpack.c.l.b16 %v5112
        %v5145 = vunpack.c.l.b16 %v5113
        %v5146 = vunpack.c.l.b16 %v5114
        %v5147 = vunpack.c.l.b16 %v5115
        %v5148 = vunpack.c.l.b16 %v5116
        %v5149 = vunpack.c.l.b16 %v5117
        %v5150 = vunpack.c.l.b16 %v5118
        %v5151 = vunpack.c.l.b16 %v5119
        %v5152 = vunpack.c.l.b16 %v5120
        %v5153 = vpack.c.b16 %v5138, %v5137
        %v5154 = vpack.c.b16 %v5140, %v5139
        %v5155 = vpack.c.b16 %v5142, %v5141
        %v5156 = vpack.c.b16 %v5144, %v5143
        %v5157 = vpack.c.b16 %v5146, %v5145
        %v5158 = vpack.c.b16 %v5148, %v5147
        %v5159 = vpack.c.b16 %v5150, %v5149
        %v5160 = vpack.c.b16 %v5152, %v5151
        %5169 = vmatprep.subr.bf16.mxu0 0
        %5170 = vmatpush1.bf16.msra.mxu0 %v5160
        %5171 = vmatprep.subr.bf16.mxu0 0
        %5172 = vmatpush1.bf16.msra.mxu0 %v5159
        %5173 = vmatprep.subr.bf16.mxu0 0
        %5174 = vmatpush1.bf16.msra.mxu0 %v5158
        %5175 = vmatprep.subr.bf16.mxu0 0
        %5176 = vmatpush1.bf16.msra.mxu0 %v5157
        %5177 = vmatprep.subr.bf16.mxu0 0
        %5178 = vmatpush1.bf16.msra.mxu0 %v5156
        %5179 = vmatprep.subr.bf16.mxu0 0
        %5180 = vmatpush1.bf16.msra.mxu0 %v5155
        %5181 = vmatprep.subr.bf16.mxu0 0
        %5182 = vmatpush1.bf16.msra.mxu0 %v5154
        %5183 = vmatprep.subr.bf16.mxu0 0
        %5184 = vmatpush1.bf16.msra.mxu0 %v5153
        %5185 = vmatprep.subr.bf16.mxu0 0
        %5186 = vmatpush2.bf16.msra.mxu0 0
        %5187 = vmatprep.subr.bf16.mxu0 0
        %5188 = vmatpush2.bf16.msra.mxu0 0
        %5189 = vmatprep.subr.bf16.mxu0 0
        %5190 = vmatpush2.bf16.msra.mxu0 0
        %5191 = vmatprep.subr.bf16.mxu0 0
        %5192 = vmatpush2.bf16.msra.mxu0 0
        %5193 = vmatprep.subr.bf16.mxu0 0
        %5194 = vmatpush2.bf16.msra.mxu0 0
        %5195 = vmatprep.subr.bf16.mxu0 0
        %5196 = vmatpush2.bf16.msra.mxu0 0
        %5197 = vmatprep.subr.bf16.mxu0 0
        %5198 = vmatpush2.bf16.msra.mxu0 0
        %5199 = vmatprep.subr.bf16.mxu0 0
        %5200 = vmatpush2.bf16.msra.mxu0 0
        %5201 = vmatprep.mubr.bf16.mxu0 0
        %5202 = vmatmul.mubr.bf16.gmra.mxu0 %v5096
        %v5203 = vpop.f32.mrf.mxu0
        %v5204 = vpop.f32.mrf.mxu0
        %v5205 = vpop.f32.mrf.mxu0
        %v5206 = vadd.f32 0.0, %v5205
        %v5207 = vpop.f32.mrf.mxu0
        %5208 = vmatprep.mubr.bf16.mxu0 0
        %5209 = vmatmul.mubr.bf16.gmra.mxu0 %v5097
        %v5210 = vpop.f32.mrf.mxu0
        %v5211 = vadd.f32 0.0, %v5210
        %v5212 = vpop.f32.mrf.mxu0
        %v5213 = vpop.f32.mrf.mxu0
        %v5214 = vpop.f32.mrf.mxu0
        %5215 = vmatprep.mubr.bf16.mxu0 0
        %5216 = vmatmul.mubr.bf16.gmra.mxu0 %v5098
        %v5217 = vpop.f32.mrf.mxu0
        %v5218 = vpop.f32.mrf.mxu0
        %v5219 = vpop.f32.mrf.mxu0
        %v5220 = vadd.f32 0.0, %v5219
        %v5221 = vpop.f32.mrf.mxu0
        %5222 = vmatprep.mubr.bf16.mxu0 0
        %5223 = vmatmul.mubr.bf16.gmra.mxu0 %v5099
        %v5224 = vpop.f32.mrf.mxu0
        %v5225 = vadd.f32 0.0, %v5224
        %v5226 = vpop.f32.mrf.mxu0
        %v5227 = vpop.f32.mrf.mxu0
        %v5228 = vpop.f32.mrf.mxu0
        %5229 = vmatprep.mubr.bf16.mxu0 0
        %5230 = vmatmul.mubr.bf16.gmra.mxu0 %v5100
        %v5231 = vpop.f32.mrf.mxu0
        %v5232 = vpop.f32.mrf.mxu0
        %v5233 = vpop.f32.mrf.mxu0
        %v5234 = vadd.f32 0.0, %v5233
        %v5235 = vpop.f32.mrf.mxu0
        %5236 = vmatprep.mubr.bf16.mxu0 0
        %5237 = vmatmul.mubr.bf16.gmra.mxu0 %v5101
        %v5238 = vpop.f32.mrf.mxu0
        %v5239 = vadd.f32 0.0, %v5238
        %v5240 = vpop.f32.mrf.mxu0
        %v5241 = vpop.f32.mrf.mxu0
        %v5242 = vpop.f32.mrf.mxu0
        %5243 = vmatprep.mubr.bf16.mxu0 0
        %5244 = vmatmul.mubr.bf16.gmra.mxu0 %v5102
        %v5245 = vpop.f32.mrf.mxu0
        %v5246 = vpop.f32.mrf.mxu0
        %v5247 = vpop.f32.mrf.mxu0
        %v5248 = vadd.f32 0.0, %v5247
        %v5249 = vpop.f32.mrf.mxu0
        %5250 = vmatprep.mubr.bf16.mxu0 0
        %5251 = vmatmul.mubr.bf16.gmra.mxu0 %v5103
        %v5252 = vpop.f32.mrf.mxu0
        %v5253 = vadd.f32 0.0, %v5252
        %v5254 = vpop.f32.mrf.mxu0
        %v5255 = vpop.f32.mrf.mxu0
        %v5256 = vpop.f32.mrf.mxu0
        %5257 = vdwg.mxu0
        %v5258 = vadd.f32 %v3033, %v5206
        %v5259 = vadd.f32 %v3034, %v5211
        %v5260 = vadd.f32 %v3035, %v5220
        %v5261 = vadd.f32 %v3036, %v5225
        %v5262 = vadd.f32 %v3037, %v5234
        %v5263 = vadd.f32 %v3038, %v5239
        %v5264 = vadd.f32 %v3039, %v5248
        %v5265 = vadd.f32 %v3040, %v5253
        %v5266 = vmax.f32 %v5258, 0.0
        %v5267 = vmax.f32 %v5259, 0.0
        %v5268 = vmax.f32 %v5260, 0.0
        %v5269 = vmax.f32 %v5261, 0.0
        %v5270 = vmax.f32 %v5262, 0.0
        %v5271 = vmax.f32 %v5263, 0.0
        %v5272 = vmax.f32 %v5264, 0.0
        %v5273 = vmax.f32 %v5265, 0.0
        %v5274 = vpack.c.bf16 %v5267, %v5266
        %v5275 = vpack.c.bf16 %v5269, %v5268
        %v5276 = vpack.c.bf16 %v5271, %v5270
        %v5277 = vpack.c.bf16 %v5273, %v5272
        %v5282 = vunpack.c.l.b16 %v5274
        %v5283 = vunpack.c.h.b16 %v5274
        %v5284 = vunpack.c.l.b16 %v5275
        %v5285 = vunpack.c.h.b16 %v5275
        %v5286 = vunpack.c.l.b16 %v5276
        %v5287 = vunpack.c.h.b16 %v5276
        %v5288 = vunpack.c.l.b16 %v5277
        %v5289 = vunpack.c.h.b16 %v5277
        %v5290 = vpack.c.b16 %v5282, %v5282
        %v5291 = vpack.c.b16 %v5283, %v5283
        %v5292 = vpack.c.b16 %v5284, %v5284
        %v5293 = vpack.c.b16 %v5285, %v5285
        %v5294 = vpack.c.b16 %v5286, %v5286
        %v5295 = vpack.c.b16 %v5287, %v5287
        %v5296 = vpack.c.b16 %v5288, %v5288
        %v5297 = vpack.c.b16 %v5289, %v5289
        %5306 = vst [vmem:[%s272] sm:$0xf] %v5290
        %5307 = vst [vmem:[%s272 + $0x4] sm:$0xf] %v5291
        %5308 = vst [vmem:[%s272 + $0x8] sm:$0xf] %v5292
        %5309 = vst [vmem:[%s272 + $0xc] sm:$0xf] %v5293
        %5310 = vst [vmem:[%s272 + $0x10] sm:$0xf] %v5294
        %5311 = vst [vmem:[%s272 + $0x14] sm:$0xf] %v5295
        %5312 = vst [vmem:[%s272 + $0x18] sm:$0xf] %v5296
        %5313 = vst [vmem:[%s272 + $0x1c] sm:$0xf] %v5297
        %s5314 = sand.u32 %s154, 1
        %s5315 = scalar_lea.sflag [#allocation6], %s5314
        %s5316 = sand.u32 %s154, 1
        %s5317 = smul.addr %s5316, 32
        %s5318 = scalar_lea.vmem [#allocation10], %s5317
        // Predicated region
        $region69: #{tpu_custom_call.1} parent=39 // pred_check
          %p5319 = pneg %p164
        $region70: #{tpu_custom_call.1} parent=39 // pred_check_branch
          %5321 = sbr.rel (%p5319) target = $region72
        $region71: #{tpu_custom_call.1} parent=39 // pred_region
          %s5322 = smul.u32 4, %s27
          %s5324 = ssub.s32 512, 512
          %5325 = vsyncadd %s5315, %s5324
          %s5326 = smul.addr %s5322, 2
          %s5327 = smul.addr %s26, 32
          %s5328 = sadd.s32 %s5326, %s5327
          %s5329 = smul.addr %s5328, 64
          %s5330 = scalar_lea.hbm %s6, %s5329
          %s5331 = sshll.u32 %s5318, 4
          %s5332 = int_to_ptr.vmem [resolvable:$true] %s5331
          %5337 = dma.vmem_to_hbm [thread:$0]  %s5332, 512, %s5330, %s5315, 64, 64, 4
        $region72: #{tpu_custom_call.1} parent=39 // pred_fallthru
          _
      $region40: #{tpu_custom_call.1} parent=5 // pred_fallthru
        _
      %p5338 = scmp.le.s32.totalorder 2, %s17
      // Predicated region
      $region73: #{tpu_custom_call.1} parent=5 // pred_check
        %p5339 = pneg %p5338
      $region74: #{tpu_custom_call.1} parent=5 // pred_check_branch
        %5341 = sbr.rel (%p5339) target = $region76
      $region75: #{tpu_custom_call.1} parent=5 // pred_region
        %s5342 = ssub.s32 %s17, 2
        // Predicated region
        $region77: #{tpu_custom_call.1} parent=75 // pred_check
          %p5343 = pneg %p170
        $region78: #{tpu_custom_call.1} parent=75 // pred_check_branch
          %5345 = sbr.rel (%p5343) target = $region80
        $region79: #{tpu_custom_call.1} parent=75 // pred_region
          %s5346 = sand.u32 %s155, 1
          %s5347 = scalar_lea.sflag [#allocation6], %s5346
          %s5348 = sand.u32 %s155, 1
          %s5349 = smul.addr %s5348, 32
          %s5350 = scalar_lea.vmem [#allocation10], %s5349
          %5351 = dma.done %s5347, 512
        $region80: #{tpu_custom_call.1} parent=75 // pred_fallthru
          _
      $region76: #{tpu_custom_call.1} parent=5 // pred_fallthru
        _
    $region6: #{tpu_custom_call.1} parent=1 // loop_footer
      %s21 = sadd.s32 1, %s17
    $region7: #{tpu_custom_call.1} parent=1 // loop_footer_branch
      %16 = sbr.rel target = $region3
    $region8: #{tpu_custom_call.1} parent=1 // loop_exit
      _
    %5352 = vsyncpa [#allocation5], 1
    %s5353 = scalar_lea.sflag [#allocation5], 1
    %5354 = vsyncpa %s5353, 1
    %5355 = vsyncpa [#allocation8], 1
    %5356 = vsyncpa [#allocation6], 1
    %s5357 = scalar_lea.sflag [#allocation6], 1
    %5358 = vsyncpa %s5357, 1
  %5359 = vsyncmov [#allocation3]
  %s5360 = vpop.sfrf %5359
  %p5361 = scmp.eq.s32.totalorder %s5360, 0
  %p5362 = pneg %p5361
  %5364 = shalt.err (%p5362)
  %s5365 = scalar_lea.sflag [#allocation3], 1
  %5366 = vsyncmov %s5365
  %s5367 = vpop.sfrf %5366
  %p5368 = scmp.eq.s32.totalorder %s5367, 0
  %p5369 = pneg %p5368
  %5371 = shalt.err (%p5369)

</llo_original>
